<compile_context>
chip_gen: v7x
topology: tpu7x:2x2x1
jax: 0.10.0
libtpu: 0.0.40
codegen_flags: <defaults>
</compile_context>

<pallas_src>
import functools

import jax
import jax.numpy as jnp
from jax.experimental import pallas as pl
from jax.experimental.pallas import tpu as pltpu

_LANE = 128
_TILE_M_MAX = 1024          # conv matmul row tile (review: 512-1024 for HBM roofline)
_ADAIN_TILE_HW = 1024       # AdaIN packed-row tile
_VMEM_LIMIT = 32 * 1024 * 1024  # safe on v5e/v6e (128 MiB phys) and v7x (64 MiB phys)


def _round_up(v, m):
    return (v + m - 1) // m * m


# -----------------------------------------------------------------------------
# Pallas kernels
# -----------------------------------------------------------------------------
def _matmul_bias_act_kernel(x_ref, w_ref, b_ref, o_ref, *, act):
    """act(patches @ W + b): im2col conv hot path.

    x_ref: (TILE_M, K_pad) bf16; w_ref: (K_pad, Cout) bf16 resident;
    b_ref: (1, Cout) f32 resident; o_ref: (TILE_M, Cout) bf16 — real Cout
    (full-array-dim exception), so only the real lanes ever reach HBM.
    """
    acc = jnp.dot(x_ref[...], w_ref[...], preferred_element_type=jnp.float32)
    acc = acc + b_ref[...]
    if act == "relu":
        acc = jnp.maximum(acc, 0.0)
    elif act == "tanh":
        acc = jnp.tanh(acc)
    o_ref[...] = acc.astype(o_ref.dtype)


def _adain_reduce_kernel(x_ref, shift_ref, o_ref, *, tile_hw, n_valid, needs_mask):
    """AdaIN pass 1: shifted sum / sum-of-squares of the content map.

    x_ref: (1, TILE_HW, L) bf16 content, L = k*C lane-packed channels.
    shift_ref: (1, 1, L) f32 per-channel shift (numerical stabilizer for the
               one-pass moments).
    o_ref: (1, 2, L) f32 accumulator, resident across the HW grid axis.
    """
    t = pl.program_id(1)

    @pl.when(t == 0)
    def _():
        o_ref[...] = jnp.zeros_like(o_ref)

    x = x_ref[0].astype(jnp.float32) - shift_ref[0]
    if needs_mask:  # zero out padded packed rows so they don't bias the stats
        row = t * tile_hw + jax.lax.broadcasted_iota(jnp.int32, (tile_hw, 1), 0)
        x = jnp.where(row < n_valid, x, 0.0)
    s1 = jnp.sum(x, axis=0, keepdims=True)
    s2 = jnp.sum(x * x, axis=0, keepdims=True)
    o_ref[0] = o_ref[0] + jnp.concatenate([s1, s2], axis=0)


def _adain_apply_kernel(x_ref, scale_ref, off_ref, o_ref):
    """AdaIN pass 2: lane-dense per-(n, c) scale/shift, tiled over H*W."""
    x = x_ref[0].astype(jnp.float32)
    o_ref[0] = (x * scale_ref[0] + off_ref[0]).astype(o_ref.dtype)


# -----------------------------------------------------------------------------
# Pallas wrappers
# -----------------------------------------------------------------------------
def _pick_tile_m(m):
    """Large tiles for HBM roofline, but keep >=2 grid steps (v7x megacore)."""
    m16 = _round_up(m, 16)
    if m16 <= 16:
        return m16
    half = _round_up((m16 + 1) // 2, 16)
    return min(_TILE_M_MAX, half)


def pallas_matmul_bias_act(patches, w_mat, bias2d, act):
    """Gridded bf16 MXU matmul; output is (M, Cout) bf16 at the real Cout."""
    m, k_pad = patches.shape
    k_pad_w, cout = w_mat.shape
    assert k_pad == k_pad_w

    tile_m = _pick_tile_m(m)
    grid_m = pl.cdiv(m, tile_m)
    m_pad = grid_m * tile_m
    if m_pad != m:
        patches = jnp.pad(patches, ((0, m_pad - m), (0, 0)))

    cost = pl.CostEstimate(
        flops=2 * m_pad * k_pad * cout,
        transcendentals=m_pad * cout if act == "tanh" else 0,
        bytes_accessed=m_pad * k_pad * 2 + k_pad * cout * 2
        + cout * 4 + m_pad * cout * 2,
    )

    out = pl.pallas_call(
        functools.partial(_matmul_bias_act_kernel, act=act),
        out_shape=jax.ShapeDtypeStruct((m_pad, cout), jnp.bfloat16),
        grid=(grid_m,),
        in_specs=[
            pl.BlockSpec((tile_m, k_pad), lambda i: (i, 0)),
            pl.BlockSpec((k_pad, cout), lambda i: (0, 0)),   # resident weight
            pl.BlockSpec((1, cout), lambda i: (0, 0)),       # resident bias
        ],
        out_specs=pl.BlockSpec((tile_m, cout), lambda i: (i, 0)),
        compiler_params=pltpu.CompilerParams(
            dimension_semantics=("parallel",),
            vmem_limit_bytes=_VMEM_LIMIT),
        cost_estimate=cost,
    )(patches, w_mat, bias2d)
    if m_pad != m:
        out = out[:m]
    return out


def pallas_adain(x_nhwc, style_mean, style_var, eps=1e-5):
    """AdaIN with precomputed blended-style stats.

    out = sqrt((var_s+eps)/(var_x+eps)) * (x - mean_x) + mean_s, per (n, c).
    Two tiled Pallas passes on a lane-packed (HW/k, k*C) view of the content.
    """
    n, h, w, c = x_nhwc.shape
    hw = h * w
    k = max(1, _LANE // c)
    if hw % k:
        k = 1
    l = k * c
    hwk = hw // k
    tile_hw = min(_ADAIN_TILE_HW, _round_up(hwk, 8))
    grid_t = pl.cdiv(hwk, tile_hw)
    hwk_pad = grid_t * tile_hw
    needs_mask = hwk_pad != hwk

    xr = x_nhwc.reshape(n, hwk, l)
    if needs_mask:
        xr = jnp.pad(xr, ((0, 0), (0, hwk_pad - hwk), (0, 0)))

    # Per-channel shift (a representative sample value) for stable moments.
    shift = x_nhwc[:, 0, 0, :].astype(jnp.float32)               # (N, C)
    shift_p = jnp.tile(shift, (1, k)).reshape(n, 1, l)

    # Pass 1: tiled, accumulated shifted sum / sumsq of the content map.
    red = pl.pallas_call(
        functools.partial(_adain_reduce_kernel, tile_hw=tile_hw,
                          n_valid=hwk, needs_mask=needs_mask),
        out_shape=jax.ShapeDtypeStruct((n, 2, l), jnp.float32),
        grid=(n, grid_t),
        in_specs=[
            pl.BlockSpec((1, tile_hw, l), lambda i, t: (i, t, 0)),
            pl.BlockSpec((1, 1, l), lambda i, t: (i, 0, 0)),
        ],
        out_specs=pl.BlockSpec((1, 2, l), lambda i, t: (i, 0, 0)),
        compiler_params=pltpu.CompilerParams(
            dimension_semantics=("parallel", "arbitrary"),
            vmem_limit_bytes=_VMEM_LIMIT),
    )(xr, shift_p)

    # Fold the k lane groups back to per-channel stats (tiny).
    s1 = red[:, 0, :].reshape(n, k, c).sum(axis=1)               # (N, C)
    s2 = red[:, 1, :].reshape(n, k, c).sum(axis=1)
    mean_x = shift + s1 / hw
    var_x = jnp.maximum(s2 / hw - (s1 / hw) ** 2, 0.0)

    scale = jnp.sqrt((style_var + eps) / (var_x + eps))          # (N, C)
    offset = style_mean - scale * mean_x
    scale_p = jnp.tile(scale, (1, k)).reshape(n, 1, l)
    offset_p = jnp.tile(offset, (1, k)).reshape(n, 1, l)

    # Pass 2: lane-dense scale/shift apply, tiled over H*W.
    out = pl.pallas_call(
        _adain_apply_kernel,
        out_shape=jax.ShapeDtypeStruct((n, hwk_pad, l), jnp.bfloat16),
        grid=(n, grid_t),
        in_specs=[
            pl.BlockSpec((1, tile_hw, l), lambda i, t: (i, t, 0)),
            pl.BlockSpec((1, 1, l), lambda i, t: (i, 0, 0)),
            pl.BlockSpec((1, 1, l), lambda i, t: (i, 0, 0)),
        ],
        out_specs=pl.BlockSpec((1, tile_hw, l), lambda i, t: (i, t, 0)),
        compiler_params=pltpu.CompilerParams(
            dimension_semantics=("parallel", "parallel"),
            vmem_limit_bytes=_VMEM_LIMIT),
    )(xr, scale_p, offset_p)

    if needs_mask:
        out = out[:, :hwk, :]
    return out.reshape(n, h, w, c)


# -----------------------------------------------------------------------------
# Glue: im2col producer (bf16, fused upsample + pad + K-pad), conv, params
# -----------------------------------------------------------------------------
def _im2col_patches(x_nhwc, k_pad, *, stride=1, up=1):
    """bf16 im2col of conv3x3(pad=1) applied to nearest-up(x, up), K-padded.

    Built from one spatial zero-pad + 9 static (strided) slices — no gathers,
    no mask multiplies — emitted already at K_pad (single XLA producer).
    Patch K layout: index = (dy*3+dx)*Cin + cin.
    """
    x = x_nhwc.astype(jnp.bfloat16)
    n, h, w, c = x.shape
    if up != 1:
        x = jnp.broadcast_to(x[:, :, None, :, None, :], (n, h, up, w, up, c))
        x = x.reshape(n, h * up, w * up, c)
        h, w = h * up, w * up
    ho = (h + 2 - 3) // stride + 1
    wo = (w + 2 - 3) // stride + 1
    xp = jnp.pad(x, ((0, 0), (1, 1), (1, 1), (0, 0)))
    taps = []
    for dy in range(3):
        for dx in range(3):
            taps.append(
                xp[:, dy:dy + (ho - 1) * stride + 1:stride,
                   dx:dx + (wo - 1) * stride + 1:stride, :])
    p = jnp.stack(taps, axis=3)                   # (N, Ho, Wo, 9, C)
    p = p.reshape(n * ho * wo, 9 * c)
    if k_pad > 9 * c:
        p = jnp.pad(p, ((0, 0), (0, k_pad - 9 * c)))
    return p, ho, wo


def conv2d_nhwc(x_nhwc, layer, *, stride=1, up=1, act="none"):
    """3x3 conv on NHWC (optionally on nearest-2x-upsampled input); MXU matmul."""
    patches, ho, wo = _im2col_patches(
        x_nhwc, layer["w"].shape[0], stride=stride, up=up)
    out = pallas_matmul_bias_act(patches, layer["w"], layer["b"], act)
    n = x_nhwc.shape[0]
    return out.reshape(n, ho, wo, layer["cout"])


def prep_conv_layer(weight, bias):
    """(Cout, Cin, kh, kw) PyTorch weight -> (K_pad, Cout) bf16, done once.

    Only K is padded (lane-dense MXU LHS); N stays at the real Cout so the
    kernel never writes padded output lanes to HBM.
    """
    cout, cin, kh, kw = weight.shape
    k_real = kh * kw * cin
    k_pad = _round_up(k_real, _LANE)
    w_mat = weight.transpose(2, 3, 1, 0).reshape(k_real, cout)   # (tap, cin) x cout
    w_mat = jnp.pad(w_mat, ((0, k_pad - k_real), (0, 0))).astype(jnp.bfloat16)
    b2d = bias.reshape(1, cout).astype(jnp.float32)
    return {"w": w_mat, "b": b2d, "cout": cout}


def init_conv(key, cin, cout, k=3):
    fan_in = cin * k * k
    w = jax.random.normal(key, (cout, cin, k, k), jnp.float32) / jnp.sqrt(
        jnp.float32(fan_in))
    b = jnp.zeros((cout,), jnp.float32)
    return prep_conv_layer(w, b)


def init_generator_params(key, in_ch=3, base=16):
    ks = jax.random.split(key, 6)
    return {
        "content_enc": {
            "conv1": init_conv(ks[0], in_ch, base),
            "conv2": init_conv(ks[1], base, 2 * base),
        },
        "style_enc": {
            "conv1": init_conv(ks[2], in_ch, base),
            "conv2": init_conv(ks[3], base, 2 * base),
        },
        "decoder": {
            "conv1": init_conv(ks[4], 2 * base, base),
            "conv2": init_conv(ks[5], base, in_ch),
        },
    }


# -----------------------------------------------------------------------------
# Module forward passes (activations NHWC / bf16 throughout)
# -----------------------------------------------------------------------------
def encoder_forward(params, x_nhwc):
    f1 = conv2d_nhwc(x_nhwc, params["conv1"], stride=2, act="relu")   # (N,H/2,W/2,b)
    out = conv2d_nhwc(f1, params["conv2"], stride=2, act="relu")      # (N,H/4,W/4,2b)
    return out, [f1]


def _blended_style_stats(level, wts):
    """Per-(n, c) mean/var of the interpolation-weighted blend of a level."""
    blend = jnp.einsum("s,snhwc->nhwc", wts, level.astype(jnp.float32))
    return jnp.mean(blend, axis=(1, 2)), jnp.var(blend, axis=(1, 2))


def decoder_forward(params, x, style_levels, interpolation_weight, num_styles):
    if interpolation_weight is None:
        wts = jnp.full((num_styles,), 1.0 / num_styles, jnp.float32)
    else:
        wts = jnp.asarray(interpolation_weight, jnp.float32)

    f1_mean, f1_var = _blended_style_stats(style_levels[0], wts)
    s_mean, s_var = _blended_style_stats(style_levels[1], wts)

    x = pallas_adain(x, s_mean, s_var)                                 # (N,H/4,W/4,2b)
    x = conv2d_nhwc(x, params["conv1"], stride=1, up=2, act="relu")    # (N,H/2,W/2,b)
    x = pallas_adain(x, f1_mean, f1_var)
    x = conv2d_nhwc(x, params["conv2"], stride=1, up=2, act="tanh")    # (N,H,W,in_ch)
    return x


def generator_forward(params, content, styles, interpolation_weight=None):
    n = content.shape[0]
    num_styles = len(styles)

    x_nhwc = jnp.transpose(content, (0, 2, 3, 1))
    x, _ = encoder_forward(params["content_enc"], x_nhwc)

    # batched style encoder: run once on all styles stacked along N
    s_all = jnp.concatenate(
        [jnp.transpose(s, (0, 2, 3, 1)) for s in styles], axis=0)
    s_code, s_feats = encoder_forward(params["style_enc"], s_all)

    def per_style(t):
        return t.reshape((num_styles, n) + t.shape[1:])

    # reference semantics: features reversed, then the final style code appended
    levels = [per_style(f) for f in reversed(s_feats)] + [per_style(s_code)]

    out_nhwc = decoder_forward(params["decoder"], x, levels,
                               interpolation_weight, num_styles)
    return jnp.transpose(out_nhwc, (0, 3, 1, 2)).astype(jnp.float32)   # NCHW


# -----------------------------------------------------------------------------
if __name__ == "__main__":
    key = jax.random.PRNGKey(0)
    kp, kc, ks1, ks2 = jax.random.split(key, 4)

    params = init_generator_params(kp, in_ch=3, base=16)

    N, C, H, W = 2, 3, 16, 16
    content = jax.random.normal(kc, (N, C, H, W), jnp.float32)
    styles = (
        jax.random.normal(ks1, (N, C, H, W), jnp.float32),
        jax.random.normal(ks2, (N, C, H, W), jnp.float32),
    )
    interpolation_weight = jnp.array([0.3, 0.7], jnp.float32)

    @jax.jit
    def run(content, styles, wts):
        return generator_forward(params, content, styles, wts)

    out = jax.block_until_ready(run(content, styles, interpolation_weight))
    assert out.shape == (N, C, H, W), out.shape
    assert bool(jnp.all(jnp.isfinite(out)))
    print("KERNEL_OK")
</pallas_src>

<mosaic_0001>
module attributes {stable_mosaic.version = 11 : i64} {
  func.func @_matmul_bias_act_kernel(%arg0: i32, %arg1: memref<128x128xbf16, #tpu.memory_space<vmem>>, %arg2: memref<128x16xbf16, #tpu.memory_space<vmem>>, %arg3: memref<1x16xf32, #tpu.memory_space<vmem>>, %arg4: memref<128x16xbf16, #tpu.memory_space<vmem>>) attributes {dimension_semantics = [#tpu.dimension_semantics<parallel>], iteration_bounds = array<i64: 2>, scalar_prefetch = 0 : i64, scratch_operands = 0 : i64, tpu.core_type = #tpu.core_type<tc>, window_params = [{transform_indices = @transform_0, window_bounds = array<i64: 128, 128>}, {pipeline_mode = #tpu.pipeline_mode<synchronous>, transform_indices = @transform_1, window_bounds = array<i64: 128, 16>}, {pipeline_mode = #tpu.pipeline_mode<synchronous>, transform_indices = @transform_2, window_bounds = array<i64: 1, 16>}, {transform_indices = @transform_3, window_bounds = array<i64: 128, 16>}]} {
    %c0 = arith.constant 0 : index
    %c0_0 = arith.constant 0 : index
    %0 = vector.load %arg1[%c0, %c0_0] : memref<128x128xbf16, #tpu.memory_space<vmem>>, vector<128x128xbf16>
    %c0_1 = arith.constant 0 : index
    %c0_2 = arith.constant 0 : index
    %1 = vector.load %arg2[%c0_1, %c0_2] : memref<128x16xbf16, #tpu.memory_space<vmem>>, vector<128x16xbf16>
    %cst = arith.constant dense<0.000000e+00> : vector<128x16xf32>
    %2 = tpu.matmul %0, %1, %cst {dimension_numbers = #tpu.dot_dimension_numbers<[1], [0], [0], [1], [0, 0, 1, 1], [], []>} : vector<128x128xbf16>, vector<128x16xbf16>, vector<128x16xf32> -> vector<128x16xf32>
    %c0_3 = arith.constant 0 : index
    %c0_4 = arith.constant 0 : index
    %3 = vector.load %arg3[%c0_3, %c0_4] : memref<1x16xf32, #tpu.memory_space<vmem>>, vector<1x16xf32>
    %4 = vector.broadcast %3 : vector<1x16xf32> to vector<128x16xf32>
    %5 = arith.addf %2, %4 : vector<128x16xf32>
    %cst_5 = arith.constant 0.000000e+00 : f32
    %6 = vector.broadcast %cst_5 : f32 to vector<128x16xf32>
    %7 = arith.maximumf %5, %6 : vector<128x16xf32>
    %8 = arith.truncf %7 : vector<128x16xf32> to vector<128x16xbf16>
    %c0_6 = arith.constant 0 : index
    %c0_7 = arith.constant 0 : index
    %9 = vector.load %arg4[%c0_6, %c0_7] : memref<128x16xbf16, #tpu.memory_space<vmem>>, vector<128x16xbf16>
    tpu.vector_store %arg4[%c0_6, %c0_7], %8 {strides = array<i32>} : memref<128x16xbf16, #tpu.memory_space<vmem>>, vector<128x16xbf16>,
    return
  }
  func.func @transform_0(%arg0: i32) -> (i32, i32) {
    %c0_i32 = arith.constant 0 : i32
    %c0_i32_0 = arith.constant 0 : i32
    return %arg0, %c0_i32 : i32, i32
  }
  func.func @transform_1(%arg0: i32) -> (i32, i32) {
    %c0_i32 = arith.constant 0 : i32
    %c0_i32_0 = arith.constant 0 : i32
    %c0_i32_1 = arith.constant 0 : i32
    return %c0_i32, %c0_i32_0 : i32, i32
  }
  func.func @transform_2(%arg0: i32) -> (i32, i32) {
    %c0_i32 = arith.constant 0 : i32
    %c0_i32_0 = arith.constant 0 : i32
    %c0_i32_1 = arith.constant 0 : i32
    return %c0_i32, %c0_i32_0 : i32, i32
  }
  func.func @transform_3(%arg0: i32) -> (i32, i32) {
    %c0_i32 = arith.constant 0 : i32
    %c0_i32_0 = arith.constant 0 : i32
    return %arg0, %c0_i32 : i32, i32
  }
}

module attributes {stable_mosaic.version = 11 : i64} {
  func.func @_matmul_bias_act_kernel(%arg0: i32, %arg1: memref<32x256xbf16, #tpu.memory_space<vmem>>, %arg2: memref<256x32xbf16, #tpu.memory_space<vmem>>, %arg3: memref<1x32xf32, #tpu.memory_space<vmem>>, %arg4: memref<32x32xbf16, #tpu.memory_space<vmem>>) attributes {dimension_semantics = [#tpu.dimension_semantics<parallel>], iteration_bounds = array<i64: 2>, scalar_prefetch = 0 : i64, scratch_operands = 0 : i64, tpu.core_type = #tpu.core_type<tc>, window_params = [{transform_indices = @transform_0, window_bounds = array<i64: 32, 256>}, {pipeline_mode = #tpu.pipeline_mode<synchronous>, transform_indices = @transform_1, window_bounds = array<i64: 256, 32>}, {pipeline_mode = #tpu.pipeline_mode<synchronous>, transform_indices = @transform_2, window_bounds = array<i64: 1, 32>}, {transform_indices = @transform_3, window_bounds = array<i64: 32, 32>}]} {
    %c0 = arith.constant 0 : index
    %c0_0 = arith.constant 0 : index
    %0 = vector.load %arg1[%c0, %c0_0] : memref<32x256xbf16, #tpu.memory_space<vmem>>, vector<32x256xbf16>
    %c0_1 = arith.constant 0 : index
    %c0_2 = arith.constant 0 : index
    %1 = vector.load %arg2[%c0_1, %c0_2] : memref<256x32xbf16, #tpu.memory_space<vmem>>, vector<256x32xbf16>
    %cst = arith.constant dense<0.000000e+00> : vector<32x32xf32>
    %2 = tpu.matmul %0, %1, %cst {dimension_numbers = #tpu.dot_dimension_numbers<[1], [0], [0], [1], [0, 0, 1, 1], [], []>} : vector<32x256xbf16>, vector<256x32xbf16>, vector<32x32xf32> -> vector<32x32xf32>
    %c0_3 = arith.constant 0 : index
    %c0_4 = arith.constant 0 : index
    %3 = vector.load %arg3[%c0_3, %c0_4] : memref<1x32xf32, #tpu.memory_space<vmem>>, vector<1x32xf32>
    %4 = vector.broadcast %3 : vector<1x32xf32> to vector<32x32xf32>
    %5 = arith.addf %2, %4 : vector<32x32xf32>
    %cst_5 = arith.constant 0.000000e+00 : f32
    %6 = vector.broadcast %cst_5 : f32 to vector<32x32xf32>
    %7 = arith.maximumf %5, %6 : vector<32x32xf32>
    %8 = arith.truncf %7 : vector<32x32xf32> to vector<32x32xbf16>
    %c0_6 = arith.constant 0 : index
    %c0_7 = arith.constant 0 : index
    %9 = vector.load %arg4[%c0_6, %c0_7] : memref<32x32xbf16, #tpu.memory_space<vmem>>, vector<32x32xbf16>
    tpu.vector_store %arg4[%c0_6, %c0_7], %8 {strides = array<i32>} : memref<32x32xbf16, #tpu.memory_space<vmem>>, vector<32x32xbf16>,
    return
  }
  func.func @transform_0(%arg0: i32) -> (i32, i32) {
    %c0_i32 = arith.constant 0 : i32
    %c0_i32_0 = arith.constant 0 : i32
    return %arg0, %c0_i32 : i32, i32
  }
  func.func @transform_1(%arg0: i32) -> (i32, i32) {
    %c0_i32 = arith.constant 0 : i32
    %c0_i32_0 = arith.constant 0 : i32
    %c0_i32_1 = arith.constant 0 : i32
    return %c0_i32, %c0_i32_0 : i32, i32
  }
  func.func @transform_2(%arg0: i32) -> (i32, i32) {
    %c0_i32 = arith.constant 0 : i32
    %c0_i32_0 = arith.constant 0 : i32
    %c0_i32_1 = arith.constant 0 : i32
    return %c0_i32, %c0_i32_0 : i32, i32
  }
  func.func @transform_3(%arg0: i32) -> (i32, i32) {
    %c0_i32 = arith.constant 0 : i32
    %c0_i32_0 = arith.constant 0 : i32
    return %arg0, %c0_i32 : i32, i32
  }
}

module attributes {stable_mosaic.version = 11 : i64} {
  func.func @_matmul_bias_act_kernel(%arg0: i32, %arg1: memref<64x128xbf16, #tpu.memory_space<vmem>>, %arg2: memref<128x16xbf16, #tpu.memory_space<vmem>>, %arg3: memref<1x16xf32, #tpu.memory_space<vmem>>, %arg4: memref<64x16xbf16, #tpu.memory_space<vmem>>) attributes {dimension_semantics = [#tpu.dimension_semantics<parallel>], iteration_bounds = array<i64: 2>, scalar_prefetch = 0 : i64, scratch_operands = 0 : i64, tpu.core_type = #tpu.core_type<tc>, window_params = [{transform_indices = @transform_0, window_bounds = array<i64: 64, 128>}, {pipeline_mode = #tpu.pipeline_mode<synchronous>, transform_indices = @transform_1, window_bounds = array<i64: 128, 16>}, {pipeline_mode = #tpu.pipeline_mode<synchronous>, transform_indices = @transform_2, window_bounds = array<i64: 1, 16>}, {transform_indices = @transform_3, window_bounds = array<i64: 64, 16>}]} {
    %c0 = arith.constant 0 : index
    %c0_0 = arith.constant 0 : index
    %0 = vector.load %arg1[%c0, %c0_0] : memref<64x128xbf16, #tpu.memory_space<vmem>>, vector<64x128xbf16>
    %c0_1 = arith.constant 0 : index
    %c0_2 = arith.constant 0 : index
    %1 = vector.load %arg2[%c0_1, %c0_2] : memref<128x16xbf16, #tpu.memory_space<vmem>>, vector<128x16xbf16>
    %cst = arith.constant dense<0.000000e+00> : vector<64x16xf32>
    %2 = tpu.matmul %0, %1, %cst {dimension_numbers = #tpu.dot_dimension_numbers<[1], [0], [0], [1], [0, 0, 1, 1], [], []>} : vector<64x128xbf16>, vector<128x16xbf16>, vector<64x16xf32> -> vector<64x16xf32>
    %c0_3 = arith.constant 0 : index
    %c0_4 = arith.constant 0 : index
    %3 = vector.load %arg3[%c0_3, %c0_4] : memref<1x16xf32, #tpu.memory_space<vmem>>, vector<1x16xf32>
    %4 = vector.broadcast %3 : vector<1x16xf32> to vector<64x16xf32>
    %5 = arith.addf %2, %4 : vector<64x16xf32>
    %cst_5 = arith.constant 0.000000e+00 : f32
    %6 = vector.broadcast %cst_5 : f32 to vector<64x16xf32>
    %7 = arith.maximumf %5, %6 : vector<64x16xf32>
    %8 = arith.truncf %7 : vector<64x16xf32> to vector<64x16xbf16>
    %c0_6 = arith.constant 0 : index
    %c0_7 = arith.constant 0 : index
    %9 = vector.load %arg4[%c0_6, %c0_7] : memref<64x16xbf16, #tpu.memory_space<vmem>>, vector<64x16xbf16>
    tpu.vector_store %arg4[%c0_6, %c0_7], %8 {strides = array<i32>} : memref<64x16xbf16, #tpu.memory_space<vmem>>, vector<64x16xbf16>,
    return
  }
  func.func @transform_0(%arg0: i32) -> (i32, i32) {
    %c0_i32 = arith.constant 0 : i32
    %c0_i32_0 = arith.constant 0 : i32
    return %arg0, %c0_i32 : i32, i32
  }
  func.func @transform_1(%arg0: i32) -> (i32, i32) {
    %c0_i32 = arith.constant 0 : i32
    %c0_i32_0 = arith.constant 0 : i32
    %c0_i32_1 = arith.constant 0 : i32
    return %c0_i32, %c0_i32_0 : i32, i32
  }
  func.func @transform_2(%arg0: i32) -> (i32, i32) {
    %c0_i32 = arith.constant 0 : i32
    %c0_i32_0 = arith.constant 0 : i32
    %c0_i32_1 = arith.constant 0 : i32
    return %c0_i32, %c0_i32_0 : i32, i32
  }
  func.func @transform_3(%arg0: i32) -> (i32, i32) {
    %c0_i32 = arith.constant 0 : i32
    %c0_i32_0 = arith.constant 0 : i32
    return %arg0, %c0_i32 : i32, i32
  }
}

module attributes {stable_mosaic.version = 11 : i64} {
  func.func @_matmul_bias_act_kernel(%arg0: i32, %arg1: memref<16x256xbf16, #tpu.memory_space<vmem>>, %arg2: memref<256x32xbf16, #tpu.memory_space<vmem>>, %arg3: memref<1x32xf32, #tpu.memory_space<vmem>>, %arg4: memref<16x32xbf16, #tpu.memory_space<vmem>>) attributes {dimension_semantics = [#tpu.dimension_semantics<parallel>], iteration_bounds = array<i64: 2>, scalar_prefetch = 0 : i64, scratch_operands = 0 : i64, tpu.core_type = #tpu.core_type<tc>, window_params = [{transform_indices = @transform_0, window_bounds = array<i64: 16, 256>}, {pipeline_mode = #tpu.pipeline_mode<synchronous>, transform_indices = @transform_1, window_bounds = array<i64: 256, 32>}, {pipeline_mode = #tpu.pipeline_mode<synchronous>, transform_indices = @transform_2, window_bounds = array<i64: 1, 32>}, {transform_indices = @transform_3, window_bounds = array<i64: 16, 32>}]} {
    %c0 = arith.constant 0 : index
    %c0_0 = arith.constant 0 : index
    %0 = vector.load %arg1[%c0, %c0_0] : memref<16x256xbf16, #tpu.memory_space<vmem>>, vector<16x256xbf16>
    %c0_1 = arith.constant 0 : index
    %c0_2 = arith.constant 0 : index
    %1 = vector.load %arg2[%c0_1, %c0_2] : memref<256x32xbf16, #tpu.memory_space<vmem>>, vector<256x32xbf16>
    %cst = arith.constant dense<0.000000e+00> : vector<16x32xf32>
    %2 = tpu.matmul %0, %1, %cst {dimension_numbers = #tpu.dot_dimension_numbers<[1], [0], [0], [1], [0, 0, 1, 1], [], []>} : vector<16x256xbf16>, vector<256x32xbf16>, vector<16x32xf32> -> vector<16x32xf32>
    %c0_3 = arith.constant 0 : index
    %c0_4 = arith.constant 0 : index
    %3 = vector.load %arg3[%c0_3, %c0_4] : memref<1x32xf32, #tpu.memory_space<vmem>>, vector<1x32xf32>
    %4 = vector.broadcast %3 : vector<1x32xf32> to vector<16x32xf32>
    %5 = arith.addf %2, %4 : vector<16x32xf32>
    %cst_5 = arith.constant 0.000000e+00 : f32
    %6 = vector.broadcast %cst_5 : f32 to vector<16x32xf32>
    %7 = arith.maximumf %5, %6 : vector<16x32xf32>
    %8 = arith.truncf %7 : vector<16x32xf32> to vector<16x32xbf16>
    %c0_6 = arith.constant 0 : index
    %c0_7 = arith.constant 0 : index
    %9 = vector.load %arg4[%c0_6, %c0_7] : memref<16x32xbf16, #tpu.memory_space<vmem>>, vector<16x32xbf16>
    tpu.vector_store %arg4[%c0_6, %c0_7], %8 {strides = array<i32>} : memref<16x32xbf16, #tpu.memory_space<vmem>>, vector<16x32xbf16>,
    return
  }
  func.func @transform_0(%arg0: i32) -> (i32, i32) {
    %c0_i32 = arith.constant 0 : i32
    %c0_i32_0 = arith.constant 0 : i32
    return %arg0, %c0_i32 : i32, i32
  }
  func.func @transform_1(%arg0: i32) -> (i32, i32) {
    %c0_i32 = arith.constant 0 : i32
    %c0_i32_0 = arith.constant 0 : i32
    %c0_i32_1 = arith.constant 0 : i32
    return %c0_i32, %c0_i32_0 : i32, i32
  }
  func.func @transform_2(%arg0: i32) -> (i32, i32) {
    %c0_i32 = arith.constant 0 : i32
    %c0_i32_0 = arith.constant 0 : i32
    %c0_i32_1 = arith.constant 0 : i32
    return %c0_i32, %c0_i32_0 : i32, i32
  }
  func.func @transform_3(%arg0: i32) -> (i32, i32) {
    %c0_i32 = arith.constant 0 : i32
    %c0_i32_0 = arith.constant 0 : i32
    return %arg0, %c0_i32 : i32, i32
  }
}

module attributes {stable_mosaic.version = 11 : i64} {
  func.func @_adain_reduce_kernel(%arg0: i32, %arg1: i32, %arg2: memref<1x8x128xbf16, #tpu.memory_space<vmem>>, %arg3: memref<1x1x128xf32, #tpu.memory_space<vmem>>, %arg4: memref<1x2x128xf32, #tpu.memory_space<vmem>>) attributes {dimension_semantics = [#tpu.dimension_semantics<parallel>, #tpu.dimension_semantics<arbitrary>], iteration_bounds = array<i64: 2, 1>, scalar_prefetch = 0 : i64, scratch_operands = 0 : i64, tpu.core_type = #tpu.core_type<tc>, window_params = [{transform_indices = @transform_0, window_bounds = array<i64: 1, 8, 128>}, {transform_indices = @transform_1, window_bounds = array<i64: 1, 1, 128>}, {transform_indices = @transform_2, window_bounds = array<i64: 1, 2, 128>}]} {
    %c0_i32 = arith.constant 0 : i32
    %0 = arith.cmpi eq, %arg1, %c0_i32 : i32
    %1 = arith.extui %0 : i1 to i32
    %c0_i32_0 = arith.constant 0 : i32
    %2 = arith.cmpi ne, %1, %c0_i32_0 : i32
    scf.if %2 {
      %cst_14 = arith.constant 0.000000e+00 : f32
      %32 = vector.broadcast %cst_14 : f32 to vector<1x2x128xf32>
      %c0_15 = arith.constant 0 : index
      %c0_16 = arith.constant 0 : index
      %c0_17 = arith.constant 0 : index
      %33 = vector.load %arg4[%c0_15, %c0_16, %c0_17] : memref<1x2x128xf32, #tpu.memory_space<vmem>>, vector<1x2x128xf32>
      tpu.vector_store %arg4[%c0_15, %c0_16, %c0_17], %32 {strides = array<i32>} : memref<1x2x128xf32, #tpu.memory_space<vmem>>, vector<1x2x128xf32>,
    } else {
    }
    %c0 = arith.constant 0 : index
    %c0_1 = arith.constant 0 : index
    %c0_2 = arith.constant 0 : index
    %3 = vector.load %arg2[%c0, %c0_1, %c0_2] : memref<1x8x128xbf16, #tpu.memory_space<vmem>>, vector<1x8x128xbf16>
    %4 = vector.shape_cast %3 : vector<1x8x128xbf16> to vector<8x128xbf16>
    %5 = arith.extf %4 : vector<8x128xbf16> to vector<8x128xf32>
    %c0_3 = arith.constant 0 : index
    %c0_4 = arith.constant 0 : index
    %c0_5 = arith.constant 0 : index
    %6 = vector.load %arg3[%c0_3, %c0_4, %c0_5] : memref<1x1x128xf32, #tpu.memory_space<vmem>>, vector<1x1x128xf32>
    %7 = vector.shape_cast %6 : vector<1x1x128xf32> to vector<1x128xf32>
    %8 = vector.broadcast %7 : vector<1x128xf32> to vector<8x128xf32>
    %9 = arith.subf %5, %8 : vector<8x128xf32>
    %c8_i32 = arith.constant 8 : i32
    %10 = arith.muli %arg1, %c8_i32 : i32
    %11 = tpu.iota {dimensions = array<i32: 0>} : vector<8x1xi32>
    %12 = vector.broadcast %10 : i32 to vector<8x1xi32>
    %13 = arith.addi %12, %11 : vector<8x1xi32>
    %c4_i32 = arith.constant 4 : i32
    %14 = vector.broadcast %c4_i32 : i32 to vector<8x1xi32>
    %15 = arith.cmpi slt, %13, %14 : vector<8x1xi32>
    %cst = arith.constant 0.000000e+00 : f32
    %16 = vector.shape_cast %15 : vector<8x1xi1> to vector<8x1xi1>
    %17 = vector.broadcast %16 : vector<8x1xi1> to vector<8x128xi1>
    %18 = vector.broadcast %cst : f32 to vector<8x128xf32>
    %19 = arith.select %17, %9, %18 : vector<8x128xi1>, vector<8x128xf32>
    %cst_6 = arith.constant dense<0.000000e+00> : vector<128xf32>
    %20 = vector.multi_reduction <add>, %19, %cst_6 [0] : vector<8x128xf32> to vector<128xf32>
    %21 = vector.shape_cast %20 : vector<128xf32> to vector<1x128xf32>
    %22 = arith.mulf %19, %19 : vector<8x128xf32>
    %cst_7 = arith.constant dense<0.000000e+00> : vector<128xf32>
    %23 = vector.multi_reduction <add>, %22, %cst_7 [0] : vector<8x128xf32> to vector<128xf32>
    %24 = vector.shape_cast %23 : vector<128xf32> to vector<1x128xf32>
    %c0_8 = arith.constant 0 : index
    %c0_9 = arith.constant 0 : index
    %c0_10 = arith.constant 0 : index
    %25 = vector.load %arg4[%c0_8, %c0_9, %c0_10] : memref<1x2x128xf32, #tpu.memory_space<vmem>>, vector<1x2x128xf32>
    %26 = vector.shape_cast %25 : vector<1x2x128xf32> to vector<2x128xf32>
    %27 = tpu.concatenate %21, %24 in 0 : vector<1x128xf32>, vector<1x128xf32> -> vector<2x128xf32>
    %28 = arith.addf %26, %27 : vector<2x128xf32>
    %c0_11 = arith.constant 0 : index
    %c0_12 = arith.constant 0 : index
    %c0_13 = arith.constant 0 : index
    %29 = vector.load %arg4[%c0_11, %c0_12, %c0_13] : memref<1x2x128xf32, #tpu.memory_space<vmem>>, vector<1x2x128xf32>
    %30 = vector.shape_cast %29 : vector<1x2x128xf32> to vector<2x128xf32>
    %31 = vector.shape_cast %28 : vector<2x128xf32> to vector<1x2x128xf32>
    tpu.vector_store %arg4[%c0_11, %c0_12, %c0_13], %31 {strides = array<i32>} : memref<1x2x128xf32, #tpu.memory_space<vmem>>, vector<1x2x128xf32>,
    return
  }
  func.func @transform_0(%arg0: i32, %arg1: i32) -> (i32, i32, i32) {
    %c0_i32 = arith.constant 0 : i32
    %c0_i32_0 = arith.constant 0 : i32
    return %arg0, %arg1, %c0_i32 : i32, i32, i32
  }
  func.func @transform_1(%arg0: i32, %arg1: i32) -> (i32, i32, i32) {
    %c0_i32 = arith.constant 0 : i32
    %c0_i32_0 = arith.constant 0 : i32
    %c0_i32_1 = arith.constant 0 : i32
    return %arg0, %c0_i32, %c0_i32_0 : i32, i32, i32
  }
  func.func @transform_2(%arg0: i32, %arg1: i32) -> (i32, i32, i32) {
    %c0_i32 = arith.constant 0 : i32
    %c0_i32_0 = arith.constant 0 : i32
    %c0_i32_1 = arith.constant 0 : i32
    return %arg0, %c0_i32, %c0_i32_0 : i32, i32, i32
  }
}

module attributes {stable_mosaic.version = 11 : i64} {
  func.func @_adain_apply_kernel(%arg0: i32, %arg1: i32, %arg2: memref<1x8x128xbf16, #tpu.memory_space<vmem>>, %arg3: memref<1x1x128xf32, #tpu.memory_space<vmem>>, %arg4: memref<1x1x128xf32, #tpu.memory_space<vmem>>, %arg5: memref<1x8x128xbf16, #tpu.memory_space<vmem>>) attributes {dimension_semantics = [#tpu.dimension_semantics<parallel>, #tpu.dimension_semantics<parallel>], iteration_bounds = array<i64: 2, 1>, scalar_prefetch = 0 : i64, scratch_operands = 0 : i64, tpu.core_type = #tpu.core_type<tc>, window_params = [{transform_indices = @transform_0, window_bounds = array<i64: 1, 8, 128>}, {transform_indices = @transform_1, window_bounds = array<i64: 1, 1, 128>}, {transform_indices = @transform_2, window_bounds = array<i64: 1, 1, 128>}, {transform_indices = @transform_3, window_bounds = array<i64: 1, 8, 128>}]} {
    %c0 = arith.constant 0 : index
    %c0_0 = arith.constant 0 : index
    %c0_1 = arith.constant 0 : index
    %0 = vector.load %arg2[%c0, %c0_0, %c0_1] : memref<1x8x128xbf16, #tpu.memory_space<vmem>>, vector<1x8x128xbf16>
    %1 = vector.shape_cast %0 : vector<1x8x128xbf16> to vector<8x128xbf16>
    %2 = arith.extf %1 : vector<8x128xbf16> to vector<8x128xf32>
    %c0_2 = arith.constant 0 : index
    %c0_3 = arith.constant 0 : index
    %c0_4 = arith.constant 0 : index
    %3 = vector.load %arg3[%c0_2, %c0_3, %c0_4] : memref<1x1x128xf32, #tpu.memory_space<vmem>>, vector<1x1x128xf32>
    %4 = vector.shape_cast %3 : vector<1x1x128xf32> to vector<1x128xf32>
    %5 = vector.broadcast %4 : vector<1x128xf32> to vector<8x128xf32>
    %6 = arith.mulf %2, %5 : vector<8x128xf32>
    %c0_5 = arith.constant 0 : index
    %c0_6 = arith.constant 0 : index
    %c0_7 = arith.constant 0 : index
    %7 = vector.load %arg4[%c0_5, %c0_6, %c0_7] : memref<1x1x128xf32, #tpu.memory_space<vmem>>, vector<1x1x128xf32>
    %8 = vector.shape_cast %7 : vector<1x1x128xf32> to vector<1x128xf32>
    %9 = vector.broadcast %8 : vector<1x128xf32> to vector<8x128xf32>
    %10 = arith.addf %6, %9 : vector<8x128xf32>
    %11 = arith.truncf %10 : vector<8x128xf32> to vector<8x128xbf16>
    %c0_8 = arith.constant 0 : index
    %c0_9 = arith.constant 0 : index
    %c0_10 = arith.constant 0 : index
    %12 = vector.load %arg5[%c0_8, %c0_9, %c0_10] : memref<1x8x128xbf16, #tpu.memory_space<vmem>>, vector<1x8x128xbf16>
    %13 = vector.shape_cast %12 : vector<1x8x128xbf16> to vector<8x128xbf16>
    %14 = vector.shape_cast %11 : vector<8x128xbf16> to vector<1x8x128xbf16>
    tpu.vector_store %arg5[%c0_8, %c0_9, %c0_10], %14 {strides = array<i32>} : memref<1x8x128xbf16, #tpu.memory_space<vmem>>, vector<1x8x128xbf16>,
    return
  }
  func.func @transform_0(%arg0: i32, %arg1: i32) -> (i32, i32, i32) {
    %c0_i32 = arith.constant 0 : i32
    %c0_i32_0 = arith.constant 0 : i32
    return %arg0, %arg1, %c0_i32 : i32, i32, i32
  }
  func.func @transform_1(%arg0: i32, %arg1: i32) -> (i32, i32, i32) {
    %c0_i32 = arith.constant 0 : i32
    %c0_i32_0 = arith.constant 0 : i32
    %c0_i32_1 = arith.constant 0 : i32
    return %arg0, %c0_i32, %c0_i32_0 : i32, i32, i32
  }
  func.func @transform_2(%arg0: i32, %arg1: i32) -> (i32, i32, i32) {
    %c0_i32 = arith.constant 0 : i32
    %c0_i32_0 = arith.constant 0 : i32
    %c0_i32_1 = arith.constant 0 : i32
    return %arg0, %c0_i32, %c0_i32_0 : i32, i32, i32
  }
  func.func @transform_3(%arg0: i32, %arg1: i32) -> (i32, i32, i32) {
    %c0_i32 = arith.constant 0 : i32
    %c0_i32_0 = arith.constant 0 : i32
    return %arg0, %arg1, %c0_i32 : i32, i32, i32
  }
}

module attributes {stable_mosaic.version = 11 : i64} {
  func.func @_matmul_bias_act_kernel(%arg0: i32, %arg1: memref<64x384xbf16, #tpu.memory_space<vmem>>, %arg2: memref<384x16xbf16, #tpu.memory_space<vmem>>, %arg3: memref<1x16xf32, #tpu.memory_space<vmem>>, %arg4: memref<64x16xbf16, #tpu.memory_space<vmem>>) attributes {dimension_semantics = [#tpu.dimension_semantics<parallel>], iteration_bounds = array<i64: 2>, scalar_prefetch = 0 : i64, scratch_operands = 0 : i64, tpu.core_type = #tpu.core_type<tc>, window_params = [{transform_indices = @transform_0, window_bounds = array<i64: 64, 384>}, {pipeline_mode = #tpu.pipeline_mode<synchronous>, transform_indices = @transform_1, window_bounds = array<i64: 384, 16>}, {pipeline_mode = #tpu.pipeline_mode<synchronous>, transform_indices = @transform_2, window_bounds = array<i64: 1, 16>}, {transform_indices = @transform_3, window_bounds = array<i64: 64, 16>}]} {
    %c0 = arith.constant 0 : index
    %c0_0 = arith.constant 0 : index
    %0 = vector.load %arg1[%c0, %c0_0] : memref<64x384xbf16, #tpu.memory_space<vmem>>, vector<64x384xbf16>
    %c0_1 = arith.constant 0 : index
    %c0_2 = arith.constant 0 : index
    %1 = vector.load %arg2[%c0_1, %c0_2] : memref<384x16xbf16, #tpu.memory_space<vmem>>, vector<384x16xbf16>
    %cst = arith.constant dense<0.000000e+00> : vector<64x16xf32>
    %2 = tpu.matmul %0, %1, %cst {dimension_numbers = #tpu.dot_dimension_numbers<[1], [0], [0], [1], [0, 0, 1, 1], [], []>} : vector<64x384xbf16>, vector<384x16xbf16>, vector<64x16xf32> -> vector<64x16xf32>
    %c0_3 = arith.constant 0 : index
    %c0_4 = arith.constant 0 : index
    %3 = vector.load %arg3[%c0_3, %c0_4] : memref<1x16xf32, #tpu.memory_space<vmem>>, vector<1x16xf32>
    %4 = vector.broadcast %3 : vector<1x16xf32> to vector<64x16xf32>
    %5 = arith.addf %2, %4 : vector<64x16xf32>
    %cst_5 = arith.constant 0.000000e+00 : f32
    %6 = vector.broadcast %cst_5 : f32 to vector<64x16xf32>
    %7 = arith.maximumf %5, %6 : vector<64x16xf32>
    %8 = arith.truncf %7 : vector<64x16xf32> to vector<64x16xbf16>
    %c0_6 = arith.constant 0 : index
    %c0_7 = arith.constant 0 : index
    %9 = vector.load %arg4[%c0_6, %c0_7] : memref<64x16xbf16, #tpu.memory_space<vmem>>, vector<64x16xbf16>
    tpu.vector_store %arg4[%c0_6, %c0_7], %8 {strides = array<i32>} : memref<64x16xbf16, #tpu.memory_space<vmem>>, vector<64x16xbf16>,
    return
  }
  func.func @transform_0(%arg0: i32) -> (i32, i32) {
    %c0_i32 = arith.constant 0 : i32
    %c0_i32_0 = arith.constant 0 : i32
    return %arg0, %c0_i32 : i32, i32
  }
  func.func @transform_1(%arg0: i32) -> (i32, i32) {
    %c0_i32 = arith.constant 0 : i32
    %c0_i32_0 = arith.constant 0 : i32
    %c0_i32_1 = arith.constant 0 : i32
    return %c0_i32, %c0_i32_0 : i32, i32
  }
  func.func @transform_2(%arg0: i32) -> (i32, i32) {
    %c0_i32 = arith.constant 0 : i32
    %c0_i32_0 = arith.constant 0 : i32
    %c0_i32_1 = arith.constant 0 : i32
    return %c0_i32, %c0_i32_0 : i32, i32
  }
  func.func @transform_3(%arg0: i32) -> (i32, i32) {
    %c0_i32 = arith.constant 0 : i32
    %c0_i32_0 = arith.constant 0 : i32
    return %arg0, %c0_i32 : i32, i32
  }
}

module attributes {stable_mosaic.version = 11 : i64} {
  func.func @_adain_reduce_kernel(%arg0: i32, %arg1: i32, %arg2: memref<1x8x128xbf16, #tpu.memory_space<vmem>>, %arg3: memref<1x1x128xf32, #tpu.memory_space<vmem>>, %arg4: memref<1x2x128xf32, #tpu.memory_space<vmem>>) attributes {dimension_semantics = [#tpu.dimension_semantics<parallel>, #tpu.dimension_semantics<arbitrary>], iteration_bounds = array<i64: 2, 1>, scalar_prefetch = 0 : i64, scratch_operands = 0 : i64, tpu.core_type = #tpu.core_type<tc>, window_params = [{transform_indices = @transform_0, window_bounds = array<i64: 1, 8, 128>}, {transform_indices = @transform_1, window_bounds = array<i64: 1, 1, 128>}, {transform_indices = @transform_2, window_bounds = array<i64: 1, 2, 128>}]} {
    %c0_i32 = arith.constant 0 : i32
    %0 = arith.cmpi eq, %arg1, %c0_i32 : i32
    %1 = arith.extui %0 : i1 to i32
    %c0_i32_0 = arith.constant 0 : i32
    %2 = arith.cmpi ne, %1, %c0_i32_0 : i32
    scf.if %2 {
      %cst_13 = arith.constant 0.000000e+00 : f32
      %22 = vector.broadcast %cst_13 : f32 to vector<1x2x128xf32>
      %c0_14 = arith.constant 0 : index
      %c0_15 = arith.constant 0 : index
      %c0_16 = arith.constant 0 : index
      %23 = vector.load %arg4[%c0_14, %c0_15, %c0_16] : memref<1x2x128xf32, #tpu.memory_space<vmem>>, vector<1x2x128xf32>
      tpu.vector_store %arg4[%c0_14, %c0_15, %c0_16], %22 {strides = array<i32>} : memref<1x2x128xf32, #tpu.memory_space<vmem>>, vector<1x2x128xf32>,
    } else {
    }
    %c0 = arith.constant 0 : index
    %c0_1 = arith.constant 0 : index
    %c0_2 = arith.constant 0 : index
    %3 = vector.load %arg2[%c0, %c0_1, %c0_2] : memref<1x8x128xbf16, #tpu.memory_space<vmem>>, vector<1x8x128xbf16>
    %4 = vector.shape_cast %3 : vector<1x8x128xbf16> to vector<8x128xbf16>
    %5 = arith.extf %4 : vector<8x128xbf16> to vector<8x128xf32>
    %c0_3 = arith.constant 0 : index
    %c0_4 = arith.constant 0 : index
    %c0_5 = arith.constant 0 : index
    %6 = vector.load %arg3[%c0_3, %c0_4, %c0_5] : memref<1x1x128xf32, #tpu.memory_space<vmem>>, vector<1x1x128xf32>
    %7 = vector.shape_cast %6 : vector<1x1x128xf32> to vector<1x128xf32>
    %8 = vector.broadcast %7 : vector<1x128xf32> to vector<8x128xf32>
    %9 = arith.subf %5, %8 : vector<8x128xf32>
    %cst = arith.constant dense<0.000000e+00> : vector<128xf32>
    %10 = vector.multi_reduction <add>, %9, %cst [0] : vector<8x128xf32> to vector<128xf32>
    %11 = vector.shape_cast %10 : vector<128xf32> to vector<1x128xf32>
    %12 = arith.mulf %9, %9 : vector<8x128xf32>
    %cst_6 = arith.constant dense<0.000000e+00> : vector<128xf32>
    %13 = vector.multi_reduction <add>, %12, %cst_6 [0] : vector<8x128xf32> to vector<128xf32>
    %14 = vector.shape_cast %13 : vector<128xf32> to vector<1x128xf32>
    %c0_7 = arith.constant 0 : index
    %c0_8 = arith.constant 0 : index
    %c0_9 = arith.constant 0 : index
    %15 = vector.load %arg4[%c0_7, %c0_8, %c0_9] : memref<1x2x128xf32, #tpu.memory_space<vmem>>, vector<1x2x128xf32>
    %16 = vector.shape_cast %15 : vector<1x2x128xf32> to vector<2x128xf32>
    %17 = tpu.concatenate %11, %14 in 0 : vector<1x128xf32>, vector<1x128xf32> -> vector<2x128xf32>
    %18 = arith.addf %16, %17 : vector<2x128xf32>
    %c0_10 = arith.constant 0 : index
    %c0_11 = arith.constant 0 : index
    %c0_12 = arith.constant 0 : index
    %19 = vector.load %arg4[%c0_10, %c0_11, %c0_12] : memref<1x2x128xf32, #tpu.memory_space<vmem>>, vector<1x2x128xf32>
    %20 = vector.shape_cast %19 : vector<1x2x128xf32> to vector<2x128xf32>
    %21 = vector.shape_cast %18 : vector<2x128xf32> to vector<1x2x128xf32>
    tpu.vector_store %arg4[%c0_10, %c0_11, %c0_12], %21 {strides = array<i32>} : memref<1x2x128xf32, #tpu.memory_space<vmem>>, vector<1x2x128xf32>,
    return
  }
  func.func @transform_0(%arg0: i32, %arg1: i32) -> (i32, i32, i32) {
    %c0_i32 = arith.constant 0 : i32
    %c0_i32_0 = arith.constant 0 : i32
    return %arg0, %arg1, %c0_i32 : i32, i32, i32
  }
  func.func @transform_1(%arg0: i32, %arg1: i32) -> (i32, i32, i32) {
    %c0_i32 = arith.constant 0 : i32
    %c0_i32_0 = arith.constant 0 : i32
    %c0_i32_1 = arith.constant 0 : i32
    return %arg0, %c0_i32, %c0_i32_0 : i32, i32, i32
  }
  func.func @transform_2(%arg0: i32, %arg1: i32) -> (i32, i32, i32) {
    %c0_i32 = arith.constant 0 : i32
    %c0_i32_0 = arith.constant 0 : i32
    %c0_i32_1 = arith.constant 0 : i32
    return %arg0, %c0_i32, %c0_i32_0 : i32, i32, i32
  }
}

module attributes {stable_mosaic.version = 11 : i64} {
  func.func @_matmul_bias_act_kernel(%arg0: i32, %arg1: memref<256x256xbf16, #tpu.memory_space<vmem>>, %arg2: memref<256x3xbf16, #tpu.memory_space<vmem>>, %arg3: memref<1x3xf32, #tpu.memory_space<vmem>>, %arg4: memref<256x3xbf16, #tpu.memory_space<vmem>>) attributes {dimension_semantics = [#tpu.dimension_semantics<parallel>], iteration_bounds = array<i64: 2>, scalar_prefetch = 0 : i64, scratch_operands = 0 : i64, tpu.core_type = #tpu.core_type<tc>, window_params = [{transform_indices = @transform_0, window_bounds = array<i64: 256, 256>}, {pipeline_mode = #tpu.pipeline_mode<synchronous>, transform_indices = @transform_1, window_bounds = array<i64: 256, 3>}, {pipeline_mode = #tpu.pipeline_mode<synchronous>, transform_indices = @transform_2, window_bounds = array<i64: 1, 3>}, {transform_indices = @transform_3, window_bounds = array<i64: 256, 3>}]} {
    %c0 = arith.constant 0 : index
    %c0_0 = arith.constant 0 : index
    %0 = vector.load %arg1[%c0, %c0_0] : memref<256x256xbf16, #tpu.memory_space<vmem>>, vector<256x256xbf16>
    %c0_1 = arith.constant 0 : index
    %c0_2 = arith.constant 0 : index
    %1 = vector.load %arg2[%c0_1, %c0_2] : memref<256x3xbf16, #tpu.memory_space<vmem>>, vector<256x3xbf16>
    %cst = arith.constant dense<0.000000e+00> : vector<256x3xf32>
    %2 = tpu.matmul %0, %1, %cst {dimension_numbers = #tpu.dot_dimension_numbers<[1], [0], [0], [1], [0, 0, 1, 1], [], []>} : vector<256x256xbf16>, vector<256x3xbf16>, vector<256x3xf32> -> vector<256x3xf32>
    %c0_3 = arith.constant 0 : index
    %c0_4 = arith.constant 0 : index
    %3 = vector.load %arg3[%c0_3, %c0_4] : memref<1x3xf32, #tpu.memory_space<vmem>>, vector<1x3xf32>
    %4 = vector.broadcast %3 : vector<1x3xf32> to vector<256x3xf32>
    %5 = arith.addf %2, %4 : vector<256x3xf32>
    %6 = math.tanh %5 : vector<256x3xf32>
    %7 = arith.truncf %6 : vector<256x3xf32> to vector<256x3xbf16>
    %c0_5 = arith.constant 0 : index
    %c0_6 = arith.constant 0 : index
    %8 = vector.load %arg4[%c0_5, %c0_6] : memref<256x3xbf16, #tpu.memory_space<vmem>>, vector<256x3xbf16>
    tpu.vector_store %arg4[%c0_5, %c0_6], %7 {strides = array<i32>} : memref<256x3xbf16, #tpu.memory_space<vmem>>, vector<256x3xbf16>,
    return
  }
  func.func @transform_0(%arg0: i32) -> (i32, i32) {
    %c0_i32 = arith.constant 0 : i32
    %c0_i32_0 = arith.constant 0 : i32
    return %arg0, %c0_i32 : i32, i32
  }
  func.func @transform_1(%arg0: i32) -> (i32, i32) {
    %c0_i32 = arith.constant 0 : i32
    %c0_i32_0 = arith.constant 0 : i32
    %c0_i32_1 = arith.constant 0 : i32
    return %c0_i32, %c0_i32_0 : i32, i32
  }
  func.func @transform_2(%arg0: i32) -> (i32, i32) {
    %c0_i32 = arith.constant 0 : i32
    %c0_i32_0 = arith.constant 0 : i32
    %c0_i32_1 = arith.constant 0 : i32
    return %c0_i32, %c0_i32_0 : i32, i32
  }
  func.func @transform_3(%arg0: i32) -> (i32, i32) {
    %c0_i32 = arith.constant 0 : i32
    %c0_i32_0 = arith.constant 0 : i32
    return %arg0, %c0_i32 : i32, i32
  }
}

</mosaic_0001>

<llo_original>
// kernel: run.12
$region0: #{run.12}
  #allocation0 [shape = 'u32[]', space=smem, size = 0x4, offset = 0x4, fixed_abs, tag = 'smem constant byte address 0x4 - core index']
  #allocation1 [shape = 'u32[144,128]{1,0:T(1,128)}', space=vmem, size = 0x12000, scoped, tag = 'internal scratch']
  %s0 = inlined_call_operand.vmem [shape: bf16[256,128], index: 0, kind: input, shape index: {}]
  %s1 = inlined_call_operand.vmem [shape: bf16[128,16], index: 1, kind: input, shape index: {}]
  %s2 = inlined_call_operand.vmem [shape: f32[1,16], index: 2, kind: input, shape index: {}]
  %s3 = inlined_call_operand.vmem [shape: bf16[256,16], index: 3, kind: output, shape index: {}]
  %s4 = sld [smem:[#allocation0]]
  $region45: #{run.12} parent=0
    _
  %s6 = ssub.s32 1, %s4
  %s7 = scalar_select 0, %s6, %s4
  loop: start=0, step=1, limit=4
  $region2: #{run.12} parent=0 // loop_pre_header
    _
  $region3: #{run.12} parent=0 // loop_header
    %s9 = sphi 0, %s13
    %p10 = scmp.ge.s32.totalorder %s9, 4
    %s19 = sphi 0, %s21
    %s22 = sphi 0, %s19
    %s23 = sphi 0, %s22
    %s39 = sphi 0, %s23
    %s43 = sphi 0, %s43
    %s45 = sphi 0, %s43
    %s46 = sphi 0, %s45
    %s60 = sphi 0, %s46
    %s64 = sphi 0, %s64
    %s66 = sphi 0, %s64
    %s67 = sphi 0, %s66
    %s81 = sphi 0, %s67
    %s87 = sphi 0, %s89
    %s90 = sphi 0, %s87
    %s91 = sphi 0, %s90
    %s107 = sphi 0, %s91
  $region4: #{run.12} parent=0 // loop_header_branch
    %12 = sbr.rel (%p10) target = $region8
  $region5: #{run.12} parent=0 // loop_body
    %s14 = ssub.s32 %s9, 1
    %s15 = ssub.s32 %s9, 2
    %s16 = sadd.s32 %s9, 1
    %s17 = ssub.s32 %s9, %s16
    %p18 = scmp.eq.s32.totalorder %s17, 0
    %s20 = sadd.s32 %s19, 1
    %s21 = scalar_select %p18, %s19, %s20
    %p24 = pneg %p18
    %p25 = scmp.eq.s32.totalorder %s9, 1
    %p26 = por %p24, %p25
    %p27 = scmp.ne.s32.totalorder %s19, %s22
    %p28 = scmp.eq.s32.totalorder %s9, 0
    %p29 = por %p27, %p28
    %p30 = scmp.ne.s32.totalorder %s19, %s22
    %p31 = scmp.eq.s32.totalorder %s14, 1
    %p32 = por %p30, %p31
    %p33 = scmp.ne.s32.totalorder %s22, %s23
    %p34 = scmp.eq.s32.totalorder %s14, 0
    %p35 = por %p33, %p34
    %p36 = scmp.ne.s32.totalorder %s22, %s23
    %p37 = scmp.eq.s32.totalorder %s15, 1
    %p38 = por %p36, %p37
    %p40 = scmp.ne.s32.totalorder %s23, %s39
    %p41 = scmp.eq.s32.totalorder %s15, 0
    %p42 = por %p40, %p41
    %s44 = sadd.s32 %s43, 1
    %p47 = scmp.eq.s32.totalorder %s9, 1
    %p48 = scmp.ne.s32.totalorder %s43, %s45
    %p49 = scmp.eq.s32.totalorder %s9, 0
    %p50 = por %p48, %p49
    %p51 = scmp.ne.s32.totalorder %s43, %s45
    %p52 = scmp.eq.s32.totalorder %s14, 1
    %p53 = por %p51, %p52
    %p54 = scmp.ne.s32.totalorder %s45, %s46
    %p55 = scmp.eq.s32.totalorder %s14, 0
    %p56 = por %p54, %p55
    %p57 = scmp.ne.s32.totalorder %s45, %s46
    %p58 = scmp.eq.s32.totalorder %s15, 1
    %p59 = por %p57, %p58
    %p61 = scmp.ne.s32.totalorder %s46, %s60
    %p62 = scmp.eq.s32.totalorder %s15, 0
    %p63 = por %p61, %p62
    %s65 = sadd.s32 %s64, 1
    %p68 = scmp.eq.s32.totalorder %s9, 1
    %p69 = scmp.ne.s32.totalorder %s64, %s66
    %p70 = scmp.eq.s32.totalorder %s9, 0
    %p71 = por %p69, %p70
    %p72 = scmp.ne.s32.totalorder %s64, %s66
    %p73 = scmp.eq.s32.totalorder %s14, 1
    %p74 = por %p72, %p73
    %p75 = scmp.ne.s32.totalorder %s66, %s67
    %p76 = scmp.eq.s32.totalorder %s14, 0
    %p77 = por %p75, %p76
    %p78 = scmp.ne.s32.totalorder %s66, %s67
    %p79 = scmp.eq.s32.totalorder %s15, 1
    %p80 = por %p78, %p79
    %p82 = scmp.ne.s32.totalorder %s67, %s81
    %p83 = scmp.eq.s32.totalorder %s15, 0
    %p84 = por %p82, %p83
    %s85 = ssub.s32 %s9, %s16
    %p86 = scmp.eq.s32.totalorder %s85, 0
    %s88 = sadd.s32 %s87, 1
    %s89 = scalar_select %p86, %s87, %s88
    %p92 = pneg %p86
    %p93 = scmp.eq.s32.totalorder %s9, 1
    %p94 = por %p92, %p93
    %p95 = scmp.ne.s32.totalorder %s87, %s90
    %p96 = scmp.eq.s32.totalorder %s9, 0
    %p97 = por %p95, %p96
    %p98 = scmp.ne.s32.totalorder %s87, %s90
    %p99 = scmp.eq.s32.totalorder %s14, 1
    %p100 = por %p98, %p99
    %p101 = scmp.ne.s32.totalorder %s90, %s91
    %p102 = scmp.eq.s32.totalorder %s14, 0
    %p103 = por %p101, %p102
    %p104 = scmp.ne.s32.totalorder %s90, %s91
    %p105 = scmp.eq.s32.totalorder %s15, 1
    %p106 = por %p104, %p105
    %p108 = scmp.ne.s32.totalorder %s91, %s107
    %p109 = scmp.eq.s32.totalorder %s15, 0
    %p110 = por %p108, %p109
    %p111 = scmp.le.s32.totalorder 1, %s9
    %p112 = scmp.lt.s32.totalorder %s9, 3
    %p113 = pnand %p111, %p112
    %p114 = pneg %p113
    // Predicated region
    $region9: #{run.12} parent=5 // pred_check
      _
    $region10: #{run.12} parent=5 // pred_check_branch
      %116 = sbr.rel (%p113) target = $region12
    $region11: #{run.12} parent=5 // pred_region
      %s117 = ssub.s32 %s9, 1
      // Predicated region
      $region13: #{run.12} parent=11 // pred_check
        %p118 = pneg %p56
      $region14: #{run.12} parent=11 // pred_check_branch
        %120 = sbr.rel (%p118) target = $region16
      $region15: #{run.12} parent=11 // pred_region
        _
      $region16: #{run.12} parent=11 // pred_fallthru
        _
      // Predicated region
      $region17: #{run.12} parent=11 // pred_check
        %p121 = pneg %p77
      $region18: #{run.12} parent=11 // pred_check_branch
        %123 = sbr.rel (%p121) target = $region20
      $region19: #{run.12} parent=11 // pred_region
        _
      $region20: #{run.12} parent=11 // pred_fallthru
        _
    $region12: #{run.12} parent=5 // pred_fallthru
      _
    %p124 = scmp.lt.s32.totalorder %s9, 2
    // Predicated region
    $region21: #{run.12} parent=5 // pred_check
      %p125 = pneg %p124
    $region22: #{run.12} parent=5 // pred_check_branch
      %127 = sbr.rel (%p125) target = $region24
    $region23: #{run.12} parent=5 // pred_region
      // Predicated region
      $region25: #{run.12} parent=23 // pred_check
        %p128 = pneg %p29
      $region26: #{run.12} parent=23 // pred_check_branch
        %130 = sbr.rel (%p128) target = $region28
      $region27: #{run.12} parent=23 // pred_region
        %s131 = smul.u32 16, %s9
        %p132 = scmp.lt.s32.totalorder %s131, 31
        %s133 = scalar_select %p132, %s131, 31
        %s134 = smul.addr %s133, 4
        %s135 = scalar_lea.vmem %s0, %s134
        %s136 = smul.u32 16, %s9
      $region28: #{run.12} parent=23 // pred_fallthru
        _
    $region24: #{run.12} parent=5 // pred_fallthru
      _
    %p137 = scmp.le.s32.totalorder 1, %s9
    %p138 = scmp.lt.s32.totalorder %s9, 3
    %p139 = pnand %p137, %p138
    %p140 = pneg %p139
    // Predicated region
    $region29: #{run.12} parent=5 // pred_check
      _
    $region30: #{run.12} parent=5 // pred_check_branch
      %142 = sbr.rel (%p139) target = $region32
    $region31: #{run.12} parent=5 // pred_region
      %s143 = ssub.s32 %s9, 1
      %s144 = smul.u32 16, %s14
      %p145 = scmp.lt.s32.totalorder %s144, 31
      %s146 = scalar_select %p145, %s144, 31
      %s147 = smul.addr %s146, 4
      %s148 = scalar_lea.vmem %s0, %s147
      %p149 = pneg %p35
      %p150 = pneg %p32
      %p151 = pneg %p56
      %p152 = pneg %p53
      %p153 = pneg %p77
      %p154 = pneg %p74
      %p155 = pneg %p103
      %p156 = pneg %p100
      %s157 = smul.u32 16, %s14
      %p158 = scmp.lt.s32.totalorder %s157, 31
      %s159 = scalar_select %p158, %s157, 31
      %s160 = smul.addr %s159, 4
      %s161 = scalar_lea.vmem %s3, %s160
      %s162 = smul.u32 16, %s14
      %p163 = scmp.lt.s32.totalorder %s162, 31
      %s164 = scalar_select %p163, %s162, 31
      %s165 = smul.addr %s164, 4
      %s166 = scalar_lea.vmem %s0, %s165
      %s167 = smul.u32 16, %s14
      %s168 = smul.u32 16, %s14
      %p169 = scmp.lt.s32.totalorder %s168, 31
      %s170 = scalar_select %p169, %s168, 31
      %s171 = smul.addr %s170, 4
      %s172 = scalar_lea.vmem %s3, %s171
      %s173 = smul.u32 16, %s14
      %v175 = vld [vmem:[%s166] sm:$0xf]
      %v176 = vld [vmem:[%s166 + $0x4] sm:$0xf]
      %v177 = vld [vmem:[%s166 + $0x8] sm:$0xf]
      %v178 = vld [vmem:[%s166 + $0xc] sm:$0xf]
      %v179 = vld [vmem:[%s166 + $0x10] sm:$0xf]
      %v180 = vld [vmem:[%s166 + $0x14] sm:$0xf]
      %v181 = vld [vmem:[%s166 + $0x18] sm:$0xf]
      %v182 = vld [vmem:[%s166 + $0x1c] sm:$0xf]
      %v183 = vld [vmem:[%s166 + $0x20] sm:$0xf]
      %v184 = vld [vmem:[%s166 + $0x24] sm:$0xf]
      %v185 = vld [vmem:[%s166 + $0x28] sm:$0xf]
      %v186 = vld [vmem:[%s166 + $0x2c] sm:$0xf]
      %v187 = vld [vmem:[%s166 + $0x30] sm:$0xf]
      %v188 = vld [vmem:[%s166 + $0x34] sm:$0xf]
      %v189 = vld [vmem:[%s166 + $0x38] sm:$0xf]
      %v190 = vld [vmem:[%s166 + $0x3c] sm:$0xf]
      %v191 = vld [vmem:[%s1] sm:$0xf]
      %v192 = vld [vmem:[%s1 + $0x4] sm:$0xf]
      %v193 = vld [vmem:[%s1 + $0x8] sm:$0xf]
      %v194 = vld [vmem:[%s1 + $0xc] sm:$0xf]
      %v195 = vld [vmem:[%s1 + $0x10] sm:$0xf]
      %v196 = vld [vmem:[%s1 + $0x14] sm:$0xf]
      %v197 = vld [vmem:[%s1 + $0x18] sm:$0xf]
      %v198 = vld [vmem:[%s1 + $0x1c] sm:$0xf]
      %v199 = vld [vmem:[%s1 + $0x20] sm:$0xf]
      %v200 = vld [vmem:[%s1 + $0x24] sm:$0xf]
      %v201 = vld [vmem:[%s1 + $0x28] sm:$0xf]
      %v202 = vld [vmem:[%s1 + $0x2c] sm:$0xf]
      %v203 = vld [vmem:[%s1 + $0x30] sm:$0xf]
      %v204 = vld [vmem:[%s1 + $0x34] sm:$0xf]
      %v205 = vld [vmem:[%s1 + $0x38] sm:$0xf]
      %v206 = vld [vmem:[%s1 + $0x3c] sm:$0xf]
      %v207 = vld [vmem:[%s2] sm:$0x1]
      %v209 = vlaneseq
      %v210 = vshrl.u32 %v209, 7
      %v211 = vsub.s32 0, %v210
      %v212 = vrot.slane %v207, %v211
      %v230 = vunpack.c.l.b16 %v175
      %v231 = vunpack.c.l.b16 %v176
      %v232 = vunpack.c.l.b16 %v177
      %v233 = vunpack.c.l.b16 %v178
      %v234 = vunpack.c.l.b16 %v179
      %v235 = vunpack.c.l.b16 %v180
      %v236 = vunpack.c.l.b16 %v181
      %v237 = vunpack.c.l.b16 %v182
      %v238 = vunpack.c.l.b16 %v183
      %v239 = vunpack.c.l.b16 %v184
      %v240 = vunpack.c.l.b16 %v185
      %v241 = vunpack.c.l.b16 %v186
      %v242 = vunpack.c.l.b16 %v187
      %v243 = vunpack.c.l.b16 %v188
      %v244 = vunpack.c.l.b16 %v189
      %v245 = vunpack.c.l.b16 %v190
      %v246 = vpack.c.b16 %v231, %v230
      %v247 = vpack.c.b16 %v233, %v232
      %v248 = vpack.c.b16 %v235, %v234
      %v249 = vpack.c.b16 %v237, %v236
      %v250 = vpack.c.b16 %v239, %v238
      %v251 = vpack.c.b16 %v241, %v240
      %v252 = vpack.c.b16 %v243, %v242
      %v253 = vpack.c.b16 %v245, %v244
      %v278 = vunpack.c.l.b16 %v191
      %v279 = vunpack.c.l.b16 %v192
      %v280 = vunpack.c.l.b16 %v193
      %v281 = vunpack.c.l.b16 %v194
      %v282 = vunpack.c.l.b16 %v195
      %v283 = vunpack.c.l.b16 %v196
      %v284 = vunpack.c.l.b16 %v197
      %v285 = vunpack.c.l.b16 %v198
      %v286 = vunpack.c.l.b16 %v199
      %v287 = vunpack.c.l.b16 %v200
      %v288 = vunpack.c.l.b16 %v201
      %v289 = vunpack.c.l.b16 %v202
      %v290 = vunpack.c.l.b16 %v203
      %v291 = vunpack.c.l.b16 %v204
      %v292 = vunpack.c.l.b16 %v205
      %v293 = vunpack.c.l.b16 %v206
      %v294 = vpack.c.b16 %v279, %v278
      %v295 = vpack.c.b16 %v281, %v280
      %v296 = vpack.c.b16 %v283, %v282
      %v297 = vpack.c.b16 %v285, %v284
      %v298 = vpack.c.b16 %v287, %v286
      %v299 = vpack.c.b16 %v289, %v288
      %v300 = vpack.c.b16 %v291, %v290
      %v301 = vpack.c.b16 %v293, %v292
      %310 = vmatprep.subr.bf16.mxu0 0
      %311 = vmatpush1.bf16.msra.mxu0 %v294
      %312 = vmatprep.subr.bf16.mxu0 0
      %313 = vmatpush1.bf16.msra.mxu0 %v295
      %314 = vmatprep.subr.bf16.mxu0 0
      %315 = vmatpush1.bf16.msra.mxu0 %v296
      %316 = vmatprep.subr.bf16.mxu0 0
      %317 = vmatpush1.bf16.msra.mxu0 %v297
      %318 = vmatprep.subr.bf16.mxu0 0
      %319 = vmatpush1.bf16.msra.mxu0 %v298
      %320 = vmatprep.subr.bf16.mxu0 0
      %321 = vmatpush1.bf16.msra.mxu0 %v299
      %322 = vmatprep.subr.bf16.mxu0 0
      %323 = vmatpush1.bf16.msra.mxu0 %v300
      %324 = vmatprep.subr.bf16.mxu0 0
      %325 = vmatpush1.bf16.msra.mxu0 %v301
      %326 = vmatprep.subr.bf16.mxu0 0
      %327 = vmatpush1.bf16.msra.mxu0 0
      %328 = vmatprep.subr.bf16.mxu0 0
      %329 = vmatpush1.bf16.msra.mxu0 0
      %330 = vmatprep.subr.bf16.mxu0 0
      %331 = vmatpush1.bf16.msra.mxu0 0
      %332 = vmatprep.subr.bf16.mxu0 0
      %333 = vmatpush1.bf16.msra.mxu0 0
      %334 = vmatprep.subr.bf16.mxu0 0
      %335 = vmatpush1.bf16.msra.mxu0 0
      %336 = vmatprep.subr.bf16.mxu0 0
      %337 = vmatpush1.bf16.msra.mxu0 0
      %338 = vmatprep.subr.bf16.mxu0 0
      %339 = vmatpush1.bf16.msra.mxu0 0
      %340 = vmatprep.subr.bf16.mxu0 0
      %341 = vmatpush1.bf16.msra.mxu0 0
      %342 = vmatprep.mubr.bf16.mxu0 0
      %343 = vmatmul.mubr.bf16.gmra.mrb[0].mxu0 %v246
      %v344 = vpop.f32.mrb[0].mxu0
      %v345 = vadd.f32 %v212, %v344
      %v346 = vpop.f32.mrb[0].mxu0
      %v347 = vpop.f32.mrb[0].mxu0
      %v348 = vadd.f32 %v212, %v347
      %v349 = vpop.f32.mrb[0].mxu0
      %350 = vmatprep.mubr.bf16.mxu0 0
      %351 = vmatmul.mubr.bf16.gmra.mrb[0].mxu0 %v247
      %v352 = vpop.f32.mrb[0].mxu0
      %v353 = vadd.f32 %v212, %v352
      %v354 = vpop.f32.mrb[0].mxu0
      %v355 = vpop.f32.mrb[0].mxu0
      %v356 = vadd.f32 %v212, %v355
      %v357 = vpop.f32.mrb[0].mxu0
      %358 = vmatprep.mubr.bf16.mxu0 0
      %359 = vmatmul.mubr.bf16.gmra.mrb[0].mxu0 %v248
      %v360 = vpop.f32.mrb[0].mxu0
      %v361 = vadd.f32 %v212, %v360
      %v362 = vpop.f32.mrb[0].mxu0
      %v363 = vpop.f32.mrb[0].mxu0
      %v364 = vadd.f32 %v212, %v363
      %v365 = vpop.f32.mrb[0].mxu0
      %366 = vmatprep.mubr.bf16.mxu0 0
      %367 = vmatmul.mubr.bf16.gmra.mrb[0].mxu0 %v249
      %v368 = vpop.f32.mrb[0].mxu0
      %v369 = vadd.f32 %v212, %v368
      %v370 = vpop.f32.mrb[0].mxu0
      %v371 = vpop.f32.mrb[0].mxu0
      %v372 = vadd.f32 %v212, %v371
      %v373 = vpop.f32.mrb[0].mxu0
      %374 = vmatprep.mubr.bf16.mxu0 0
      %375 = vmatmul.mubr.bf16.gmra.mrb[0].mxu0 %v250
      %v376 = vpop.f32.mrb[0].mxu0
      %v377 = vadd.f32 %v212, %v376
      %v378 = vpop.f32.mrb[0].mxu0
      %v379 = vpop.f32.mrb[0].mxu0
      %v380 = vadd.f32 %v212, %v379
      %v381 = vpop.f32.mrb[0].mxu0
      %382 = vmatprep.mubr.bf16.mxu0 0
      %383 = vmatmul.mubr.bf16.gmra.mrb[0].mxu0 %v251
      %v384 = vpop.f32.mrb[0].mxu0
      %v385 = vadd.f32 %v212, %v384
      %v386 = vpop.f32.mrb[0].mxu0
      %v387 = vpop.f32.mrb[0].mxu0
      %v388 = vadd.f32 %v212, %v387
      %v389 = vpop.f32.mrb[0].mxu0
      %390 = vmatprep.mubr.bf16.mxu0 0
      %391 = vmatmul.mubr.bf16.gmra.mrb[0].mxu0 %v252
      %v392 = vpop.f32.mrb[0].mxu0
      %v393 = vadd.f32 %v212, %v392
      %v394 = vpop.f32.mrb[0].mxu0
      %v395 = vpop.f32.mrb[0].mxu0
      %v396 = vadd.f32 %v212, %v395
      %v397 = vpop.f32.mrb[0].mxu0
      %398 = vmatprep.mubr.bf16.mxu0 0
      %399 = vmatmul.mubr.bf16.gmra.mrb[0].mxu0 %v253
      %v400 = vpop.f32.mrb[0].mxu0
      %v401 = vadd.f32 %v212, %v400
      %v402 = vpop.f32.mrb[0].mxu0
      %v403 = vpop.f32.mrb[0].mxu0
      %v404 = vadd.f32 %v212, %v403
      %v405 = vpop.f32.mrb[0].mxu0
      %406 = vdwg.mxu0
      %v407 = vmax.f32 %v345, 0.0
      %v408 = vmax.f32 %v348, 0.0
      %v409 = vmax.f32 %v353, 0.0
      %v410 = vmax.f32 %v356, 0.0
      %v411 = vmax.f32 %v361, 0.0
      %v412 = vmax.f32 %v364, 0.0
      %v413 = vmax.f32 %v369, 0.0
      %v414 = vmax.f32 %v372, 0.0
      %v415 = vmax.f32 %v377, 0.0
      %v416 = vmax.f32 %v380, 0.0
      %v417 = vmax.f32 %v385, 0.0
      %v418 = vmax.f32 %v388, 0.0
      %v419 = vmax.f32 %v393, 0.0
      %v420 = vmax.f32 %v396, 0.0
      %v421 = vmax.f32 %v401, 0.0
      %v422 = vmax.f32 %v404, 0.0
      %v423 = vpack.c.bf16 %v408, %v407
      %v424 = vpack.c.bf16 %v410, %v409
      %v425 = vpack.c.bf16 %v412, %v411
      %v426 = vpack.c.bf16 %v414, %v413
      %v427 = vpack.c.bf16 %v416, %v415
      %v428 = vpack.c.bf16 %v418, %v417
      %v429 = vpack.c.bf16 %v420, %v419
      %v430 = vpack.c.bf16 %v422, %v421
      %v439 = vunpack.c.l.b16 %v423
      %v440 = vunpack.c.h.b16 %v423
      %v441 = vunpack.c.l.b16 %v424
      %v442 = vunpack.c.h.b16 %v424
      %v443 = vunpack.c.l.b16 %v425
      %v444 = vunpack.c.h.b16 %v425
      %v445 = vunpack.c.l.b16 %v426
      %v446 = vunpack.c.h.b16 %v426
      %v447 = vunpack.c.l.b16 %v427
      %v448 = vunpack.c.h.b16 %v427
      %v449 = vunpack.c.l.b16 %v428
      %v450 = vunpack.c.h.b16 %v428
      %v451 = vunpack.c.l.b16 %v429
      %v452 = vunpack.c.h.b16 %v429
      %v453 = vunpack.c.l.b16 %v430
      %v454 = vunpack.c.h.b16 %v430
      %v455 = vpack.c.b16 %v439, %v439
      %v456 = vpack.c.b16 %v440, %v440
      %v457 = vpack.c.b16 %v441, %v441
      %v458 = vpack.c.b16 %v442, %v442
      %v459 = vpack.c.b16 %v443, %v443
      %v460 = vpack.c.b16 %v444, %v444
      %v461 = vpack.c.b16 %v445, %v445
      %v462 = vpack.c.b16 %v446, %v446
      %v463 = vpack.c.b16 %v447, %v447
      %v464 = vpack.c.b16 %v448, %v448
      %v465 = vpack.c.b16 %v449, %v449
      %v466 = vpack.c.b16 %v450, %v450
      %v467 = vpack.c.b16 %v451, %v451
      %v468 = vpack.c.b16 %v452, %v452
      %v469 = vpack.c.b16 %v453, %v453
      %v470 = vpack.c.b16 %v454, %v454
      %vm487 = vcmask 125952
      %488 = vst.msk [vmem:[%s172] sm:$0xf] %vm487, %v455
      %489 = vst.msk [vmem:[%s172 + $0x4] sm:$0xf] %vm487, %v456
      %490 = vst.msk [vmem:[%s172 + $0x8] sm:$0xf] %vm487, %v457
      %491 = vst.msk [vmem:[%s172 + $0xc] sm:$0xf] %vm487, %v458
      %492 = vst.msk [vmem:[%s172 + $0x10] sm:$0xf] %vm487, %v459
      %493 = vst.msk [vmem:[%s172 + $0x14] sm:$0xf] %vm487, %v460
      %494 = vst.msk [vmem:[%s172 + $0x18] sm:$0xf] %vm487, %v461
      %495 = vst.msk [vmem:[%s172 + $0x1c] sm:$0xf] %vm487, %v462
      %496 = vst.msk [vmem:[%s172 + $0x20] sm:$0xf] %vm487, %v463
      %497 = vst.msk [vmem:[%s172 + $0x24] sm:$0xf] %vm487, %v464
      %498 = vst.msk [vmem:[%s172 + $0x28] sm:$0xf] %vm487, %v465
      %499 = vst.msk [vmem:[%s172 + $0x2c] sm:$0xf] %vm487, %v466
      %500 = vst.msk [vmem:[%s172 + $0x30] sm:$0xf] %vm487, %v467
      %501 = vst.msk [vmem:[%s172 + $0x34] sm:$0xf] %vm487, %v468
      %502 = vst.msk [vmem:[%s172 + $0x38] sm:$0xf] %vm487, %v469
      %503 = vst.msk [vmem:[%s172 + $0x3c] sm:$0xf] %vm487, %v470
      %s504 = smul.u32 16, %s14
      %p505 = scmp.lt.s32.totalorder %s504, 31
      %s506 = scalar_select %p505, %s504, 31
      %s507 = smul.addr %s506, 4
      %s508 = scalar_lea.vmem %s3, %s507
      // Predicated region
      $region33: #{run.12} parent=31 // pred_check
        %p509 = pneg %p100
      $region34: #{run.12} parent=31 // pred_check_branch
        %511 = sbr.rel (%p509) target = $region36
      $region35: #{run.12} parent=31 // pred_region
        %s512 = smul.u32 16, %s14
      $region36: #{run.12} parent=31 // pred_fallthru
        _
    $region32: #{run.12} parent=5 // pred_fallthru
      _
    %p513 = scmp.le.s32.totalorder 2, %s9
    // Predicated region
    $region37: #{run.12} parent=5 // pred_check
      %p514 = pneg %p513
    $region38: #{run.12} parent=5 // pred_check_branch
      %516 = sbr.rel (%p514) target = $region40
    $region39: #{run.12} parent=5 // pred_region
      %s517 = ssub.s32 %s9, 2
      // Predicated region
      $region41: #{run.12} parent=39 // pred_check
        %p518 = pneg %p106
      $region42: #{run.12} parent=39 // pred_check_branch
        %520 = sbr.rel (%p518) target = $region44
      $region43: #{run.12} parent=39 // pred_region
        %s521 = smul.u32 16, %s15
        %p522 = scmp.lt.s32.totalorder %s521, 31
        %s523 = scalar_select %p522, %s521, 31
        %s524 = smul.addr %s523, 4
        %s525 = scalar_lea.vmem %s3, %s524
      $region44: #{run.12} parent=39 // pred_fallthru
        _
    $region40: #{run.12} parent=5 // pred_fallthru
      _
  $region6: #{run.12} parent=0 // loop_footer
    %s13 = sadd.s32 1, %s9
  $region7: #{run.12} parent=0 // loop_footer_branch
    %8 = sbr.rel target = $region3
  $region8: #{run.12} parent=0 // loop_exit
    _

// kernel: run.13
$region0: #{run.13}
  #allocation0 [shape = 'u32[]', space=smem, size = 0x4, offset = 0x4, fixed_abs, tag = 'smem constant byte address 0x4 - core index']
  #allocation1 [shape = 'u32[144,128]{1,0:T(1,128)}', space=vmem, size = 0x12000, scoped, tag = 'internal scratch']
  %s0 = inlined_call_operand.vmem [shape: bf16[64,256], index: 0, kind: input, shape index: {}]
  %s1 = inlined_call_operand.vmem [shape: bf16[256,32], index: 1, kind: input, shape index: {}]
  %s2 = inlined_call_operand.vmem [shape: f32[1,32], index: 2, kind: input, shape index: {}]
  %s3 = inlined_call_operand.vmem [shape: bf16[64,32], index: 3, kind: output, shape index: {}]
  %s4 = sld [smem:[#allocation0]]
  $region45: #{run.13} parent=0
    _
  %s6 = ssub.s32 1, %s4
  %s7 = scalar_select 0, %s6, %s4
  loop: start=0, step=1, limit=4
  $region2: #{run.13} parent=0 // loop_pre_header
    _
  $region3: #{run.13} parent=0 // loop_header
    %s9 = sphi 0, %s13
    %p10 = scmp.ge.s32.totalorder %s9, 4
    %s19 = sphi 0, %s21
    %s22 = sphi 0, %s19
    %s23 = sphi 0, %s22
    %s39 = sphi 0, %s23
    %s43 = sphi 0, %s43
    %s45 = sphi 0, %s43
    %s46 = sphi 0, %s45
    %s60 = sphi 0, %s46
    %s64 = sphi 0, %s64
    %s66 = sphi 0, %s64
    %s67 = sphi 0, %s66
    %s81 = sphi 0, %s67
    %s87 = sphi 0, %s89
    %s90 = sphi 0, %s87
    %s91 = sphi 0, %s90
    %s107 = sphi 0, %s91
  $region4: #{run.13} parent=0 // loop_header_branch
    %12 = sbr.rel (%p10) target = $region8
  $region5: #{run.13} parent=0 // loop_body
    %s14 = ssub.s32 %s9, 1
    %s15 = ssub.s32 %s9, 2
    %s16 = sadd.s32 %s9, 1
    %s17 = ssub.s32 %s9, %s16
    %p18 = scmp.eq.s32.totalorder %s17, 0
    %s20 = sadd.s32 %s19, 1
    %s21 = scalar_select %p18, %s19, %s20
    %p24 = pneg %p18
    %p25 = scmp.eq.s32.totalorder %s9, 1
    %p26 = por %p24, %p25
    %p27 = scmp.ne.s32.totalorder %s19, %s22
    %p28 = scmp.eq.s32.totalorder %s9, 0
    %p29 = por %p27, %p28
    %p30 = scmp.ne.s32.totalorder %s19, %s22
    %p31 = scmp.eq.s32.totalorder %s14, 1
    %p32 = por %p30, %p31
    %p33 = scmp.ne.s32.totalorder %s22, %s23
    %p34 = scmp.eq.s32.totalorder %s14, 0
    %p35 = por %p33, %p34
    %p36 = scmp.ne.s32.totalorder %s22, %s23
    %p37 = scmp.eq.s32.totalorder %s15, 1
    %p38 = por %p36, %p37
    %p40 = scmp.ne.s32.totalorder %s23, %s39
    %p41 = scmp.eq.s32.totalorder %s15, 0
    %p42 = por %p40, %p41
    %s44 = sadd.s32 %s43, 1
    %p47 = scmp.eq.s32.totalorder %s9, 1
    %p48 = scmp.ne.s32.totalorder %s43, %s45
    %p49 = scmp.eq.s32.totalorder %s9, 0
    %p50 = por %p48, %p49
    %p51 = scmp.ne.s32.totalorder %s43, %s45
    %p52 = scmp.eq.s32.totalorder %s14, 1
    %p53 = por %p51, %p52
    %p54 = scmp.ne.s32.totalorder %s45, %s46
    %p55 = scmp.eq.s32.totalorder %s14, 0
    %p56 = por %p54, %p55
    %p57 = scmp.ne.s32.totalorder %s45, %s46
    %p58 = scmp.eq.s32.totalorder %s15, 1
    %p59 = por %p57, %p58
    %p61 = scmp.ne.s32.totalorder %s46, %s60
    %p62 = scmp.eq.s32.totalorder %s15, 0
    %p63 = por %p61, %p62
    %s65 = sadd.s32 %s64, 1
    %p68 = scmp.eq.s32.totalorder %s9, 1
    %p69 = scmp.ne.s32.totalorder %s64, %s66
    %p70 = scmp.eq.s32.totalorder %s9, 0
    %p71 = por %p69, %p70
    %p72 = scmp.ne.s32.totalorder %s64, %s66
    %p73 = scmp.eq.s32.totalorder %s14, 1
    %p74 = por %p72, %p73
    %p75 = scmp.ne.s32.totalorder %s66, %s67
    %p76 = scmp.eq.s32.totalorder %s14, 0
    %p77 = por %p75, %p76
    %p78 = scmp.ne.s32.totalorder %s66, %s67
    %p79 = scmp.eq.s32.totalorder %s15, 1
    %p80 = por %p78, %p79
    %p82 = scmp.ne.s32.totalorder %s67, %s81
    %p83 = scmp.eq.s32.totalorder %s15, 0
    %p84 = por %p82, %p83
    %s85 = ssub.s32 %s9, %s16
    %p86 = scmp.eq.s32.totalorder %s85, 0
    %s88 = sadd.s32 %s87, 1
    %s89 = scalar_select %p86, %s87, %s88
    %p92 = pneg %p86
    %p93 = scmp.eq.s32.totalorder %s9, 1
    %p94 = por %p92, %p93
    %p95 = scmp.ne.s32.totalorder %s87, %s90
    %p96 = scmp.eq.s32.totalorder %s9, 0
    %p97 = por %p95, %p96
    %p98 = scmp.ne.s32.totalorder %s87, %s90
    %p99 = scmp.eq.s32.totalorder %s14, 1
    %p100 = por %p98, %p99
    %p101 = scmp.ne.s32.totalorder %s90, %s91
    %p102 = scmp.eq.s32.totalorder %s14, 0
    %p103 = por %p101, %p102
    %p104 = scmp.ne.s32.totalorder %s90, %s91
    %p105 = scmp.eq.s32.totalorder %s15, 1
    %p106 = por %p104, %p105
    %p108 = scmp.ne.s32.totalorder %s91, %s107
    %p109 = scmp.eq.s32.totalorder %s15, 0
    %p110 = por %p108, %p109
    %p111 = scmp.le.s32.totalorder 1, %s9
    %p112 = scmp.lt.s32.totalorder %s9, 3
    %p113 = pnand %p111, %p112
    %p114 = pneg %p113
    // Predicated region
    $region9: #{run.13} parent=5 // pred_check
      _
    $region10: #{run.13} parent=5 // pred_check_branch
      %116 = sbr.rel (%p113) target = $region12
    $region11: #{run.13} parent=5 // pred_region
      %s117 = ssub.s32 %s9, 1
      // Predicated region
      $region13: #{run.13} parent=11 // pred_check
        %p118 = pneg %p56
      $region14: #{run.13} parent=11 // pred_check_branch
        %120 = sbr.rel (%p118) target = $region16
      $region15: #{run.13} parent=11 // pred_region
        _
      $region16: #{run.13} parent=11 // pred_fallthru
        _
      // Predicated region
      $region17: #{run.13} parent=11 // pred_check
        %p121 = pneg %p77
      $region18: #{run.13} parent=11 // pred_check_branch
        %123 = sbr.rel (%p121) target = $region20
      $region19: #{run.13} parent=11 // pred_region
        _
      $region20: #{run.13} parent=11 // pred_fallthru
        _
    $region12: #{run.13} parent=5 // pred_fallthru
      _
    %p124 = scmp.lt.s32.totalorder %s9, 2
    // Predicated region
    $region21: #{run.13} parent=5 // pred_check
      %p125 = pneg %p124
    $region22: #{run.13} parent=5 // pred_check_branch
      %127 = sbr.rel (%p125) target = $region24
    $region23: #{run.13} parent=5 // pred_region
      // Predicated region
      $region25: #{run.13} parent=23 // pred_check
        %p128 = pneg %p29
      $region26: #{run.13} parent=23 // pred_check_branch
        %130 = sbr.rel (%p128) target = $region28
      $region27: #{run.13} parent=23 // pred_region
        %s131 = smul.u32 4, %s9
        %p132 = scmp.lt.s32.totalorder %s131, 7
        %s133 = scalar_select %p132, %s131, 7
        %s134 = smul.addr %s133, 2
        %s135 = smul.addr %s134, 4
        %s136 = scalar_lea.vmem %s0, %s135
        %s137 = smul.u32 4, %s9
      $region28: #{run.13} parent=23 // pred_fallthru
        _
    $region24: #{run.13} parent=5 // pred_fallthru
      _
    %p138 = scmp.le.s32.totalorder 1, %s9
    %p139 = scmp.lt.s32.totalorder %s9, 3
    %p140 = pnand %p138, %p139
    %p141 = pneg %p140
    // Predicated region
    $region29: #{run.13} parent=5 // pred_check
      _
    $region30: #{run.13} parent=5 // pred_check_branch
      %143 = sbr.rel (%p140) target = $region32
    $region31: #{run.13} parent=5 // pred_region
      %s144 = ssub.s32 %s9, 1
      %s145 = smul.u32 4, %s14
      %p146 = scmp.lt.s32.totalorder %s145, 7
      %s147 = scalar_select %p146, %s145, 7
      %s148 = smul.addr %s147, 2
      %s149 = smul.addr %s148, 4
      %s150 = scalar_lea.vmem %s0, %s149
      %p151 = pneg %p35
      %p152 = pneg %p32
      %p153 = pneg %p56
      %p154 = pneg %p53
      %p155 = pneg %p77
      %p156 = pneg %p74
      %p157 = pneg %p103
      %p158 = pneg %p100
      %s159 = smul.u32 4, %s14
      %p160 = scmp.lt.s32.totalorder %s159, 7
      %s161 = scalar_select %p160, %s159, 7
      %s162 = smul.addr %s161, 4
      %s163 = scalar_lea.vmem %s3, %s162
      %s164 = smul.u32 4, %s14
      %p165 = scmp.lt.s32.totalorder %s164, 7
      %s166 = scalar_select %p165, %s164, 7
      %s167 = smul.addr %s166, 2
      %s168 = smul.addr %s167, 4
      %s169 = scalar_lea.vmem %s0, %s168
      %s170 = smul.u32 4, %s14
      %s171 = smul.u32 4, %s14
      %p172 = scmp.lt.s32.totalorder %s171, 7
      %s173 = scalar_select %p172, %s171, 7
      %s174 = smul.addr %s173, 4
      %s175 = scalar_lea.vmem %s3, %s174
      %s176 = smul.u32 4, %s14
      %v178 = vld [vmem:[%s169] sm:$0xff]
      %v179 = vld [vmem:[%s169 + $0x8] sm:$0xff]
      %v180 = vld [vmem:[%s169 + $0x10] sm:$0xff]
      %v181 = vld [vmem:[%s169 + $0x18] sm:$0xff]
      %v182 = vld [vmem:[%s1] sm:$0xf]
      %v183 = vld [vmem:[%s1 + $0x4] sm:$0xf]
      %v184 = vld [vmem:[%s1 + $0x8] sm:$0xf]
      %v185 = vld [vmem:[%s1 + $0xc] sm:$0xf]
      %v186 = vld [vmem:[%s1 + $0x10] sm:$0xf]
      %v187 = vld [vmem:[%s1 + $0x14] sm:$0xf]
      %v188 = vld [vmem:[%s1 + $0x18] sm:$0xf]
      %v189 = vld [vmem:[%s1 + $0x1c] sm:$0xf]
      %v190 = vld [vmem:[%s1 + $0x20] sm:$0xf]
      %v191 = vld [vmem:[%s1 + $0x24] sm:$0xf]
      %v192 = vld [vmem:[%s1 + $0x28] sm:$0xf]
      %v193 = vld [vmem:[%s1 + $0x2c] sm:$0xf]
      %v194 = vld [vmem:[%s1 + $0x30] sm:$0xf]
      %v195 = vld [vmem:[%s1 + $0x34] sm:$0xf]
      %v196 = vld [vmem:[%s1 + $0x38] sm:$0xf]
      %v197 = vld [vmem:[%s1 + $0x3c] sm:$0xf]
      %v198 = vld [vmem:[%s1 + $0x40] sm:$0xf]
      %v199 = vld [vmem:[%s1 + $0x44] sm:$0xf]
      %v200 = vld [vmem:[%s1 + $0x48] sm:$0xf]
      %v201 = vld [vmem:[%s1 + $0x4c] sm:$0xf]
      %v202 = vld [vmem:[%s1 + $0x50] sm:$0xf]
      %v203 = vld [vmem:[%s1 + $0x54] sm:$0xf]
      %v204 = vld [vmem:[%s1 + $0x58] sm:$0xf]
      %v205 = vld [vmem:[%s1 + $0x5c] sm:$0xf]
      %v206 = vld [vmem:[%s1 + $0x60] sm:$0xf]
      %v207 = vld [vmem:[%s1 + $0x64] sm:$0xf]
      %v208 = vld [vmem:[%s1 + $0x68] sm:$0xf]
      %v209 = vld [vmem:[%s1 + $0x6c] sm:$0xf]
      %v210 = vld [vmem:[%s1 + $0x70] sm:$0xf]
      %v211 = vld [vmem:[%s1 + $0x74] sm:$0xf]
      %v212 = vld [vmem:[%s1 + $0x78] sm:$0xf]
      %v213 = vld [vmem:[%s1 + $0x7c] sm:$0xf]
      %v214 = vld [vmem:[%s2] sm:$0x1]
      %v216 = vlaneseq
      %v217 = vshrl.u32 %v216, 7
      %v218 = vsub.s32 0, %v217
      %v219 = vrot.slane %v214, %v218
      %v225 = vunpack.c.l.b16 %v178
      %v226 = vunpack.c.h.b16 %v178
      %v227 = vunpack.c.l.b16 %v179
      %v228 = vunpack.c.h.b16 %v179
      %v229 = vunpack.c.l.b16 %v180
      %v230 = vunpack.c.h.b16 %v180
      %v231 = vunpack.c.l.b16 %v181
      %v232 = vunpack.c.h.b16 %v181
      %v233 = vpack.c.b16 %v227, %v225
      %v234 = vpack.c.b16 %v228, %v226
      %v235 = vpack.c.b16 %v231, %v229
      %v236 = vpack.c.b16 %v232, %v230
      %v273 = vunpack.c.l.b16 %v182
      %v274 = vunpack.c.l.b16 %v183
      %v275 = vunpack.c.l.b16 %v184
      %v276 = vunpack.c.l.b16 %v185
      %v277 = vunpack.c.l.b16 %v186
      %v278 = vunpack.c.l.b16 %v187
      %v279 = vunpack.c.l.b16 %v188
      %v280 = vunpack.c.l.b16 %v189
      %v281 = vunpack.c.l.b16 %v190
      %v282 = vunpack.c.l.b16 %v191
      %v283 = vunpack.c.l.b16 %v192
      %v284 = vunpack.c.l.b16 %v193
      %v285 = vunpack.c.l.b16 %v194
      %v286 = vunpack.c.l.b16 %v195
      %v287 = vunpack.c.l.b16 %v196
      %v288 = vunpack.c.l.b16 %v197
      %v289 = vunpack.c.l.b16 %v198
      %v290 = vunpack.c.l.b16 %v199
      %v291 = vunpack.c.l.b16 %v200
      %v292 = vunpack.c.l.b16 %v201
      %v293 = vunpack.c.l.b16 %v202
      %v294 = vunpack.c.l.b16 %v203
      %v295 = vunpack.c.l.b16 %v204
      %v296 = vunpack.c.l.b16 %v205
      %v297 = vunpack.c.l.b16 %v206
      %v298 = vunpack.c.l.b16 %v207
      %v299 = vunpack.c.l.b16 %v208
      %v300 = vunpack.c.l.b16 %v209
      %v301 = vunpack.c.l.b16 %v210
      %v302 = vunpack.c.l.b16 %v211
      %v303 = vunpack.c.l.b16 %v212
      %v304 = vunpack.c.l.b16 %v213
      %v305 = vpack.c.b16 %v274, %v273
      %v306 = vpack.c.b16 %v276, %v275
      %v307 = vpack.c.b16 %v278, %v277
      %v308 = vpack.c.b16 %v280, %v279
      %v309 = vpack.c.b16 %v282, %v281
      %v310 = vpack.c.b16 %v284, %v283
      %v311 = vpack.c.b16 %v286, %v285
      %v312 = vpack.c.b16 %v288, %v287
      %v313 = vpack.c.b16 %v290, %v289
      %v314 = vpack.c.b16 %v292, %v291
      %v315 = vpack.c.b16 %v294, %v293
      %v316 = vpack.c.b16 %v296, %v295
      %v317 = vpack.c.b16 %v298, %v297
      %v318 = vpack.c.b16 %v300, %v299
      %v319 = vpack.c.b16 %v302, %v301
      %v320 = vpack.c.b16 %v304, %v303
      %337 = vmatprep.subr.bf16.mxu0 0
      %338 = vmatpush1.bf16.msra.mxu0 %v305
      %339 = vmatprep.subr.bf16.mxu0 0
      %340 = vmatpush1.bf16.msra.mxu0 %v306
      %341 = vmatprep.subr.bf16.mxu0 0
      %342 = vmatpush1.bf16.msra.mxu0 %v307
      %343 = vmatprep.subr.bf16.mxu0 0
      %344 = vmatpush1.bf16.msra.mxu0 %v308
      %345 = vmatprep.subr.bf16.mxu0 0
      %346 = vmatpush1.bf16.msra.mxu0 %v309
      %347 = vmatprep.subr.bf16.mxu0 0
      %348 = vmatpush1.bf16.msra.mxu0 %v310
      %349 = vmatprep.subr.bf16.mxu0 0
      %350 = vmatpush1.bf16.msra.mxu0 %v311
      %351 = vmatprep.subr.bf16.mxu0 0
      %352 = vmatpush1.bf16.msra.mxu0 %v312
      %353 = vmatprep.subr.bf16.mxu0 0
      %354 = vmatpush1.bf16.msra.mxu0 %v313
      %355 = vmatprep.subr.bf16.mxu0 0
      %356 = vmatpush1.bf16.msra.mxu0 %v314
      %357 = vmatprep.subr.bf16.mxu0 0
      %358 = vmatpush1.bf16.msra.mxu0 %v315
      %359 = vmatprep.subr.bf16.mxu0 0
      %360 = vmatpush1.bf16.msra.mxu0 %v316
      %361 = vmatprep.subr.bf16.mxu0 0
      %362 = vmatpush1.bf16.msra.mxu0 %v317
      %363 = vmatprep.subr.bf16.mxu0 0
      %364 = vmatpush1.bf16.msra.mxu0 %v318
      %365 = vmatprep.subr.bf16.mxu0 0
      %366 = vmatpush1.bf16.msra.mxu0 %v319
      %367 = vmatprep.subr.bf16.mxu0 0
      %368 = vmatpush1.bf16.msra.mxu0 %v320
      %369 = vmatprep.mubr.bf16.mxu0 %v234
      %370 = vmatmul.mubr.bf16.gmra.mrb[0].mxu0 %v233
      %v371 = vpop.f32.mrb[0].mxu0
      %v372 = vadd.f32 %v219, %v371
      %v373 = vpop.f32.mrb[0].mxu0
      %v374 = vpop.f32.mrb[0].mxu0
      %v375 = vadd.f32 %v219, %v374
      %v376 = vpop.f32.mrb[0].mxu0
      %377 = vmatprep.mubr.bf16.mxu0 %v236
      %378 = vmatmul.mubr.bf16.gmra.mrb[0].mxu0 %v235
      %v379 = vpop.f32.mrb[0].mxu0
      %v380 = vadd.f32 %v219, %v379
      %v381 = vpop.f32.mrb[0].mxu0
      %v382 = vpop.f32.mrb[0].mxu0
      %v383 = vadd.f32 %v219, %v382
      %v384 = vpop.f32.mrb[0].mxu0
      %385 = vdwg.mxu0
      %v386 = vmax.f32 %v372, 0.0
      %v387 = vmax.f32 %v375, 0.0
      %v388 = vmax.f32 %v380, 0.0
      %v389 = vmax.f32 %v383, 0.0
      %v390 = vpack.c.bf16 %v387, %v386
      %v391 = vpack.c.bf16 %v389, %v388
      %v394 = vunpack.c.l.b16 %v390
      %v395 = vunpack.c.h.b16 %v390
      %v396 = vunpack.c.l.b16 %v391
      %v397 = vunpack.c.h.b16 %v391
      %v398 = vpack.c.b16 %v394, %v394
      %v399 = vpack.c.b16 %v395, %v395
      %v400 = vpack.c.b16 %v396, %v396
      %v401 = vpack.c.b16 %v397, %v397
      %vm406 = vcmask 257024
      %407 = vst.msk [vmem:[%s175] sm:$0xf] %vm406, %v398
      %408 = vst.msk [vmem:[%s175 + $0x4] sm:$0xf] %vm406, %v399
      %409 = vst.msk [vmem:[%s175 + $0x8] sm:$0xf] %vm406, %v400
      %410 = vst.msk [vmem:[%s175 + $0xc] sm:$0xf] %vm406, %v401
      %s411 = smul.u32 4, %s14
      %p412 = scmp.lt.s32.totalorder %s411, 7
      %s413 = scalar_select %p412, %s411, 7
      %s414 = smul.addr %s413, 4
      %s415 = scalar_lea.vmem %s3, %s414
      // Predicated region
      $region33: #{run.13} parent=31 // pred_check
        %p416 = pneg %p100
      $region34: #{run.13} parent=31 // pred_check_branch
        %418 = sbr.rel (%p416) target = $region36
      $region35: #{run.13} parent=31 // pred_region
        %s419 = smul.u32 4, %s14
      $region36: #{run.13} parent=31 // pred_fallthru
        _
    $region32: #{run.13} parent=5 // pred_fallthru
      _
    %p420 = scmp.le.s32.totalorder 2, %s9
    // Predicated region
    $region37: #{run.13} parent=5 // pred_check
      %p421 = pneg %p420
    $region38: #{run.13} parent=5 // pred_check_branch
      %423 = sbr.rel (%p421) target = $region40
    $region39: #{run.13} parent=5 // pred_region
      %s424 = ssub.s32 %s9, 2
      // Predicated region
      $region41: #{run.13} parent=39 // pred_check
        %p425 = pneg %p106
      $region42: #{run.13} parent=39 // pred_check_branch
        %427 = sbr.rel (%p425) target = $region44
      $region43: #{run.13} parent=39 // pred_region
        %s428 = smul.u32 4, %s15
        %p429 = scmp.lt.s32.totalorder %s428, 7
        %s430 = scalar_select %p429, %s428, 7
        %s431 = smul.addr %s430, 4
        %s432 = scalar_lea.vmem %s3, %s431
      $region44: #{run.13} parent=39 // pred_fallthru
        _
    $region40: #{run.13} parent=5 // pred_fallthru
      _
  $region6: #{run.13} parent=0 // loop_footer
    %s13 = sadd.s32 1, %s9
  $region7: #{run.13} parent=0 // loop_footer_branch
    %8 = sbr.rel target = $region3
  $region8: #{run.13} parent=0 // loop_exit
    _

// kernel: run.10
$region0: #{run.10}
  #allocation0 [shape = 'u32[]', space=smem, size = 0x4, offset = 0x4, fixed_abs, tag = 'smem constant byte address 0x4 - core index']
  #allocation1 [shape = 'u32[144,128]{1,0:T(1,128)}', space=vmem, size = 0x12000, scoped, tag = 'internal scratch']
  %s0 = inlined_call_operand.vmem [shape: bf16[128,128], index: 0, kind: input, shape index: {}]
  %s1 = inlined_call_operand.vmem [shape: bf16[128,16], index: 1, kind: input, shape index: {}]
  %s2 = inlined_call_operand.vmem [shape: f32[1,16], index: 2, kind: input, shape index: {}]
  %s3 = inlined_call_operand.vmem [shape: bf16[128,16], index: 3, kind: output, shape index: {}]
  %s4 = sld [smem:[#allocation0]]
  $region45: #{run.10} parent=0
    _
  %s6 = ssub.s32 1, %s4
  %s7 = scalar_select 0, %s6, %s4
  loop: start=0, step=1, limit=4
  $region2: #{run.10} parent=0 // loop_pre_header
    _
  $region3: #{run.10} parent=0 // loop_header
    %s9 = sphi 0, %s13
    %p10 = scmp.ge.s32.totalorder %s9, 4
    %s19 = sphi 0, %s21
    %s22 = sphi 0, %s19
    %s23 = sphi 0, %s22
    %s39 = sphi 0, %s23
    %s43 = sphi 0, %s43
    %s45 = sphi 0, %s43
    %s46 = sphi 0, %s45
    %s60 = sphi 0, %s46
    %s64 = sphi 0, %s64
    %s66 = sphi 0, %s64
    %s67 = sphi 0, %s66
    %s81 = sphi 0, %s67
    %s87 = sphi 0, %s89
    %s90 = sphi 0, %s87
    %s91 = sphi 0, %s90
    %s107 = sphi 0, %s91
  $region4: #{run.10} parent=0 // loop_header_branch
    %12 = sbr.rel (%p10) target = $region8
  $region5: #{run.10} parent=0 // loop_body
    %s14 = ssub.s32 %s9, 1
    %s15 = ssub.s32 %s9, 2
    %s16 = sadd.s32 %s9, 1
    %s17 = ssub.s32 %s9, %s16
    %p18 = scmp.eq.s32.totalorder %s17, 0
    %s20 = sadd.s32 %s19, 1
    %s21 = scalar_select %p18, %s19, %s20
    %p24 = pneg %p18
    %p25 = scmp.eq.s32.totalorder %s9, 1
    %p26 = por %p24, %p25
    %p27 = scmp.ne.s32.totalorder %s19, %s22
    %p28 = scmp.eq.s32.totalorder %s9, 0
    %p29 = por %p27, %p28
    %p30 = scmp.ne.s32.totalorder %s19, %s22
    %p31 = scmp.eq.s32.totalorder %s14, 1
    %p32 = por %p30, %p31
    %p33 = scmp.ne.s32.totalorder %s22, %s23
    %p34 = scmp.eq.s32.totalorder %s14, 0
    %p35 = por %p33, %p34
    %p36 = scmp.ne.s32.totalorder %s22, %s23
    %p37 = scmp.eq.s32.totalorder %s15, 1
    %p38 = por %p36, %p37
    %p40 = scmp.ne.s32.totalorder %s23, %s39
    %p41 = scmp.eq.s32.totalorder %s15, 0
    %p42 = por %p40, %p41
    %s44 = sadd.s32 %s43, 1
    %p47 = scmp.eq.s32.totalorder %s9, 1
    %p48 = scmp.ne.s32.totalorder %s43, %s45
    %p49 = scmp.eq.s32.totalorder %s9, 0
    %p50 = por %p48, %p49
    %p51 = scmp.ne.s32.totalorder %s43, %s45
    %p52 = scmp.eq.s32.totalorder %s14, 1
    %p53 = por %p51, %p52
    %p54 = scmp.ne.s32.totalorder %s45, %s46
    %p55 = scmp.eq.s32.totalorder %s14, 0
    %p56 = por %p54, %p55
    %p57 = scmp.ne.s32.totalorder %s45, %s46
    %p58 = scmp.eq.s32.totalorder %s15, 1
    %p59 = por %p57, %p58
    %p61 = scmp.ne.s32.totalorder %s46, %s60
    %p62 = scmp.eq.s32.totalorder %s15, 0
    %p63 = por %p61, %p62
    %s65 = sadd.s32 %s64, 1
    %p68 = scmp.eq.s32.totalorder %s9, 1
    %p69 = scmp.ne.s32.totalorder %s64, %s66
    %p70 = scmp.eq.s32.totalorder %s9, 0
    %p71 = por %p69, %p70
    %p72 = scmp.ne.s32.totalorder %s64, %s66
    %p73 = scmp.eq.s32.totalorder %s14, 1
    %p74 = por %p72, %p73
    %p75 = scmp.ne.s32.totalorder %s66, %s67
    %p76 = scmp.eq.s32.totalorder %s14, 0
    %p77 = por %p75, %p76
    %p78 = scmp.ne.s32.totalorder %s66, %s67
    %p79 = scmp.eq.s32.totalorder %s15, 1
    %p80 = por %p78, %p79
    %p82 = scmp.ne.s32.totalorder %s67, %s81
    %p83 = scmp.eq.s32.totalorder %s15, 0
    %p84 = por %p82, %p83
    %s85 = ssub.s32 %s9, %s16
    %p86 = scmp.eq.s32.totalorder %s85, 0
    %s88 = sadd.s32 %s87, 1
    %s89 = scalar_select %p86, %s87, %s88
    %p92 = pneg %p86
    %p93 = scmp.eq.s32.totalorder %s9, 1
    %p94 = por %p92, %p93
    %p95 = scmp.ne.s32.totalorder %s87, %s90
    %p96 = scmp.eq.s32.totalorder %s9, 0
    %p97 = por %p95, %p96
    %p98 = scmp.ne.s32.totalorder %s87, %s90
    %p99 = scmp.eq.s32.totalorder %s14, 1
    %p100 = por %p98, %p99
    %p101 = scmp.ne.s32.totalorder %s90, %s91
    %p102 = scmp.eq.s32.totalorder %s14, 0
    %p103 = por %p101, %p102
    %p104 = scmp.ne.s32.totalorder %s90, %s91
    %p105 = scmp.eq.s32.totalorder %s15, 1
    %p106 = por %p104, %p105
    %p108 = scmp.ne.s32.totalorder %s91, %s107
    %p109 = scmp.eq.s32.totalorder %s15, 0
    %p110 = por %p108, %p109
    %p111 = scmp.le.s32.totalorder 1, %s9
    %p112 = scmp.lt.s32.totalorder %s9, 3
    %p113 = pnand %p111, %p112
    %p114 = pneg %p113
    // Predicated region
    $region9: #{run.10} parent=5 // pred_check
      _
    $region10: #{run.10} parent=5 // pred_check_branch
      %116 = sbr.rel (%p113) target = $region12
    $region11: #{run.10} parent=5 // pred_region
      %s117 = ssub.s32 %s9, 1
      // Predicated region
      $region13: #{run.10} parent=11 // pred_check
        %p118 = pneg %p56
      $region14: #{run.10} parent=11 // pred_check_branch
        %120 = sbr.rel (%p118) target = $region16
      $region15: #{run.10} parent=11 // pred_region
        _
      $region16: #{run.10} parent=11 // pred_fallthru
        _
      // Predicated region
      $region17: #{run.10} parent=11 // pred_check
        %p121 = pneg %p77
      $region18: #{run.10} parent=11 // pred_check_branch
        %123 = sbr.rel (%p121) target = $region20
      $region19: #{run.10} parent=11 // pred_region
        _
      $region20: #{run.10} parent=11 // pred_fallthru
        _
    $region12: #{run.10} parent=5 // pred_fallthru
      _
    %p124 = scmp.lt.s32.totalorder %s9, 2
    // Predicated region
    $region21: #{run.10} parent=5 // pred_check
      %p125 = pneg %p124
    $region22: #{run.10} parent=5 // pred_check_branch
      %127 = sbr.rel (%p125) target = $region24
    $region23: #{run.10} parent=5 // pred_region
      // Predicated region
      $region25: #{run.10} parent=23 // pred_check
        %p128 = pneg %p29
      $region26: #{run.10} parent=23 // pred_check_branch
        %130 = sbr.rel (%p128) target = $region28
      $region27: #{run.10} parent=23 // pred_region
        %s131 = smul.u32 8, %s9
        %p132 = scmp.lt.s32.totalorder %s131, 15
        %s133 = scalar_select %p132, %s131, 15
        %s134 = smul.addr %s133, 4
        %s135 = scalar_lea.vmem %s0, %s134
        %s136 = smul.u32 8, %s9
      $region28: #{run.10} parent=23 // pred_fallthru
        _
    $region24: #{run.10} parent=5 // pred_fallthru
      _
    %p137 = scmp.le.s32.totalorder 1, %s9
    %p138 = scmp.lt.s32.totalorder %s9, 3
    %p139 = pnand %p137, %p138
    %p140 = pneg %p139
    // Predicated region
    $region29: #{run.10} parent=5 // pred_check
      _
    $region30: #{run.10} parent=5 // pred_check_branch
      %142 = sbr.rel (%p139) target = $region32
    $region31: #{run.10} parent=5 // pred_region
      %s143 = ssub.s32 %s9, 1
      %s144 = smul.u32 8, %s14
      %p145 = scmp.lt.s32.totalorder %s144, 15
      %s146 = scalar_select %p145, %s144, 15
      %s147 = smul.addr %s146, 4
      %s148 = scalar_lea.vmem %s0, %s147
      %p149 = pneg %p35
      %p150 = pneg %p32
      %p151 = pneg %p56
      %p152 = pneg %p53
      %p153 = pneg %p77
      %p154 = pneg %p74
      %p155 = pneg %p103
      %p156 = pneg %p100
      %s157 = smul.u32 8, %s14
      %p158 = scmp.lt.s32.totalorder %s157, 15
      %s159 = scalar_select %p158, %s157, 15
      %s160 = smul.addr %s159, 4
      %s161 = scalar_lea.vmem %s3, %s160
      %s162 = smul.u32 8, %s14
      %p163 = scmp.lt.s32.totalorder %s162, 15
      %s164 = scalar_select %p163, %s162, 15
      %s165 = smul.addr %s164, 4
      %s166 = scalar_lea.vmem %s0, %s165
      %s167 = smul.u32 8, %s14
      %s168 = smul.u32 8, %s14
      %p169 = scmp.lt.s32.totalorder %s168, 15
      %s170 = scalar_select %p169, %s168, 15
      %s171 = smul.addr %s170, 4
      %s172 = scalar_lea.vmem %s3, %s171
      %s173 = smul.u32 8, %s14
      %v175 = vld [vmem:[%s166] sm:$0xf]
      %v176 = vld [vmem:[%s166 + $0x4] sm:$0xf]
      %v177 = vld [vmem:[%s166 + $0x8] sm:$0xf]
      %v178 = vld [vmem:[%s166 + $0xc] sm:$0xf]
      %v179 = vld [vmem:[%s166 + $0x10] sm:$0xf]
      %v180 = vld [vmem:[%s166 + $0x14] sm:$0xf]
      %v181 = vld [vmem:[%s166 + $0x18] sm:$0xf]
      %v182 = vld [vmem:[%s166 + $0x1c] sm:$0xf]
      %v183 = vld [vmem:[%s1] sm:$0xf]
      %v184 = vld [vmem:[%s1 + $0x4] sm:$0xf]
      %v185 = vld [vmem:[%s1 + $0x8] sm:$0xf]
      %v186 = vld [vmem:[%s1 + $0xc] sm:$0xf]
      %v187 = vld [vmem:[%s1 + $0x10] sm:$0xf]
      %v188 = vld [vmem:[%s1 + $0x14] sm:$0xf]
      %v189 = vld [vmem:[%s1 + $0x18] sm:$0xf]
      %v190 = vld [vmem:[%s1 + $0x1c] sm:$0xf]
      %v191 = vld [vmem:[%s1 + $0x20] sm:$0xf]
      %v192 = vld [vmem:[%s1 + $0x24] sm:$0xf]
      %v193 = vld [vmem:[%s1 + $0x28] sm:$0xf]
      %v194 = vld [vmem:[%s1 + $0x2c] sm:$0xf]
      %v195 = vld [vmem:[%s1 + $0x30] sm:$0xf]
      %v196 = vld [vmem:[%s1 + $0x34] sm:$0xf]
      %v197 = vld [vmem:[%s1 + $0x38] sm:$0xf]
      %v198 = vld [vmem:[%s1 + $0x3c] sm:$0xf]
      %v199 = vld [vmem:[%s2] sm:$0x1]
      %v201 = vlaneseq
      %v202 = vshrl.u32 %v201, 7
      %v203 = vsub.s32 0, %v202
      %v204 = vrot.slane %v199, %v203
      %v214 = vunpack.c.l.b16 %v175
      %v215 = vunpack.c.l.b16 %v176
      %v216 = vunpack.c.l.b16 %v177
      %v217 = vunpack.c.l.b16 %v178
      %v218 = vunpack.c.l.b16 %v179
      %v219 = vunpack.c.l.b16 %v180
      %v220 = vunpack.c.l.b16 %v181
      %v221 = vunpack.c.l.b16 %v182
      %v222 = vpack.c.b16 %v215, %v214
      %v223 = vpack.c.b16 %v217, %v216
      %v224 = vpack.c.b16 %v219, %v218
      %v225 = vpack.c.b16 %v221, %v220
      %v246 = vunpack.c.l.b16 %v183
      %v247 = vunpack.c.l.b16 %v184
      %v248 = vunpack.c.l.b16 %v185
      %v249 = vunpack.c.l.b16 %v186
      %v250 = vunpack.c.l.b16 %v187
      %v251 = vunpack.c.l.b16 %v188
      %v252 = vunpack.c.l.b16 %v189
      %v253 = vunpack.c.l.b16 %v190
      %v254 = vunpack.c.l.b16 %v191
      %v255 = vunpack.c.l.b16 %v192
      %v256 = vunpack.c.l.b16 %v193
      %v257 = vunpack.c.l.b16 %v194
      %v258 = vunpack.c.l.b16 %v195
      %v259 = vunpack.c.l.b16 %v196
      %v260 = vunpack.c.l.b16 %v197
      %v261 = vunpack.c.l.b16 %v198
      %v262 = vpack.c.b16 %v247, %v246
      %v263 = vpack.c.b16 %v249, %v248
      %v264 = vpack.c.b16 %v251, %v250
      %v265 = vpack.c.b16 %v253, %v252
      %v266 = vpack.c.b16 %v255, %v254
      %v267 = vpack.c.b16 %v257, %v256
      %v268 = vpack.c.b16 %v259, %v258
      %v269 = vpack.c.b16 %v261, %v260
      %278 = vmatprep.subr.bf16.mxu0 0
      %279 = vmatpush1.bf16.msra.mxu0 %v262
      %280 = vmatprep.subr.bf16.mxu0 0
      %281 = vmatpush1.bf16.msra.mxu0 %v263
      %282 = vmatprep.subr.bf16.mxu0 0
      %283 = vmatpush1.bf16.msra.mxu0 %v264
      %284 = vmatprep.subr.bf16.mxu0 0
      %285 = vmatpush1.bf16.msra.mxu0 %v265
      %286 = vmatprep.subr.bf16.mxu0 0
      %287 = vmatpush1.bf16.msra.mxu0 %v266
      %288 = vmatprep.subr.bf16.mxu0 0
      %289 = vmatpush1.bf16.msra.mxu0 %v267
      %290 = vmatprep.subr.bf16.mxu0 0
      %291 = vmatpush1.bf16.msra.mxu0 %v268
      %292 = vmatprep.subr.bf16.mxu0 0
      %293 = vmatpush1.bf16.msra.mxu0 %v269
      %294 = vmatprep.subr.bf16.mxu0 0
      %295 = vmatpush1.bf16.msra.mxu0 0
      %296 = vmatprep.subr.bf16.mxu0 0
      %297 = vmatpush1.bf16.msra.mxu0 0
      %298 = vmatprep.subr.bf16.mxu0 0
      %299 = vmatpush1.bf16.msra.mxu0 0
      %300 = vmatprep.subr.bf16.mxu0 0
      %301 = vmatpush1.bf16.msra.mxu0 0
      %302 = vmatprep.subr.bf16.mxu0 0
      %303 = vmatpush1.bf16.msra.mxu0 0
      %304 = vmatprep.subr.bf16.mxu0 0
      %305 = vmatpush1.bf16.msra.mxu0 0
      %306 = vmatprep.subr.bf16.mxu0 0
      %307 = vmatpush1.bf16.msra.mxu0 0
      %308 = vmatprep.subr.bf16.mxu0 0
      %309 = vmatpush1.bf16.msra.mxu0 0
      %310 = vmatprep.mubr.bf16.mxu0 0
      %311 = vmatmul.mubr.bf16.gmra.mrb[0].mxu0 %v222
      %v312 = vpop.f32.mrb[0].mxu0
      %v313 = vadd.f32 %v204, %v312
      %v314 = vpop.f32.mrb[0].mxu0
      %v315 = vpop.f32.mrb[0].mxu0
      %v316 = vadd.f32 %v204, %v315
      %v317 = vpop.f32.mrb[0].mxu0
      %318 = vmatprep.mubr.bf16.mxu0 0
      %319 = vmatmul.mubr.bf16.gmra.mrb[0].mxu0 %v223
      %v320 = vpop.f32.mrb[0].mxu0
      %v321 = vadd.f32 %v204, %v320
      %v322 = vpop.f32.mrb[0].mxu0
      %v323 = vpop.f32.mrb[0].mxu0
      %v324 = vadd.f32 %v204, %v323
      %v325 = vpop.f32.mrb[0].mxu0
      %326 = vmatprep.mubr.bf16.mxu0 0
      %327 = vmatmul.mubr.bf16.gmra.mrb[0].mxu0 %v224
      %v328 = vpop.f32.mrb[0].mxu0
      %v329 = vadd.f32 %v204, %v328
      %v330 = vpop.f32.mrb[0].mxu0
      %v331 = vpop.f32.mrb[0].mxu0
      %v332 = vadd.f32 %v204, %v331
      %v333 = vpop.f32.mrb[0].mxu0
      %334 = vmatprep.mubr.bf16.mxu0 0
      %335 = vmatmul.mubr.bf16.gmra.mrb[0].mxu0 %v225
      %v336 = vpop.f32.mrb[0].mxu0
      %v337 = vadd.f32 %v204, %v336
      %v338 = vpop.f32.mrb[0].mxu0
      %v339 = vpop.f32.mrb[0].mxu0
      %v340 = vadd.f32 %v204, %v339
      %v341 = vpop.f32.mrb[0].mxu0
      %342 = vdwg.mxu0
      %v343 = vmax.f32 %v313, 0.0
      %v344 = vmax.f32 %v316, 0.0
      %v345 = vmax.f32 %v321, 0.0
      %v346 = vmax.f32 %v324, 0.0
      %v347 = vmax.f32 %v329, 0.0
      %v348 = vmax.f32 %v332, 0.0
      %v349 = vmax.f32 %v337, 0.0
      %v350 = vmax.f32 %v340, 0.0
      %v351 = vpack.c.bf16 %v344, %v343
      %v352 = vpack.c.bf16 %v346, %v345
      %v353 = vpack.c.bf16 %v348, %v347
      %v354 = vpack.c.bf16 %v350, %v349
      %v359 = vunpack.c.l.b16 %v351
      %v360 = vunpack.c.h.b16 %v351
      %v361 = vunpack.c.l.b16 %v352
      %v362 = vunpack.c.h.b16 %v352
      %v363 = vunpack.c.l.b16 %v353
      %v364 = vunpack.c.h.b16 %v353
      %v365 = vunpack.c.l.b16 %v354
      %v366 = vunpack.c.h.b16 %v354
      %v367 = vpack.c.b16 %v359, %v359
      %v368 = vpack.c.b16 %v360, %v360
      %v369 = vpack.c.b16 %v361, %v361
      %v370 = vpack.c.b16 %v362, %v362
      %v371 = vpack.c.b16 %v363, %v363
      %v372 = vpack.c.b16 %v364, %v364
      %v373 = vpack.c.b16 %v365, %v365
      %v374 = vpack.c.b16 %v366, %v366
      %vm383 = vcmask 125952
      %384 = vst.msk [vmem:[%s172] sm:$0xf] %vm383, %v367
      %385 = vst.msk [vmem:[%s172 + $0x4] sm:$0xf] %vm383, %v368
      %386 = vst.msk [vmem:[%s172 + $0x8] sm:$0xf] %vm383, %v369
      %387 = vst.msk [vmem:[%s172 + $0xc] sm:$0xf] %vm383, %v370
      %388 = vst.msk [vmem:[%s172 + $0x10] sm:$0xf] %vm383, %v371
      %389 = vst.msk [vmem:[%s172 + $0x14] sm:$0xf] %vm383, %v372
      %390 = vst.msk [vmem:[%s172 + $0x18] sm:$0xf] %vm383, %v373
      %391 = vst.msk [vmem:[%s172 + $0x1c] sm:$0xf] %vm383, %v374
      %s392 = smul.u32 8, %s14
      %p393 = scmp.lt.s32.totalorder %s392, 15
      %s394 = scalar_select %p393, %s392, 15
      %s395 = smul.addr %s394, 4
      %s396 = scalar_lea.vmem %s3, %s395
      // Predicated region
      $region33: #{run.10} parent=31 // pred_check
        %p397 = pneg %p100
      $region34: #{run.10} parent=31 // pred_check_branch
        %399 = sbr.rel (%p397) target = $region36
      $region35: #{run.10} parent=31 // pred_region
        %s400 = smul.u32 8, %s14
      $region36: #{run.10} parent=31 // pred_fallthru
        _
    $region32: #{run.10} parent=5 // pred_fallthru
      _
    %p401 = scmp.le.s32.totalorder 2, %s9
    // Predicated region
    $region37: #{run.10} parent=5 // pred_check
      %p402 = pneg %p401
    $region38: #{run.10} parent=5 // pred_check_branch
      %404 = sbr.rel (%p402) target = $region40
    $region39: #{run.10} parent=5 // pred_region
      %s405 = ssub.s32 %s9, 2
      // Predicated region
      $region41: #{run.10} parent=39 // pred_check
        %p406 = pneg %p106
      $region42: #{run.10} parent=39 // pred_check_branch
        %408 = sbr.rel (%p406) target = $region44
      $region43: #{run.10} parent=39 // pred_region
        %s409 = smul.u32 8, %s15
        %p410 = scmp.lt.s32.totalorder %s409, 15
        %s411 = scalar_select %p410, %s409, 15
        %s412 = smul.addr %s411, 4
        %s413 = scalar_lea.vmem %s3, %s412
      $region44: #{run.10} parent=39 // pred_fallthru
        _
    $region40: #{run.10} parent=5 // pred_fallthru
      _
  $region6: #{run.10} parent=0 // loop_footer
    %s13 = sadd.s32 1, %s9
  $region7: #{run.10} parent=0 // loop_footer_branch
    %8 = sbr.rel target = $region3
  $region8: #{run.10} parent=0 // loop_exit
    _

// kernel: squeeze.7
$region0: #{squeeze.7}
  %s0 = inlined_call_operand.vmem [shape: f32[2,128], index: 0, kind: input, shape index: {}]
  %s1 = inlined_call_operand.vmem [shape: f32[2,4,32], index: 1, kind: output, shape index: {}]
  $region1: #{squeeze.7} parent=0
    #allocation0 [shape = 'u8[8192]{0}', space=vmem, size = 0x2000, scoped, tag = 'scoped mem for output reshape']
    #allocation1 [shape = 'u8[4096]{0}', space=vmem, size = 0x1000, scoped, tag = 'scoped mem for input reshape']
    %s3 = sshllo.u32 0, 2
    %v4 = vld [vmem:[%s0] sm:%s3]
    %5 = vst [vmem:[#allocation1] sm:%s3] %v4
    %v6 = vld [vmem:[#allocation1] sm:$0x3]
    %vm7 = vcmask 261120
    %8 = vst.msk [vmem:[#allocation0] ss:$8 sm:$0x3] %vm7, %v6
    %v9 = vld [vmem:[#allocation1] sm:$0x3]
    %10 = vrot.lane.b32.xlu0 %v9, 96
    %v11 = vpop.permute.xlu0 %10
    %vm12 = vcmask 261120
    %s13 = scalar_lea.vmem [#allocation0], 1
    %14 = vst.msk [vmem:[%s13] ss:$8 sm:$0x3] %vm12, %v11
    %v15 = vld [vmem:[#allocation1] sm:$0x3]
    %16 = vrot.lane.b32.xlu0 %v15, 64
    %v17 = vpop.permute.xlu0 %16
    %vm18 = vcmask 261120
    %s19 = scalar_lea.vmem [#allocation0], 2
    %20 = vst.msk [vmem:[%s19] ss:$8 sm:$0x3] %vm18, %v17
    %v21 = vld [vmem:[#allocation1] sm:$0x3]
    %22 = vrot.lane.b32.xlu0 %v21, 32
    %v23 = vpop.permute.xlu0 %22
    %vm24 = vcmask 261120
    %s25 = scalar_lea.vmem [#allocation0], 3
    %26 = vst.msk [vmem:[%s25] ss:$8 sm:$0x3] %vm24, %v23
    %s28 = sshllo.u32 0, 4
    %v30 = vld [vmem:[#allocation0] sm:%s28]
    %s31 = sshllo.u32 0, 4
    %32 = vst [vmem:[%s1] sm:%s31] %v30
    %s33 = scalar_lea.vmem [#allocation0], 8
    %v34 = vld [vmem:[%s33] sm:%s28]
    %s35 = sshllo.u32 0, 4
    %s36 = scalar_lea.vmem %s1, 4
    %37 = vst [vmem:[%s36] sm:%s35] %v34

// kernel: run.11
$region0: #{run.11}
  #allocation0 [shape = 'u32[]', space=smem, size = 0x4, offset = 0x4, fixed_abs, tag = 'smem constant byte address 0x4 - core index']
  #allocation1 [shape = 'u32[144,128]{1,0:T(1,128)}', space=vmem, size = 0x12000, scoped, tag = 'internal scratch']
  %s0 = inlined_call_operand.vmem [shape: bf16[32,256], index: 0, kind: input, shape index: {}]
  %s1 = inlined_call_operand.vmem [shape: bf16[256,32], index: 1, kind: input, shape index: {}]
  %s2 = inlined_call_operand.vmem [shape: f32[1,32], index: 2, kind: input, shape index: {}]
  %s3 = inlined_call_operand.vmem [shape: bf16[32,32], index: 3, kind: output, shape index: {}]
  %s4 = sld [smem:[#allocation0]]
  $region45: #{run.11} parent=0
    _
  %s6 = ssub.s32 1, %s4
  %s7 = scalar_select 0, %s6, %s4
  loop: start=0, step=1, limit=4
  $region2: #{run.11} parent=0 // loop_pre_header
    _
  $region3: #{run.11} parent=0 // loop_header
    %s9 = sphi 0, %s13
    %p10 = scmp.ge.s32.totalorder %s9, 4
    %s19 = sphi 0, %s21
    %s22 = sphi 0, %s19
    %s23 = sphi 0, %s22
    %s39 = sphi 0, %s23
    %s43 = sphi 0, %s43
    %s45 = sphi 0, %s43
    %s46 = sphi 0, %s45
    %s60 = sphi 0, %s46
    %s64 = sphi 0, %s64
    %s66 = sphi 0, %s64
    %s67 = sphi 0, %s66
    %s81 = sphi 0, %s67
    %s87 = sphi 0, %s89
    %s90 = sphi 0, %s87
    %s91 = sphi 0, %s90
    %s107 = sphi 0, %s91
  $region4: #{run.11} parent=0 // loop_header_branch
    %12 = sbr.rel (%p10) target = $region8
  $region5: #{run.11} parent=0 // loop_body
    %s14 = ssub.s32 %s9, 1
    %s15 = ssub.s32 %s9, 2
    %s16 = sadd.s32 %s9, 1
    %s17 = ssub.s32 %s9, %s16
    %p18 = scmp.eq.s32.totalorder %s17, 0
    %s20 = sadd.s32 %s19, 1
    %s21 = scalar_select %p18, %s19, %s20
    %p24 = pneg %p18
    %p25 = scmp.eq.s32.totalorder %s9, 1
    %p26 = por %p24, %p25
    %p27 = scmp.ne.s32.totalorder %s19, %s22
    %p28 = scmp.eq.s32.totalorder %s9, 0
    %p29 = por %p27, %p28
    %p30 = scmp.ne.s32.totalorder %s19, %s22
    %p31 = scmp.eq.s32.totalorder %s14, 1
    %p32 = por %p30, %p31
    %p33 = scmp.ne.s32.totalorder %s22, %s23
    %p34 = scmp.eq.s32.totalorder %s14, 0
    %p35 = por %p33, %p34
    %p36 = scmp.ne.s32.totalorder %s22, %s23
    %p37 = scmp.eq.s32.totalorder %s15, 1
    %p38 = por %p36, %p37
    %p40 = scmp.ne.s32.totalorder %s23, %s39
    %p41 = scmp.eq.s32.totalorder %s15, 0
    %p42 = por %p40, %p41
    %s44 = sadd.s32 %s43, 1
    %p47 = scmp.eq.s32.totalorder %s9, 1
    %p48 = scmp.ne.s32.totalorder %s43, %s45
    %p49 = scmp.eq.s32.totalorder %s9, 0
    %p50 = por %p48, %p49
    %p51 = scmp.ne.s32.totalorder %s43, %s45
    %p52 = scmp.eq.s32.totalorder %s14, 1
    %p53 = por %p51, %p52
    %p54 = scmp.ne.s32.totalorder %s45, %s46
    %p55 = scmp.eq.s32.totalorder %s14, 0
    %p56 = por %p54, %p55
    %p57 = scmp.ne.s32.totalorder %s45, %s46
    %p58 = scmp.eq.s32.totalorder %s15, 1
    %p59 = por %p57, %p58
    %p61 = scmp.ne.s32.totalorder %s46, %s60
    %p62 = scmp.eq.s32.totalorder %s15, 0
    %p63 = por %p61, %p62
    %s65 = sadd.s32 %s64, 1
    %p68 = scmp.eq.s32.totalorder %s9, 1
    %p69 = scmp.ne.s32.totalorder %s64, %s66
    %p70 = scmp.eq.s32.totalorder %s9, 0
    %p71 = por %p69, %p70
    %p72 = scmp.ne.s32.totalorder %s64, %s66
    %p73 = scmp.eq.s32.totalorder %s14, 1
    %p74 = por %p72, %p73
    %p75 = scmp.ne.s32.totalorder %s66, %s67
    %p76 = scmp.eq.s32.totalorder %s14, 0
    %p77 = por %p75, %p76
    %p78 = scmp.ne.s32.totalorder %s66, %s67
    %p79 = scmp.eq.s32.totalorder %s15, 1
    %p80 = por %p78, %p79
    %p82 = scmp.ne.s32.totalorder %s67, %s81
    %p83 = scmp.eq.s32.totalorder %s15, 0
    %p84 = por %p82, %p83
    %s85 = ssub.s32 %s9, %s16
    %p86 = scmp.eq.s32.totalorder %s85, 0
    %s88 = sadd.s32 %s87, 1
    %s89 = scalar_select %p86, %s87, %s88
    %p92 = pneg %p86
    %p93 = scmp.eq.s32.totalorder %s9, 1
    %p94 = por %p92, %p93
    %p95 = scmp.ne.s32.totalorder %s87, %s90
    %p96 = scmp.eq.s32.totalorder %s9, 0
    %p97 = por %p95, %p96
    %p98 = scmp.ne.s32.totalorder %s87, %s90
    %p99 = scmp.eq.s32.totalorder %s14, 1
    %p100 = por %p98, %p99
    %p101 = scmp.ne.s32.totalorder %s90, %s91
    %p102 = scmp.eq.s32.totalorder %s14, 0
    %p103 = por %p101, %p102
    %p104 = scmp.ne.s32.totalorder %s90, %s91
    %p105 = scmp.eq.s32.totalorder %s15, 1
    %p106 = por %p104, %p105
    %p108 = scmp.ne.s32.totalorder %s91, %s107
    %p109 = scmp.eq.s32.totalorder %s15, 0
    %p110 = por %p108, %p109
    %p111 = scmp.le.s32.totalorder 1, %s9
    %p112 = scmp.lt.s32.totalorder %s9, 3
    %p113 = pnand %p111, %p112
    %p114 = pneg %p113
    // Predicated region
    $region9: #{run.11} parent=5 // pred_check
      _
    $region10: #{run.11} parent=5 // pred_check_branch
      %116 = sbr.rel (%p113) target = $region12
    $region11: #{run.11} parent=5 // pred_region
      %s117 = ssub.s32 %s9, 1
      // Predicated region
      $region13: #{run.11} parent=11 // pred_check
        %p118 = pneg %p56
      $region14: #{run.11} parent=11 // pred_check_branch
        %120 = sbr.rel (%p118) target = $region16
      $region15: #{run.11} parent=11 // pred_region
        _
      $region16: #{run.11} parent=11 // pred_fallthru
        _
      // Predicated region
      $region17: #{run.11} parent=11 // pred_check
        %p121 = pneg %p77
      $region18: #{run.11} parent=11 // pred_check_branch
        %123 = sbr.rel (%p121) target = $region20
      $region19: #{run.11} parent=11 // pred_region
        _
      $region20: #{run.11} parent=11 // pred_fallthru
        _
    $region12: #{run.11} parent=5 // pred_fallthru
      _
    %p124 = scmp.lt.s32.totalorder %s9, 2
    // Predicated region
    $region21: #{run.11} parent=5 // pred_check
      %p125 = pneg %p124
    $region22: #{run.11} parent=5 // pred_check_branch
      %127 = sbr.rel (%p125) target = $region24
    $region23: #{run.11} parent=5 // pred_region
      // Predicated region
      $region25: #{run.11} parent=23 // pred_check
        %p128 = pneg %p29
      $region26: #{run.11} parent=23 // pred_check_branch
        %130 = sbr.rel (%p128) target = $region28
      $region27: #{run.11} parent=23 // pred_region
        %s131 = smul.u32 2, %s9
        %p132 = scmp.lt.s32.totalorder %s131, 3
        %s133 = scalar_select %p132, %s131, 3
        %s134 = smul.addr %s133, 2
        %s135 = smul.addr %s134, 4
        %s136 = scalar_lea.vmem %s0, %s135
        %s137 = smul.u32 2, %s9
      $region28: #{run.11} parent=23 // pred_fallthru
        _
    $region24: #{run.11} parent=5 // pred_fallthru
      _
    %p138 = scmp.le.s32.totalorder 1, %s9
    %p139 = scmp.lt.s32.totalorder %s9, 3
    %p140 = pnand %p138, %p139
    %p141 = pneg %p140
    // Predicated region
    $region29: #{run.11} parent=5 // pred_check
      _
    $region30: #{run.11} parent=5 // pred_check_branch
      %143 = sbr.rel (%p140) target = $region32
    $region31: #{run.11} parent=5 // pred_region
      %s144 = ssub.s32 %s9, 1
      %s145 = smul.u32 2, %s14
      %p146 = scmp.lt.s32.totalorder %s145, 3
      %s147 = scalar_select %p146, %s145, 3
      %s148 = smul.addr %s147, 2
      %s149 = smul.addr %s148, 4
      %s150 = scalar_lea.vmem %s0, %s149
      %p151 = pneg %p35
      %p152 = pneg %p32
      %p153 = pneg %p56
      %p154 = pneg %p53
      %p155 = pneg %p77
      %p156 = pneg %p74
      %p157 = pneg %p103
      %p158 = pneg %p100
      %s159 = smul.u32 2, %s14
      %p160 = scmp.lt.s32.totalorder %s159, 3
      %s161 = scalar_select %p160, %s159, 3
      %s162 = smul.addr %s161, 4
      %s163 = scalar_lea.vmem %s3, %s162
      %s164 = smul.u32 2, %s14
      %p165 = scmp.lt.s32.totalorder %s164, 3
      %s166 = scalar_select %p165, %s164, 3
      %s167 = smul.addr %s166, 2
      %s168 = smul.addr %s167, 4
      %s169 = scalar_lea.vmem %s0, %s168
      %s170 = smul.u32 2, %s14
      %s171 = smul.u32 2, %s14
      %p172 = scmp.lt.s32.totalorder %s171, 3
      %s173 = scalar_select %p172, %s171, 3
      %s174 = smul.addr %s173, 4
      %s175 = scalar_lea.vmem %s3, %s174
      %s176 = smul.u32 2, %s14
      %v178 = vld [vmem:[%s169] sm:$0xff]
      %v179 = vld [vmem:[%s169 + $0x8] sm:$0xff]
      %v180 = vld [vmem:[%s1] sm:$0xf]
      %v181 = vld [vmem:[%s1 + $0x4] sm:$0xf]
      %v182 = vld [vmem:[%s1 + $0x8] sm:$0xf]
      %v183 = vld [vmem:[%s1 + $0xc] sm:$0xf]
      %v184 = vld [vmem:[%s1 + $0x10] sm:$0xf]
      %v185 = vld [vmem:[%s1 + $0x14] sm:$0xf]
      %v186 = vld [vmem:[%s1 + $0x18] sm:$0xf]
      %v187 = vld [vmem:[%s1 + $0x1c] sm:$0xf]
      %v188 = vld [vmem:[%s1 + $0x20] sm:$0xf]
      %v189 = vld [vmem:[%s1 + $0x24] sm:$0xf]
      %v190 = vld [vmem:[%s1 + $0x28] sm:$0xf]
      %v191 = vld [vmem:[%s1 + $0x2c] sm:$0xf]
      %v192 = vld [vmem:[%s1 + $0x30] sm:$0xf]
      %v193 = vld [vmem:[%s1 + $0x34] sm:$0xf]
      %v194 = vld [vmem:[%s1 + $0x38] sm:$0xf]
      %v195 = vld [vmem:[%s1 + $0x3c] sm:$0xf]
      %v196 = vld [vmem:[%s1 + $0x40] sm:$0xf]
      %v197 = vld [vmem:[%s1 + $0x44] sm:$0xf]
      %v198 = vld [vmem:[%s1 + $0x48] sm:$0xf]
      %v199 = vld [vmem:[%s1 + $0x4c] sm:$0xf]
      %v200 = vld [vmem:[%s1 + $0x50] sm:$0xf]
      %v201 = vld [vmem:[%s1 + $0x54] sm:$0xf]
      %v202 = vld [vmem:[%s1 + $0x58] sm:$0xf]
      %v203 = vld [vmem:[%s1 + $0x5c] sm:$0xf]
      %v204 = vld [vmem:[%s1 + $0x60] sm:$0xf]
      %v205 = vld [vmem:[%s1 + $0x64] sm:$0xf]
      %v206 = vld [vmem:[%s1 + $0x68] sm:$0xf]
      %v207 = vld [vmem:[%s1 + $0x6c] sm:$0xf]
      %v208 = vld [vmem:[%s1 + $0x70] sm:$0xf]
      %v209 = vld [vmem:[%s1 + $0x74] sm:$0xf]
      %v210 = vld [vmem:[%s1 + $0x78] sm:$0xf]
      %v211 = vld [vmem:[%s1 + $0x7c] sm:$0xf]
      %v212 = vld [vmem:[%s2] sm:$0x1]
      %v214 = vlaneseq
      %v215 = vshrl.u32 %v214, 7
      %v216 = vsub.s32 0, %v215
      %v217 = vrot.slane %v212, %v216
      %v221 = vunpack.c.l.b16 %v178
      %v222 = vunpack.c.h.b16 %v178
      %v223 = vunpack.c.l.b16 %v179
      %v224 = vunpack.c.h.b16 %v179
      %v225 = vpack.c.b16 %v223, %v221
      %v226 = vpack.c.b16 %v224, %v222
      %v261 = vunpack.c.l.b16 %v180
      %v262 = vunpack.c.l.b16 %v181
      %v263 = vunpack.c.l.b16 %v182
      %v264 = vunpack.c.l.b16 %v183
      %v265 = vunpack.c.l.b16 %v184
      %v266 = vunpack.c.l.b16 %v185
      %v267 = vunpack.c.l.b16 %v186
      %v268 = vunpack.c.l.b16 %v187
      %v269 = vunpack.c.l.b16 %v188
      %v270 = vunpack.c.l.b16 %v189
      %v271 = vunpack.c.l.b16 %v190
      %v272 = vunpack.c.l.b16 %v191
      %v273 = vunpack.c.l.b16 %v192
      %v274 = vunpack.c.l.b16 %v193
      %v275 = vunpack.c.l.b16 %v194
      %v276 = vunpack.c.l.b16 %v195
      %v277 = vunpack.c.l.b16 %v196
      %v278 = vunpack.c.l.b16 %v197
      %v279 = vunpack.c.l.b16 %v198
      %v280 = vunpack.c.l.b16 %v199
      %v281 = vunpack.c.l.b16 %v200
      %v282 = vunpack.c.l.b16 %v201
      %v283 = vunpack.c.l.b16 %v202
      %v284 = vunpack.c.l.b16 %v203
      %v285 = vunpack.c.l.b16 %v204
      %v286 = vunpack.c.l.b16 %v205
      %v287 = vunpack.c.l.b16 %v206
      %v288 = vunpack.c.l.b16 %v207
      %v289 = vunpack.c.l.b16 %v208
      %v290 = vunpack.c.l.b16 %v209
      %v291 = vunpack.c.l.b16 %v210
      %v292 = vunpack.c.l.b16 %v211
      %v293 = vpack.c.b16 %v262, %v261
      %v294 = vpack.c.b16 %v264, %v263
      %v295 = vpack.c.b16 %v266, %v265
      %v296 = vpack.c.b16 %v268, %v267
      %v297 = vpack.c.b16 %v270, %v269
      %v298 = vpack.c.b16 %v272, %v271
      %v299 = vpack.c.b16 %v274, %v273
      %v300 = vpack.c.b16 %v276, %v275
      %v301 = vpack.c.b16 %v278, %v277
      %v302 = vpack.c.b16 %v280, %v279
      %v303 = vpack.c.b16 %v282, %v281
      %v304 = vpack.c.b16 %v284, %v283
      %v305 = vpack.c.b16 %v286, %v285
      %v306 = vpack.c.b16 %v288, %v287
      %v307 = vpack.c.b16 %v290, %v289
      %v308 = vpack.c.b16 %v292, %v291
      %325 = vmatprep.subr.bf16.mxu0 0
      %326 = vmatpush1.bf16.msra.mxu0 %v293
      %327 = vmatprep.subr.bf16.mxu0 0
      %328 = vmatpush1.bf16.msra.mxu0 %v294
      %329 = vmatprep.subr.bf16.mxu0 0
      %330 = vmatpush1.bf16.msra.mxu0 %v295
      %331 = vmatprep.subr.bf16.mxu0 0
      %332 = vmatpush1.bf16.msra.mxu0 %v296
      %333 = vmatprep.subr.bf16.mxu0 0
      %334 = vmatpush1.bf16.msra.mxu0 %v297
      %335 = vmatprep.subr.bf16.mxu0 0
      %336 = vmatpush1.bf16.msra.mxu0 %v298
      %337 = vmatprep.subr.bf16.mxu0 0
      %338 = vmatpush1.bf16.msra.mxu0 %v299
      %339 = vmatprep.subr.bf16.mxu0 0
      %340 = vmatpush1.bf16.msra.mxu0 %v300
      %341 = vmatprep.subr.bf16.mxu0 0
      %342 = vmatpush1.bf16.msra.mxu0 %v301
      %343 = vmatprep.subr.bf16.mxu0 0
      %344 = vmatpush1.bf16.msra.mxu0 %v302
      %345 = vmatprep.subr.bf16.mxu0 0
      %346 = vmatpush1.bf16.msra.mxu0 %v303
      %347 = vmatprep.subr.bf16.mxu0 0
      %348 = vmatpush1.bf16.msra.mxu0 %v304
      %349 = vmatprep.subr.bf16.mxu0 0
      %350 = vmatpush1.bf16.msra.mxu0 %v305
      %351 = vmatprep.subr.bf16.mxu0 0
      %352 = vmatpush1.bf16.msra.mxu0 %v306
      %353 = vmatprep.subr.bf16.mxu0 0
      %354 = vmatpush1.bf16.msra.mxu0 %v307
      %355 = vmatprep.subr.bf16.mxu0 0
      %356 = vmatpush1.bf16.msra.mxu0 %v308
      %357 = vmatprep.mubr.bf16.mxu0 %v226
      %358 = vmatmul.mubr.bf16.gmra.mrb[0].mxu0 %v225
      %v359 = vpop.f32.mrb[0].mxu0
      %v360 = vadd.f32 %v217, %v359
      %v361 = vpop.f32.mrb[0].mxu0
      %v362 = vpop.f32.mrb[0].mxu0
      %v363 = vadd.f32 %v217, %v362
      %v364 = vpop.f32.mrb[0].mxu0
      %365 = vdwg.mxu0
      %v366 = vmax.f32 %v360, 0.0
      %v367 = vmax.f32 %v363, 0.0
      %v368 = vpack.c.bf16 %v367, %v366
      %v370 = vunpack.c.l.b16 %v368
      %v371 = vunpack.c.h.b16 %v368
      %v372 = vpack.c.b16 %v370, %v370
      %v373 = vpack.c.b16 %v371, %v371
      %vm376 = vcmask 257024
      %377 = vst.msk [vmem:[%s175] sm:$0xf] %vm376, %v372
      %378 = vst.msk [vmem:[%s175 + $0x4] sm:$0xf] %vm376, %v373
      %s379 = smul.u32 2, %s14
      %p380 = scmp.lt.s32.totalorder %s379, 3
      %s381 = scalar_select %p380, %s379, 3
      %s382 = smul.addr %s381, 4
      %s383 = scalar_lea.vmem %s3, %s382
      // Predicated region
      $region33: #{run.11} parent=31 // pred_check
        %p384 = pneg %p100
      $region34: #{run.11} parent=31 // pred_check_branch
        %386 = sbr.rel (%p384) target = $region36
      $region35: #{run.11} parent=31 // pred_region
        %s387 = smul.u32 2, %s14
      $region36: #{run.11} parent=31 // pred_fallthru
        _
    $region32: #{run.11} parent=5 // pred_fallthru
      _
    %p388 = scmp.le.s32.totalorder 2, %s9
    // Predicated region
    $region37: #{run.11} parent=5 // pred_check
      %p389 = pneg %p388
    $region38: #{run.11} parent=5 // pred_check_branch
      %391 = sbr.rel (%p389) target = $region40
    $region39: #{run.11} parent=5 // pred_region
      %s392 = ssub.s32 %s9, 2
      // Predicated region
      $region41: #{run.11} parent=39 // pred_check
        %p393 = pneg %p106
      $region42: #{run.11} parent=39 // pred_check_branch
        %395 = sbr.rel (%p393) target = $region44
      $region43: #{run.11} parent=39 // pred_region
        %s396 = smul.u32 2, %s15
        %p397 = scmp.lt.s32.totalorder %s396, 3
        %s398 = scalar_select %p397, %s396, 3
        %s399 = smul.addr %s398, 4
        %s400 = scalar_lea.vmem %s3, %s399
      $region44: #{run.11} parent=39 // pred_fallthru
        _
    $region40: #{run.11} parent=5 // pred_fallthru
      _
  $region6: #{run.11} parent=0 // loop_footer
    %s13 = sadd.s32 1, %s9
  $region7: #{run.11} parent=0 // loop_footer_branch
    %8 = sbr.rel target = $region3
  $region8: #{run.11} parent=0 // loop_exit
    _

// kernel: run.15
$region0: #{run.15}
  #allocation0 [shape = 'u32[]', space=smem, size = 0x4, offset = 0x4, fixed_abs, tag = 'smem constant byte address 0x4 - core index']
  #allocation1 [shape = 'u32[144,128]{1,0:T(1,128)}', space=vmem, size = 0x12000, scoped, tag = 'internal scratch']
  %s0 = inlined_call_operand.vmem [shape: bf16[2,8,128], index: 0, kind: input, shape index: {}]
  %s1 = inlined_call_operand.vmem [shape: f32[2,1,128], index: 1, kind: input, shape index: {}]
  %s2 = inlined_call_operand.vmem [shape: f32[2,1,128], index: 2, kind: input, shape index: {}]
  %s3 = inlined_call_operand.vmem [shape: bf16[2,8,128], index: 3, kind: output, shape index: {}]
  %s4 = sld [smem:[#allocation0]]
  $region45: #{run.15} parent=0
    _
  %s6 = ssub.s32 1, %s4
  %s7 = scalar_select 0, %s6, %s4
  loop: start=0, step=1, limit=4
  $region2: #{run.15} parent=0 // loop_pre_header
    _
  $region3: #{run.15} parent=0 // loop_header
    %s9 = sphi 0, %s13
    %p10 = scmp.ge.s32.totalorder %s9, 4
    %s16 = sphi 0, %s28
    %s17 = sphi 0, %s24
    %s18 = sphi 0, %s16
    %s19 = sphi 0, %s17
    %s20 = sphi 0, %s18
    %s21 = sphi 0, %s19
    %s33 = sphi 0, %s35
    %s36 = sphi 0, %s33
    %s37 = sphi 0, %s36
    %s53 = sphi 0, %s37
    %s59 = sphi 0, %s61
    %s62 = sphi 0, %s59
    %s63 = sphi 0, %s62
    %s79 = sphi 0, %s63
    %s85 = sphi 0, %s87
    %s88 = sphi 0, %s85
    %s89 = sphi 0, %s88
    %s105 = sphi 0, %s89
    %s113 = sphi 0, %s115
    %s116 = sphi 0, %s113
    %s117 = sphi 0, %s116
    %s133 = sphi 0, %s117
  $region4: #{run.15} parent=0 // loop_header_branch
    %12 = sbr.rel (%p10) target = $region8
  $region5: #{run.15} parent=0 // loop_body
    %s14 = ssub.s32 %s9, 1
    %s15 = ssub.s32 %s9, 2
    %s22 = sadd.s32 1, %s17
    %p23 = scmp.ge.s32.totalorder %s22, 1
    %s24 = scalar_select %p23, 0, %s22
    %s25 = sadd.s32 1, %s16
    %s26 = scalar_select %p23, %s25, %s16
    %p27 = scmp.ge.s32.totalorder %s26, 2
    %s28 = scalar_select %p27, 0, %s26
    %s29 = ssub.s32 %s16, %s28
    %s30 = ssub.s32 %s17, %s24
    %s31 = sor.u32 %s29, %s30
    %p32 = scmp.eq.s32.totalorder %s31, 0
    %s34 = sadd.s32 %s33, 1
    %s35 = scalar_select %p32, %s33, %s34
    %p38 = pneg %p32
    %p39 = scmp.eq.s32.totalorder %s9, 1
    %p40 = por %p38, %p39
    %p41 = scmp.ne.s32.totalorder %s33, %s36
    %p42 = scmp.eq.s32.totalorder %s9, 0
    %p43 = por %p41, %p42
    %p44 = scmp.ne.s32.totalorder %s33, %s36
    %p45 = scmp.eq.s32.totalorder %s14, 1
    %p46 = por %p44, %p45
    %p47 = scmp.ne.s32.totalorder %s36, %s37
    %p48 = scmp.eq.s32.totalorder %s14, 0
    %p49 = por %p47, %p48
    %p50 = scmp.ne.s32.totalorder %s36, %s37
    %p51 = scmp.eq.s32.totalorder %s15, 1
    %p52 = por %p50, %p51
    %p54 = scmp.ne.s32.totalorder %s37, %s53
    %p55 = scmp.eq.s32.totalorder %s15, 0
    %p56 = por %p54, %p55
    %s57 = ssub.s32 %s16, %s28
    %p58 = scmp.eq.s32.totalorder %s57, 0
    %s60 = sadd.s32 %s59, 1
    %s61 = scalar_select %p58, %s59, %s60
    %p64 = pneg %p58
    %p65 = scmp.eq.s32.totalorder %s9, 1
    %p66 = por %p64, %p65
    %p67 = scmp.ne.s32.totalorder %s59, %s62
    %p68 = scmp.eq.s32.totalorder %s9, 0
    %p69 = por %p67, %p68
    %p70 = scmp.ne.s32.totalorder %s59, %s62
    %p71 = scmp.eq.s32.totalorder %s14, 1
    %p72 = por %p70, %p71
    %p73 = scmp.ne.s32.totalorder %s62, %s63
    %p74 = scmp.eq.s32.totalorder %s14, 0
    %p75 = por %p73, %p74
    %p76 = scmp.ne.s32.totalorder %s62, %s63
    %p77 = scmp.eq.s32.totalorder %s15, 1
    %p78 = por %p76, %p77
    %p80 = scmp.ne.s32.totalorder %s63, %s79
    %p81 = scmp.eq.s32.totalorder %s15, 0
    %p82 = por %p80, %p81
    %s83 = ssub.s32 %s16, %s28
    %p84 = scmp.eq.s32.totalorder %s83, 0
    %s86 = sadd.s32 %s85, 1
    %s87 = scalar_select %p84, %s85, %s86
    %p90 = pneg %p84
    %p91 = scmp.eq.s32.totalorder %s9, 1
    %p92 = por %p90, %p91
    %p93 = scmp.ne.s32.totalorder %s85, %s88
    %p94 = scmp.eq.s32.totalorder %s9, 0
    %p95 = por %p93, %p94
    %p96 = scmp.ne.s32.totalorder %s85, %s88
    %p97 = scmp.eq.s32.totalorder %s14, 1
    %p98 = por %p96, %p97
    %p99 = scmp.ne.s32.totalorder %s88, %s89
    %p100 = scmp.eq.s32.totalorder %s14, 0
    %p101 = por %p99, %p100
    %p102 = scmp.ne.s32.totalorder %s88, %s89
    %p103 = scmp.eq.s32.totalorder %s15, 1
    %p104 = por %p102, %p103
    %p106 = scmp.ne.s32.totalorder %s89, %s105
    %p107 = scmp.eq.s32.totalorder %s15, 0
    %p108 = por %p106, %p107
    %s109 = ssub.s32 %s16, %s28
    %s110 = ssub.s32 %s17, %s24
    %s111 = sor.u32 %s109, %s110
    %p112 = scmp.eq.s32.totalorder %s111, 0
    %s114 = sadd.s32 %s113, 1
    %s115 = scalar_select %p112, %s113, %s114
    %p118 = pneg %p112
    %p119 = scmp.eq.s32.totalorder %s9, 1
    %p120 = por %p118, %p119
    %p121 = scmp.ne.s32.totalorder %s113, %s116
    %p122 = scmp.eq.s32.totalorder %s9, 0
    %p123 = por %p121, %p122
    %p124 = scmp.ne.s32.totalorder %s113, %s116
    %p125 = scmp.eq.s32.totalorder %s14, 1
    %p126 = por %p124, %p125
    %p127 = scmp.ne.s32.totalorder %s116, %s117
    %p128 = scmp.eq.s32.totalorder %s14, 0
    %p129 = por %p127, %p128
    %p130 = scmp.ne.s32.totalorder %s116, %s117
    %p131 = scmp.eq.s32.totalorder %s15, 1
    %p132 = por %p130, %p131
    %p134 = scmp.ne.s32.totalorder %s117, %s133
    %p135 = scmp.eq.s32.totalorder %s15, 0
    %p136 = por %p134, %p135
    %p137 = scmp.le.s32.totalorder 1, %s9
    %p138 = scmp.lt.s32.totalorder %s9, 3
    %p139 = pnand %p137, %p138
    %p140 = pneg %p139
    // Predicated region
    $region9: #{run.15} parent=5 // pred_check
      _
    $region10: #{run.15} parent=5 // pred_check_branch
      %142 = sbr.rel (%p139) target = $region12
    $region11: #{run.15} parent=5 // pred_region
      %s143 = ssub.s32 %s9, 1
    $region12: #{run.15} parent=5 // pred_fallthru
      _
    %p144 = scmp.lt.s32.totalorder %s9, 2
    // Predicated region
    $region13: #{run.15} parent=5 // pred_check
      %p145 = pneg %p144
    $region14: #{run.15} parent=5 // pred_check_branch
      %147 = sbr.rel (%p145) target = $region16
    $region15: #{run.15} parent=5 // pred_region
      // Predicated region
      $region17: #{run.15} parent=15 // pred_check
        %p148 = pneg %p43
      $region18: #{run.15} parent=15 // pred_check_branch
        %150 = sbr.rel (%p148) target = $region20
      $region19: #{run.15} parent=15 // pred_region
        %p151 = scmp.lt.s32.totalorder %s16, 1
        %s152 = scalar_select %p151, %s16, 1
        %p153 = scmp.lt.s32.totalorder %s17, 0
        %s154 = scalar_select %p153, %s17, 0
        %s155 = sadd.s32 %s154, %s152
        %s156 = smul.addr %s155, 4
        %s157 = scalar_lea.vmem %s0, %s156
      $region20: #{run.15} parent=15 // pred_fallthru
        _
      // Predicated region
      $region21: #{run.15} parent=15 // pred_check
        %p158 = pneg %p69
      $region22: #{run.15} parent=15 // pred_check_branch
        %160 = sbr.rel (%p158) target = $region24
      $region23: #{run.15} parent=15 // pred_region
        %p161 = scmp.lt.s32.totalorder %s16, 1
        %s162 = scalar_select %p161, %s16, 1
        %s163 = scalar_lea.vmem %s1, %s162
      $region24: #{run.15} parent=15 // pred_fallthru
        _
      // Predicated region
      $region25: #{run.15} parent=15 // pred_check
        %p164 = pneg %p95
      $region26: #{run.15} parent=15 // pred_check_branch
        %166 = sbr.rel (%p164) target = $region28
      $region27: #{run.15} parent=15 // pred_region
        %p167 = scmp.lt.s32.totalorder %s16, 1
        %s168 = scalar_select %p167, %s16, 1
        %s169 = scalar_lea.vmem %s2, %s168
      $region28: #{run.15} parent=15 // pred_fallthru
        _
    $region16: #{run.15} parent=5 // pred_fallthru
      _
    %p170 = scmp.le.s32.totalorder 1, %s9
    %p171 = scmp.lt.s32.totalorder %s9, 3
    %p172 = pnand %p170, %p171
    %p173 = pneg %p172
    // Predicated region
    $region29: #{run.15} parent=5 // pred_check
      _
    $region30: #{run.15} parent=5 // pred_check_branch
      %175 = sbr.rel (%p172) target = $region32
    $region31: #{run.15} parent=5 // pred_region
      %s176 = ssub.s32 %s9, 1
      %p177 = scmp.lt.s32.totalorder %s18, 1
      %s178 = scalar_select %p177, %s18, 1
      %p179 = scmp.lt.s32.totalorder %s19, 0
      %s180 = scalar_select %p179, %s19, 0
      %s181 = sadd.s32 %s180, %s178
      %s182 = smul.addr %s181, 4
      %s183 = scalar_lea.vmem %s0, %s182
      %p184 = pneg %p49
      %p185 = pneg %p46
      %p186 = scmp.lt.s32.totalorder %s18, 1
      %s187 = scalar_select %p186, %s18, 1
      %s188 = scalar_lea.vmem %s1, %s187
      %p189 = pneg %p75
      %p190 = pneg %p72
      %p191 = scmp.lt.s32.totalorder %s18, 1
      %s192 = scalar_select %p191, %s18, 1
      %s193 = scalar_lea.vmem %s2, %s192
      %p194 = pneg %p101
      %p195 = pneg %p98
      %p196 = pneg %p129
      %p197 = pneg %p126
      %p198 = scmp.lt.s32.totalorder %s18, 1
      %s199 = scalar_select %p198, %s18, 1
      %p200 = scmp.lt.s32.totalorder %s19, 0
      %s201 = scalar_select %p200, %s19, 0
      %s202 = sadd.s32 %s201, %s199
      %s203 = smul.addr %s202, 4
      %s204 = scalar_lea.vmem %s3, %s203
      %p205 = scmp.lt.s32.totalorder %s18, 1
      %s206 = scalar_select %p205, %s18, 1
      %p207 = scmp.lt.s32.totalorder %s19, 0
      %s208 = scalar_select %p207, %s19, 0
      %s209 = sadd.s32 %s208, %s206
      %s210 = smul.addr %s209, 4
      %s211 = scalar_lea.vmem %s0, %s210
      %p212 = scmp.lt.s32.totalorder %s18, 1
      %s213 = scalar_select %p212, %s18, 1
      %s214 = scalar_lea.vmem %s1, %s213
      %p215 = scmp.lt.s32.totalorder %s18, 1
      %s216 = scalar_select %p215, %s18, 1
      %s217 = scalar_lea.vmem %s2, %s216
      %p218 = scmp.lt.s32.totalorder %s18, 1
      %s219 = scalar_select %p218, %s18, 1
      %p220 = scmp.lt.s32.totalorder %s19, 0
      %s221 = scalar_select %p220, %s19, 0
      %s222 = sadd.s32 %s221, %s219
      %s223 = smul.addr %s222, 4
      %s224 = scalar_lea.vmem %s3, %s223
      %v225 = vld [vmem:[%s211] sm:$0xf]
      %v226 = vunpack.c.l.bf16 %v225
      %v227 = vld [vmem:[%s214] sm:$0x1]
      %v229 = vlaneseq
      %v230 = vshrl.u32 %v229, 7
      %v231 = vsub.s32 0, %v230
      %v232 = vrot.slane %v227, %v231
      %v234 = vmul.f32 %v226, %v232
      %v235 = vld [vmem:[%s217] sm:$0x1]
      %v237 = vlaneseq
      %v238 = vshrl.u32 %v237, 7
      %v239 = vsub.s32 0, %v238
      %v240 = vrot.slane %v235, %v239
      %v242 = vadd.f32 %v234, %v240
      %v243 = vpack.c.bf16 %v242, %v242
      %244 = vst [vmem:[%s224] sm:$0xf] %v243
      %p245 = scmp.lt.s32.totalorder %s18, 1
      %s246 = scalar_select %p245, %s18, 1
      %p247 = scmp.lt.s32.totalorder %s19, 0
      %s248 = scalar_select %p247, %s19, 0
      %s249 = sadd.s32 %s248, %s246
      %s250 = smul.addr %s249, 4
      %s251 = scalar_lea.vmem %s3, %s250
      // Predicated region
      $region33: #{run.15} parent=31 // pred_check
        %p252 = pneg %p126
      $region34: #{run.15} parent=31 // pred_check_branch
        %254 = sbr.rel (%p252) target = $region36
      $region35: #{run.15} parent=31 // pred_region
        _
      $region36: #{run.15} parent=31 // pred_fallthru
        _
    $region32: #{run.15} parent=5 // pred_fallthru
      _
    %p255 = scmp.le.s32.totalorder 2, %s9
    // Predicated region
    $region37: #{run.15} parent=5 // pred_check
      %p256 = pneg %p255
    $region38: #{run.15} parent=5 // pred_check_branch
      %258 = sbr.rel (%p256) target = $region40
    $region39: #{run.15} parent=5 // pred_region
      %s259 = ssub.s32 %s9, 2
      // Predicated region
      $region41: #{run.15} parent=39 // pred_check
        %p260 = pneg %p132
      $region42: #{run.15} parent=39 // pred_check_branch
        %262 = sbr.rel (%p260) target = $region44
      $region43: #{run.15} parent=39 // pred_region
        %p263 = scmp.lt.s32.totalorder %s20, 1
        %s264 = scalar_select %p263, %s20, 1
        %p265 = scmp.lt.s32.totalorder %s21, 0
        %s266 = scalar_select %p265, %s21, 0
        %s267 = sadd.s32 %s266, %s264
        %s268 = smul.addr %s267, 4
        %s269 = scalar_lea.vmem %s3, %s268
      $region44: #{run.15} parent=39 // pred_fallthru
        _
    $region40: #{run.15} parent=5 // pred_fallthru
      _
  $region6: #{run.15} parent=0 // loop_footer
    %s13 = sadd.s32 1, %s9
  $region7: #{run.15} parent=0 // loop_footer_branch
    %8 = sbr.rel target = $region3
  $region8: #{run.15} parent=0 // loop_exit
    _

// kernel: run.14
$region0: #{run.14}
  #allocation0 [shape = 'u32[]', space=smem, size = 0x4, offset = 0x4, fixed_abs, tag = 'smem constant byte address 0x4 - core index']
  #allocation1 [shape = 'u32[144,128]{1,0:T(1,128)}', space=vmem, size = 0x12000, scoped, tag = 'internal scratch']
  %s0 = inlined_call_operand.vmem [shape: bf16[2,8,128], index: 0, kind: input, shape index: {}]
  %s1 = inlined_call_operand.vmem [shape: f32[2,1,128], index: 1, kind: input, shape index: {}]
  %s2 = inlined_call_operand.vmem [shape: f32[2,2,128], index: 2, kind: output, shape index: {}]
  %s3 = sld [smem:[#allocation0]]
  $region45: #{run.14} parent=0
    _
  %s5 = ssub.s32 1, %s3
  %s6 = scalar_select 0, %s5, %s3
  loop: start=0, step=1, limit=4
  $region2: #{run.14} parent=0 // loop_pre_header
    _
  $region3: #{run.14} parent=0 // loop_header
    %s8 = sphi 0, %s12
    %p9 = scmp.ge.s32.totalorder %s8, 4
    %s15 = sphi 0, %s27
    %s16 = sphi 0, %s23
    %s17 = sphi 0, %s15
    %s18 = sphi 0, %s16
    %s19 = sphi 0, %s17
    %s20 = sphi 0, %s18
    %s32 = sphi 0, %s34
    %s35 = sphi 0, %s32
    %s36 = sphi 0, %s35
    %s52 = sphi 0, %s36
    %s58 = sphi 0, %s60
    %s61 = sphi 0, %s58
    %s62 = sphi 0, %s61
    %s78 = sphi 0, %s62
    %s84 = sphi 0, %s86
    %s87 = sphi 0, %s84
    %s88 = sphi 0, %s87
    %s104 = sphi 0, %s88
  $region4: #{run.14} parent=0 // loop_header_branch
    %11 = sbr.rel (%p9) target = $region8
  $region5: #{run.14} parent=0 // loop_body
    %s13 = ssub.s32 %s8, 1
    %s14 = ssub.s32 %s8, 2
    %s21 = sadd.s32 1, %s16
    %p22 = scmp.ge.s32.totalorder %s21, 1
    %s23 = scalar_select %p22, 0, %s21
    %s24 = sadd.s32 1, %s15
    %s25 = scalar_select %p22, %s24, %s15
    %p26 = scmp.ge.s32.totalorder %s25, 2
    %s27 = scalar_select %p26, 0, %s25
    %s28 = ssub.s32 %s15, %s27
    %s29 = ssub.s32 %s16, %s23
    %s30 = sor.u32 %s28, %s29
    %p31 = scmp.eq.s32.totalorder %s30, 0
    %s33 = sadd.s32 %s32, 1
    %s34 = scalar_select %p31, %s32, %s33
    %p37 = pneg %p31
    %p38 = scmp.eq.s32.totalorder %s8, 1
    %p39 = por %p37, %p38
    %p40 = scmp.ne.s32.totalorder %s32, %s35
    %p41 = scmp.eq.s32.totalorder %s8, 0
    %p42 = por %p40, %p41
    %p43 = scmp.ne.s32.totalorder %s32, %s35
    %p44 = scmp.eq.s32.totalorder %s13, 1
    %p45 = por %p43, %p44
    %p46 = scmp.ne.s32.totalorder %s35, %s36
    %p47 = scmp.eq.s32.totalorder %s13, 0
    %p48 = por %p46, %p47
    %p49 = scmp.ne.s32.totalorder %s35, %s36
    %p50 = scmp.eq.s32.totalorder %s14, 1
    %p51 = por %p49, %p50
    %p53 = scmp.ne.s32.totalorder %s36, %s52
    %p54 = scmp.eq.s32.totalorder %s14, 0
    %p55 = por %p53, %p54
    %s56 = ssub.s32 %s15, %s27
    %p57 = scmp.eq.s32.totalorder %s56, 0
    %s59 = sadd.s32 %s58, 1
    %s60 = scalar_select %p57, %s58, %s59
    %p63 = pneg %p57
    %p64 = scmp.eq.s32.totalorder %s8, 1
    %p65 = por %p63, %p64
    %p66 = scmp.ne.s32.totalorder %s58, %s61
    %p67 = scmp.eq.s32.totalorder %s8, 0
    %p68 = por %p66, %p67
    %p69 = scmp.ne.s32.totalorder %s58, %s61
    %p70 = scmp.eq.s32.totalorder %s13, 1
    %p71 = por %p69, %p70
    %p72 = scmp.ne.s32.totalorder %s61, %s62
    %p73 = scmp.eq.s32.totalorder %s13, 0
    %p74 = por %p72, %p73
    %p75 = scmp.ne.s32.totalorder %s61, %s62
    %p76 = scmp.eq.s32.totalorder %s14, 1
    %p77 = por %p75, %p76
    %p79 = scmp.ne.s32.totalorder %s62, %s78
    %p80 = scmp.eq.s32.totalorder %s14, 0
    %p81 = por %p79, %p80
    %s82 = ssub.s32 %s15, %s27
    %p83 = scmp.eq.s32.totalorder %s82, 0
    %s85 = sadd.s32 %s84, 1
    %s86 = scalar_select %p83, %s84, %s85
    %p89 = pneg %p83
    %p90 = scmp.eq.s32.totalorder %s8, 1
    %p91 = por %p89, %p90
    %p92 = scmp.ne.s32.totalorder %s84, %s87
    %p93 = scmp.eq.s32.totalorder %s8, 0
    %p94 = por %p92, %p93
    %p95 = scmp.ne.s32.totalorder %s84, %s87
    %p96 = scmp.eq.s32.totalorder %s13, 1
    %p97 = por %p95, %p96
    %p98 = scmp.ne.s32.totalorder %s87, %s88
    %p99 = scmp.eq.s32.totalorder %s13, 0
    %p100 = por %p98, %p99
    %p101 = scmp.ne.s32.totalorder %s87, %s88
    %p102 = scmp.eq.s32.totalorder %s14, 1
    %p103 = por %p101, %p102
    %p105 = scmp.ne.s32.totalorder %s88, %s104
    %p106 = scmp.eq.s32.totalorder %s14, 0
    %p107 = por %p105, %p106
    %p108 = scmp.le.s32.totalorder 1, %s8
    %p109 = scmp.lt.s32.totalorder %s8, 3
    %p110 = pnand %p108, %p109
    %p111 = pneg %p110
    // Predicated region
    $region9: #{run.14} parent=5 // pred_check
      _
    $region10: #{run.14} parent=5 // pred_check_branch
      %113 = sbr.rel (%p110) target = $region12
    $region11: #{run.14} parent=5 // pred_region
      %s114 = ssub.s32 %s8, 1
    $region12: #{run.14} parent=5 // pred_fallthru
      _
    %p115 = scmp.lt.s32.totalorder %s8, 2
    // Predicated region
    $region13: #{run.14} parent=5 // pred_check
      %p116 = pneg %p115
    $region14: #{run.14} parent=5 // pred_check_branch
      %118 = sbr.rel (%p116) target = $region16
    $region15: #{run.14} parent=5 // pred_region
      // Predicated region
      $region17: #{run.14} parent=15 // pred_check
        %p119 = pneg %p42
      $region18: #{run.14} parent=15 // pred_check_branch
        %121 = sbr.rel (%p119) target = $region20
      $region19: #{run.14} parent=15 // pred_region
        %p122 = scmp.lt.s32.totalorder %s15, 1
        %s123 = scalar_select %p122, %s15, 1
        %p124 = scmp.lt.s32.totalorder %s16, 0
        %s125 = scalar_select %p124, %s16, 0
        %s126 = sadd.s32 %s125, %s123
        %s127 = smul.addr %s126, 4
        %s128 = scalar_lea.vmem %s0, %s127
      $region20: #{run.14} parent=15 // pred_fallthru
        _
      // Predicated region
      $region21: #{run.14} parent=15 // pred_check
        %p129 = pneg %p68
      $region22: #{run.14} parent=15 // pred_check_branch
        %131 = sbr.rel (%p129) target = $region24
      $region23: #{run.14} parent=15 // pred_region
        %p132 = scmp.lt.s32.totalorder %s15, 1
        %s133 = scalar_select %p132, %s15, 1
        %s134 = scalar_lea.vmem %s1, %s133
      $region24: #{run.14} parent=15 // pred_fallthru
        _
    $region16: #{run.14} parent=5 // pred_fallthru
      _
    %p135 = scmp.le.s32.totalorder 1, %s8
    %p136 = scmp.lt.s32.totalorder %s8, 3
    %p137 = pnand %p135, %p136
    %p138 = pneg %p137
    // Predicated region
    $region25: #{run.14} parent=5 // pred_check
      _
    $region26: #{run.14} parent=5 // pred_check_branch
      %140 = sbr.rel (%p137) target = $region28
    $region27: #{run.14} parent=5 // pred_region
      %s141 = ssub.s32 %s8, 1
      %p142 = scmp.lt.s32.totalorder %s17, 1
      %s143 = scalar_select %p142, %s17, 1
      %p144 = scmp.lt.s32.totalorder %s18, 0
      %s145 = scalar_select %p144, %s18, 0
      %s146 = sadd.s32 %s145, %s143
      %s147 = smul.addr %s146, 4
      %s148 = scalar_lea.vmem %s0, %s147
      %p149 = pneg %p48
      %p150 = pneg %p45
      %p151 = scmp.lt.s32.totalorder %s17, 1
      %s152 = scalar_select %p151, %s17, 1
      %s153 = scalar_lea.vmem %s1, %s152
      %p154 = pneg %p74
      %p155 = pneg %p71
      %p156 = pneg %p100
      %p157 = pneg %p97
      %p158 = scmp.lt.s32.totalorder %s17, 1
      %s159 = scalar_select %p158, %s17, 1
      %s160 = smul.addr %s159, 2
      %s161 = scalar_lea.vmem %s2, %s160
      %p162 = scmp.lt.s32.totalorder %s17, 1
      %s163 = scalar_select %p162, %s17, 1
      %p164 = scmp.lt.s32.totalorder %s18, 0
      %s165 = scalar_select %p164, %s18, 0
      %s166 = sadd.s32 %s165, %s163
      %s167 = smul.addr %s166, 4
      %s168 = scalar_lea.vmem %s0, %s167
      %p169 = scmp.lt.s32.totalorder %s17, 1
      %s170 = scalar_select %p169, %s17, 1
      %s171 = scalar_lea.vmem %s1, %s170
      %p172 = scmp.lt.s32.totalorder %s17, 1
      %s173 = scalar_select %p172, %s17, 1
      %s174 = smul.addr %s173, 2
      %s175 = scalar_lea.vmem %s2, %s174
      %p176 = scmp.eq.s32.totalorder %s18, 0
      // Predicated region
      $region29: #{run.14} parent=27 // pred_check
        %p177 = pneg %p176
      $region30: #{run.14} parent=27 // pred_check_branch
        %179 = sbr.rel (%p177) target = $region32
      $region31: #{run.14} parent=27 // pred_region
        %180 = vst [vmem:[%s175] sm:$0x3] 0.0
      $region32: #{run.14} parent=27 // pred_fallthru
        _
      %v181 = vld [vmem:[%s168] sm:$0xf]
      %v182 = vunpack.c.l.bf16 %v181
      %v183 = vld [vmem:[%s171] sm:$0x1]
      %v185 = vlaneseq
      %v186 = vshrl.u32 %v185, 7
      %v187 = vsub.s32 0, %v186
      %v188 = vrot.slane %v183, %v187
      %v190 = vsub.f32 %v182, %v188
      %s191 = smul.u32 %s18, 8
      %v192 = vlaneseq
      %v193 = vshrl.u32 %v192, 7
      %v194 = vstv %s191
      %v195 = vadd.s32 %v194, %v193
      %vm196 = vcmp.lt.s32.totalorder %v195, 4
      %v197 = vsel %vm196, 1, 0
      %vm198 = vcmp.eq.s32.totalorder %v197, 1
      %v199 = vsel %vm198, %v190, 0.0
      %v200 = vrot.slane %v199, 4
      %v201 = vadd.f32 %v199, %v200
      %v202 = vrot.slane %v201, 2
      %v203 = vadd.f32 %v201, %v202
      %v204 = vrot.slane %v203, 1
      %v205 = vadd.f32 %v203, %v204
      %v206 = vmul.f32 %v199, %v199
      %v207 = vrot.slane %v206, 4
      %v208 = vadd.f32 %v206, %v207
      %v209 = vrot.slane %v208, 2
      %v210 = vadd.f32 %v208, %v209
      %v211 = vrot.slane %v210, 1
      %v212 = vadd.f32 %v210, %v211
      %v213 = vld [vmem:[%s175] sm:$0x3]
      %vm214 = vcmask 1040384
      %v215 = vsel %vm214, %v205, %v212
      %v216 = vadd.f32 %v213, %v215
      %217 = vst [vmem:[%s175] sm:$0x3] %v216
      %p218 = scmp.lt.s32.totalorder %s17, 1
      %s219 = scalar_select %p218, %s17, 1
      %s220 = smul.addr %s219, 2
      %s221 = scalar_lea.vmem %s2, %s220
      // Predicated region
      $region33: #{run.14} parent=27 // pred_check
        %p222 = pneg %p97
      $region34: #{run.14} parent=27 // pred_check_branch
        %224 = sbr.rel (%p222) target = $region36
      $region35: #{run.14} parent=27 // pred_region
        _
      $region36: #{run.14} parent=27 // pred_fallthru
        _
    $region28: #{run.14} parent=5 // pred_fallthru
      _
    %p225 = scmp.le.s32.totalorder 2, %s8
    // Predicated region
    $region37: #{run.14} parent=5 // pred_check
      %p226 = pneg %p225
    $region38: #{run.14} parent=5 // pred_check_branch
      %228 = sbr.rel (%p226) target = $region40
    $region39: #{run.14} parent=5 // pred_region
      %s229 = ssub.s32 %s8, 2
      // Predicated region
      $region41: #{run.14} parent=39 // pred_check
        %p230 = pneg %p103
      $region42: #{run.14} parent=39 // pred_check_branch
        %232 = sbr.rel (%p230) target = $region44
      $region43: #{run.14} parent=39 // pred_region
        %p233 = scmp.lt.s32.totalorder %s19, 1
        %s234 = scalar_select %p233, %s19, 1
        %s235 = smul.addr %s234, 2
        %s236 = scalar_lea.vmem %s2, %s235
      $region44: #{run.14} parent=39 // pred_fallthru
        _
    $region40: #{run.14} parent=5 // pred_fallthru
      _
  $region6: #{run.14} parent=0 // loop_footer
    %s12 = sadd.s32 1, %s8
  $region7: #{run.14} parent=0 // loop_footer_branch
    %7 = sbr.rel target = $region3
  $region8: #{run.14} parent=0 // loop_exit
    _

// kernel: run.16
$region0: #{run.16}
  #allocation0 [shape = 'u32[]', space=smem, size = 0x4, offset = 0x4, fixed_abs, tag = 'smem constant byte address 0x4 - core index']
  #allocation1 [shape = 'u32[144,128]{1,0:T(1,128)}', space=vmem, size = 0x12000, scoped, tag = 'internal scratch']
  %s0 = inlined_call_operand.vmem [shape: bf16[128,384], index: 0, kind: input, shape index: {}]
  %s1 = inlined_call_operand.vmem [shape: bf16[384,16], index: 1, kind: input, shape index: {}]
  %s2 = inlined_call_operand.vmem [shape: f32[1,16], index: 2, kind: input, shape index: {}]
  %s3 = inlined_call_operand.vmem [shape: bf16[128,16], index: 3, kind: output, shape index: {}]
  %s4 = sld [smem:[#allocation0]]
  $region45: #{run.16} parent=0
    _
  %s6 = ssub.s32 1, %s4
  %s7 = scalar_select 0, %s6, %s4
  loop: start=0, step=1, limit=4
  $region2: #{run.16} parent=0 // loop_pre_header
    _
  $region3: #{run.16} parent=0 // loop_header
    %s9 = sphi 0, %s13
    %p10 = scmp.ge.s32.totalorder %s9, 4
    %s19 = sphi 0, %s21
    %s22 = sphi 0, %s19
    %s23 = sphi 0, %s22
    %s39 = sphi 0, %s23
    %s43 = sphi 0, %s43
    %s45 = sphi 0, %s43
    %s46 = sphi 0, %s45
    %s60 = sphi 0, %s46
    %s64 = sphi 0, %s64
    %s66 = sphi 0, %s64
    %s67 = sphi 0, %s66
    %s81 = sphi 0, %s67
    %s87 = sphi 0, %s89
    %s90 = sphi 0, %s87
    %s91 = sphi 0, %s90
    %s107 = sphi 0, %s91
  $region4: #{run.16} parent=0 // loop_header_branch
    %12 = sbr.rel (%p10) target = $region8
  $region5: #{run.16} parent=0 // loop_body
    %s14 = ssub.s32 %s9, 1
    %s15 = ssub.s32 %s9, 2
    %s16 = sadd.s32 %s9, 1
    %s17 = ssub.s32 %s9, %s16
    %p18 = scmp.eq.s32.totalorder %s17, 0
    %s20 = sadd.s32 %s19, 1
    %s21 = scalar_select %p18, %s19, %s20
    %p24 = pneg %p18
    %p25 = scmp.eq.s32.totalorder %s9, 1
    %p26 = por %p24, %p25
    %p27 = scmp.ne.s32.totalorder %s19, %s22
    %p28 = scmp.eq.s32.totalorder %s9, 0
    %p29 = por %p27, %p28
    %p30 = scmp.ne.s32.totalorder %s19, %s22
    %p31 = scmp.eq.s32.totalorder %s14, 1
    %p32 = por %p30, %p31
    %p33 = scmp.ne.s32.totalorder %s22, %s23
    %p34 = scmp.eq.s32.totalorder %s14, 0
    %p35 = por %p33, %p34
    %p36 = scmp.ne.s32.totalorder %s22, %s23
    %p37 = scmp.eq.s32.totalorder %s15, 1
    %p38 = por %p36, %p37
    %p40 = scmp.ne.s32.totalorder %s23, %s39
    %p41 = scmp.eq.s32.totalorder %s15, 0
    %p42 = por %p40, %p41
    %s44 = sadd.s32 %s43, 1
    %p47 = scmp.eq.s32.totalorder %s9, 1
    %p48 = scmp.ne.s32.totalorder %s43, %s45
    %p49 = scmp.eq.s32.totalorder %s9, 0
    %p50 = por %p48, %p49
    %p51 = scmp.ne.s32.totalorder %s43, %s45
    %p52 = scmp.eq.s32.totalorder %s14, 1
    %p53 = por %p51, %p52
    %p54 = scmp.ne.s32.totalorder %s45, %s46
    %p55 = scmp.eq.s32.totalorder %s14, 0
    %p56 = por %p54, %p55
    %p57 = scmp.ne.s32.totalorder %s45, %s46
    %p58 = scmp.eq.s32.totalorder %s15, 1
    %p59 = por %p57, %p58
    %p61 = scmp.ne.s32.totalorder %s46, %s60
    %p62 = scmp.eq.s32.totalorder %s15, 0
    %p63 = por %p61, %p62
    %s65 = sadd.s32 %s64, 1
    %p68 = scmp.eq.s32.totalorder %s9, 1
    %p69 = scmp.ne.s32.totalorder %s64, %s66
    %p70 = scmp.eq.s32.totalorder %s9, 0
    %p71 = por %p69, %p70
    %p72 = scmp.ne.s32.totalorder %s64, %s66
    %p73 = scmp.eq.s32.totalorder %s14, 1
    %p74 = por %p72, %p73
    %p75 = scmp.ne.s32.totalorder %s66, %s67
    %p76 = scmp.eq.s32.totalorder %s14, 0
    %p77 = por %p75, %p76
    %p78 = scmp.ne.s32.totalorder %s66, %s67
    %p79 = scmp.eq.s32.totalorder %s15, 1
    %p80 = por %p78, %p79
    %p82 = scmp.ne.s32.totalorder %s67, %s81
    %p83 = scmp.eq.s32.totalorder %s15, 0
    %p84 = por %p82, %p83
    %s85 = ssub.s32 %s9, %s16
    %p86 = scmp.eq.s32.totalorder %s85, 0
    %s88 = sadd.s32 %s87, 1
    %s89 = scalar_select %p86, %s87, %s88
    %p92 = pneg %p86
    %p93 = scmp.eq.s32.totalorder %s9, 1
    %p94 = por %p92, %p93
    %p95 = scmp.ne.s32.totalorder %s87, %s90
    %p96 = scmp.eq.s32.totalorder %s9, 0
    %p97 = por %p95, %p96
    %p98 = scmp.ne.s32.totalorder %s87, %s90
    %p99 = scmp.eq.s32.totalorder %s14, 1
    %p100 = por %p98, %p99
    %p101 = scmp.ne.s32.totalorder %s90, %s91
    %p102 = scmp.eq.s32.totalorder %s14, 0
    %p103 = por %p101, %p102
    %p104 = scmp.ne.s32.totalorder %s90, %s91
    %p105 = scmp.eq.s32.totalorder %s15, 1
    %p106 = por %p104, %p105
    %p108 = scmp.ne.s32.totalorder %s91, %s107
    %p109 = scmp.eq.s32.totalorder %s15, 0
    %p110 = por %p108, %p109
    %p111 = scmp.le.s32.totalorder 1, %s9
    %p112 = scmp.lt.s32.totalorder %s9, 3
    %p113 = pnand %p111, %p112
    %p114 = pneg %p113
    // Predicated region
    $region9: #{run.16} parent=5 // pred_check
      _
    $region10: #{run.16} parent=5 // pred_check_branch
      %116 = sbr.rel (%p113) target = $region12
    $region11: #{run.16} parent=5 // pred_region
      %s117 = ssub.s32 %s9, 1
      // Predicated region
      $region13: #{run.16} parent=11 // pred_check
        %p118 = pneg %p56
      $region14: #{run.16} parent=11 // pred_check_branch
        %120 = sbr.rel (%p118) target = $region16
      $region15: #{run.16} parent=11 // pred_region
        _
      $region16: #{run.16} parent=11 // pred_fallthru
        _
      // Predicated region
      $region17: #{run.16} parent=11 // pred_check
        %p121 = pneg %p77
      $region18: #{run.16} parent=11 // pred_check_branch
        %123 = sbr.rel (%p121) target = $region20
      $region19: #{run.16} parent=11 // pred_region
        _
      $region20: #{run.16} parent=11 // pred_fallthru
        _
    $region12: #{run.16} parent=5 // pred_fallthru
      _
    %p124 = scmp.lt.s32.totalorder %s9, 2
    // Predicated region
    $region21: #{run.16} parent=5 // pred_check
      %p125 = pneg %p124
    $region22: #{run.16} parent=5 // pred_check_branch
      %127 = sbr.rel (%p125) target = $region24
    $region23: #{run.16} parent=5 // pred_region
      // Predicated region
      $region25: #{run.16} parent=23 // pred_check
        %p128 = pneg %p29
      $region26: #{run.16} parent=23 // pred_check_branch
        %130 = sbr.rel (%p128) target = $region28
      $region27: #{run.16} parent=23 // pred_region
        %s131 = smul.u32 8, %s9
        %p132 = scmp.lt.s32.totalorder %s131, 15
        %s133 = scalar_select %p132, %s131, 15
        %s134 = smul.addr %s133, 3
        %s135 = smul.addr %s134, 4
        %s136 = scalar_lea.vmem %s0, %s135
        %s137 = smul.u32 8, %s9
      $region28: #{run.16} parent=23 // pred_fallthru
        _
    $region24: #{run.16} parent=5 // pred_fallthru
      _
    %p138 = scmp.le.s32.totalorder 1, %s9
    %p139 = scmp.lt.s32.totalorder %s9, 3
    %p140 = pnand %p138, %p139
    %p141 = pneg %p140
    // Predicated region
    $region29: #{run.16} parent=5 // pred_check
      _
    $region30: #{run.16} parent=5 // pred_check_branch
      %143 = sbr.rel (%p140) target = $region32
    $region31: #{run.16} parent=5 // pred_region
      %s144 = ssub.s32 %s9, 1
      %s145 = smul.u32 8, %s14
      %p146 = scmp.lt.s32.totalorder %s145, 15
      %s147 = scalar_select %p146, %s145, 15
      %s148 = smul.addr %s147, 3
      %s149 = smul.addr %s148, 4
      %s150 = scalar_lea.vmem %s0, %s149
      %p151 = pneg %p35
      %p152 = pneg %p32
      %p153 = pneg %p56
      %p154 = pneg %p53
      %p155 = pneg %p77
      %p156 = pneg %p74
      %p157 = pneg %p103
      %p158 = pneg %p100
      %s159 = smul.u32 8, %s14
      %p160 = scmp.lt.s32.totalorder %s159, 15
      %s161 = scalar_select %p160, %s159, 15
      %s162 = smul.addr %s161, 4
      %s163 = scalar_lea.vmem %s3, %s162
      %s164 = smul.u32 8, %s14
      %p165 = scmp.lt.s32.totalorder %s164, 15
      %s166 = scalar_select %p165, %s164, 15
      %s167 = smul.addr %s166, 3
      %s168 = smul.addr %s167, 4
      %s169 = scalar_lea.vmem %s0, %s168
      %s170 = smul.u32 8, %s14
      %s171 = smul.u32 8, %s14
      %p172 = scmp.lt.s32.totalorder %s171, 15
      %s173 = scalar_select %p172, %s171, 15
      %s174 = smul.addr %s173, 4
      %s175 = scalar_lea.vmem %s3, %s174
      %s176 = smul.u32 8, %s14
      %v178 = vld [vmem:[%s169] sm:$0xff]
      %v179 = vld [vmem:[%s169 + $0x8] sm:$0xf]
      %v180 = vld [vmem:[%s169 + $0xc] sm:$0xff]
      %v181 = vld [vmem:[%s169 + $0x14] sm:$0xf]
      %v182 = vld [vmem:[%s169 + $0x18] sm:$0xff]
      %v183 = vld [vmem:[%s169 + $0x20] sm:$0xf]
      %v184 = vld [vmem:[%s169 + $0x24] sm:$0xff]
      %v185 = vld [vmem:[%s169 + $0x2c] sm:$0xf]
      %v186 = vld [vmem:[%s169 + $0x30] sm:$0xff]
      %v187 = vld [vmem:[%s169 + $0x38] sm:$0xf]
      %v188 = vld [vmem:[%s169 + $0x3c] sm:$0xff]
      %v189 = vld [vmem:[%s169 + $0x44] sm:$0xf]
      %v190 = vld [vmem:[%s169 + $0x48] sm:$0xff]
      %v191 = vld [vmem:[%s169 + $0x50] sm:$0xf]
      %v192 = vld [vmem:[%s169 + $0x54] sm:$0xff]
      %v193 = vld [vmem:[%s169 + $0x5c] sm:$0xf]
      %v194 = vld [vmem:[%s1] sm:$0xf]
      %v195 = vld [vmem:[%s1 + $0x4] sm:$0xf]
      %v196 = vld [vmem:[%s1 + $0x8] sm:$0xf]
      %v197 = vld [vmem:[%s1 + $0xc] sm:$0xf]
      %v198 = vld [vmem:[%s1 + $0x10] sm:$0xf]
      %v199 = vld [vmem:[%s1 + $0x14] sm:$0xf]
      %v200 = vld [vmem:[%s1 + $0x18] sm:$0xf]
      %v201 = vld [vmem:[%s1 + $0x1c] sm:$0xf]
      %v202 = vld [vmem:[%s1 + $0x20] sm:$0xf]
      %v203 = vld [vmem:[%s1 + $0x24] sm:$0xf]
      %v204 = vld [vmem:[%s1 + $0x28] sm:$0xf]
      %v205 = vld [vmem:[%s1 + $0x2c] sm:$0xf]
      %v206 = vld [vmem:[%s1 + $0x30] sm:$0xf]
      %v207 = vld [vmem:[%s1 + $0x34] sm:$0xf]
      %v208 = vld [vmem:[%s1 + $0x38] sm:$0xf]
      %v209 = vld [vmem:[%s1 + $0x3c] sm:$0xf]
      %v210 = vld [vmem:[%s1 + $0x40] sm:$0xf]
      %v211 = vld [vmem:[%s1 + $0x44] sm:$0xf]
      %v212 = vld [vmem:[%s1 + $0x48] sm:$0xf]
      %v213 = vld [vmem:[%s1 + $0x4c] sm:$0xf]
      %v214 = vld [vmem:[%s1 + $0x50] sm:$0xf]
      %v215 = vld [vmem:[%s1 + $0x54] sm:$0xf]
      %v216 = vld [vmem:[%s1 + $0x58] sm:$0xf]
      %v217 = vld [vmem:[%s1 + $0x5c] sm:$0xf]
      %v218 = vld [vmem:[%s1 + $0x60] sm:$0xf]
      %v219 = vld [vmem:[%s1 + $0x64] sm:$0xf]
      %v220 = vld [vmem:[%s1 + $0x68] sm:$0xf]
      %v221 = vld [vmem:[%s1 + $0x6c] sm:$0xf]
      %v222 = vld [vmem:[%s1 + $0x70] sm:$0xf]
      %v223 = vld [vmem:[%s1 + $0x74] sm:$0xf]
      %v224 = vld [vmem:[%s1 + $0x78] sm:$0xf]
      %v225 = vld [vmem:[%s1 + $0x7c] sm:$0xf]
      %v226 = vld [vmem:[%s1 + $0x80] sm:$0xf]
      %v227 = vld [vmem:[%s1 + $0x84] sm:$0xf]
      %v228 = vld [vmem:[%s1 + $0x88] sm:$0xf]
      %v229 = vld [vmem:[%s1 + $0x8c] sm:$0xf]
      %v230 = vld [vmem:[%s1 + $0x90] sm:$0xf]
      %v231 = vld [vmem:[%s1 + $0x94] sm:$0xf]
      %v232 = vld [vmem:[%s1 + $0x98] sm:$0xf]
      %v233 = vld [vmem:[%s1 + $0x9c] sm:$0xf]
      %v234 = vld [vmem:[%s1 + $0xa0] sm:$0xf]
      %v235 = vld [vmem:[%s1 + $0xa4] sm:$0xf]
      %v236 = vld [vmem:[%s1 + $0xa8] sm:$0xf]
      %v237 = vld [vmem:[%s1 + $0xac] sm:$0xf]
      %v238 = vld [vmem:[%s1 + $0xb0] sm:$0xf]
      %v239 = vld [vmem:[%s1 + $0xb4] sm:$0xf]
      %v240 = vld [vmem:[%s1 + $0xb8] sm:$0xf]
      %v241 = vld [vmem:[%s1 + $0xbc] sm:$0xf]
      %v242 = vld [vmem:[%s2] sm:$0x1]
      %v244 = vlaneseq
      %v245 = vshrl.u32 %v244, 7
      %v246 = vsub.s32 0, %v245
      %v247 = vrot.slane %v242, %v246
      %v265 = vunpack.c.l.b16 %v178
      %v266 = vunpack.c.h.b16 %v178
      %v267 = vunpack.c.l.b16 %v179
      %v268 = vunpack.c.l.b16 %v180
      %v269 = vunpack.c.h.b16 %v180
      %v270 = vunpack.c.l.b16 %v181
      %v271 = vunpack.c.l.b16 %v182
      %v272 = vunpack.c.h.b16 %v182
      %v273 = vunpack.c.l.b16 %v183
      %v274 = vunpack.c.l.b16 %v184
      %v275 = vunpack.c.h.b16 %v184
      %v276 = vunpack.c.l.b16 %v185
      %v277 = vunpack.c.l.b16 %v186
      %v278 = vunpack.c.h.b16 %v186
      %v279 = vunpack.c.l.b16 %v187
      %v280 = vunpack.c.l.b16 %v188
      %v281 = vunpack.c.h.b16 %v188
      %v282 = vunpack.c.l.b16 %v189
      %v283 = vunpack.c.l.b16 %v190
      %v284 = vunpack.c.h.b16 %v190
      %v285 = vunpack.c.l.b16 %v191
      %v286 = vunpack.c.l.b16 %v192
      %v287 = vunpack.c.h.b16 %v192
      %v288 = vunpack.c.l.b16 %v193
      %v289 = vpack.c.b16 %v268, %v265
      %v290 = vpack.c.b16 %v269, %v266
      %v291 = vpack.c.b16 %v270, %v267
      %v292 = vpack.c.b16 %v274, %v271
      %v293 = vpack.c.b16 %v275, %v272
      %v294 = vpack.c.b16 %v276, %v273
      %v295 = vpack.c.b16 %v280, %v277
      %v296 = vpack.c.b16 %v281, %v278
      %v297 = vpack.c.b16 %v282, %v279
      %v298 = vpack.c.b16 %v286, %v283
      %v299 = vpack.c.b16 %v287, %v284
      %v300 = vpack.c.b16 %v288, %v285
      %v361 = vunpack.c.l.b16 %v194
      %v362 = vunpack.c.l.b16 %v195
      %v363 = vunpack.c.l.b16 %v196
      %v364 = vunpack.c.l.b16 %v197
      %v365 = vunpack.c.l.b16 %v198
      %v366 = vunpack.c.l.b16 %v199
      %v367 = vunpack.c.l.b16 %v200
      %v368 = vunpack.c.l.b16 %v201
      %v369 = vunpack.c.l.b16 %v202
      %v370 = vunpack.c.l.b16 %v203
      %v371 = vunpack.c.l.b16 %v204
      %v372 = vunpack.c.l.b16 %v205
      %v373 = vunpack.c.l.b16 %v206
      %v374 = vunpack.c.l.b16 %v207
      %v375 = vunpack.c.l.b16 %v208
      %v376 = vunpack.c.l.b16 %v209
      %v377 = vunpack.c.l.b16 %v210
      %v378 = vunpack.c.l.b16 %v211
      %v379 = vunpack.c.l.b16 %v212
      %v380 = vunpack.c.l.b16 %v213
      %v381 = vunpack.c.l.b16 %v214
      %v382 = vunpack.c.l.b16 %v215
      %v383 = vunpack.c.l.b16 %v216
      %v384 = vunpack.c.l.b16 %v217
      %v385 = vunpack.c.l.b16 %v218
      %v386 = vunpack.c.l.b16 %v219
      %v387 = vunpack.c.l.b16 %v220
      %v388 = vunpack.c.l.b16 %v221
      %v389 = vunpack.c.l.b16 %v222
      %v390 = vunpack.c.l.b16 %v223
      %v391 = vunpack.c.l.b16 %v224
      %v392 = vunpack.c.l.b16 %v225
      %v393 = vunpack.c.l.b16 %v226
      %v394 = vunpack.c.l.b16 %v227
      %v395 = vunpack.c.l.b16 %v228
      %v396 = vunpack.c.l.b16 %v229
      %v397 = vunpack.c.l.b16 %v230
      %v398 = vunpack.c.l.b16 %v231
      %v399 = vunpack.c.l.b16 %v232
      %v400 = vunpack.c.l.b16 %v233
      %v401 = vunpack.c.l.b16 %v234
      %v402 = vunpack.c.l.b16 %v235
      %v403 = vunpack.c.l.b16 %v236
      %v404 = vunpack.c.l.b16 %v237
      %v405 = vunpack.c.l.b16 %v238
      %v406 = vunpack.c.l.b16 %v239
      %v407 = vunpack.c.l.b16 %v240
      %v408 = vunpack.c.l.b16 %v241
      %v409 = vpack.c.b16 %v362, %v361
      %v410 = vpack.c.b16 %v364, %v363
      %v411 = vpack.c.b16 %v366, %v365
      %v412 = vpack.c.b16 %v368, %v367
      %v413 = vpack.c.b16 %v370, %v369
      %v414 = vpack.c.b16 %v372, %v371
      %v415 = vpack.c.b16 %v374, %v373
      %v416 = vpack.c.b16 %v376, %v375
      %v417 = vpack.c.b16 %v378, %v377
      %v418 = vpack.c.b16 %v380, %v379
      %v419 = vpack.c.b16 %v382, %v381
      %v420 = vpack.c.b16 %v384, %v383
      %v421 = vpack.c.b16 %v386, %v385
      %v422 = vpack.c.b16 %v388, %v387
      %v423 = vpack.c.b16 %v390, %v389
      %v424 = vpack.c.b16 %v392, %v391
      %v425 = vpack.c.b16 %v394, %v393
      %v426 = vpack.c.b16 %v396, %v395
      %v427 = vpack.c.b16 %v398, %v397
      %v428 = vpack.c.b16 %v400, %v399
      %v429 = vpack.c.b16 %v402, %v401
      %v430 = vpack.c.b16 %v404, %v403
      %v431 = vpack.c.b16 %v406, %v405
      %v432 = vpack.c.b16 %v408, %v407
      %457 = vmatprep.subr.bf16.mxu0 0
      %458 = vmatpush1.bf16.msra.mxu0 %v409
      %459 = vmatprep.subr.bf16.mxu0 0
      %460 = vmatpush1.bf16.msra.mxu0 %v410
      %461 = vmatprep.subr.bf16.mxu0 0
      %462 = vmatpush1.bf16.msra.mxu0 %v411
      %463 = vmatprep.subr.bf16.mxu0 0
      %464 = vmatpush1.bf16.msra.mxu0 %v412
      %465 = vmatprep.subr.bf16.mxu0 0
      %466 = vmatpush1.bf16.msra.mxu0 %v413
      %467 = vmatprep.subr.bf16.mxu0 0
      %468 = vmatpush1.bf16.msra.mxu0 %v414
      %469 = vmatprep.subr.bf16.mxu0 0
      %470 = vmatpush1.bf16.msra.mxu0 %v415
      %471 = vmatprep.subr.bf16.mxu0 0
      %472 = vmatpush1.bf16.msra.mxu0 %v416
      %473 = vmatprep.subr.bf16.mxu0 0
      %474 = vmatpush1.bf16.msra.mxu0 %v417
      %475 = vmatprep.subr.bf16.mxu0 0
      %476 = vmatpush1.bf16.msra.mxu0 %v418
      %477 = vmatprep.subr.bf16.mxu0 0
      %478 = vmatpush1.bf16.msra.mxu0 %v419
      %479 = vmatprep.subr.bf16.mxu0 0
      %480 = vmatpush1.bf16.msra.mxu0 %v420
      %481 = vmatprep.subr.bf16.mxu0 0
      %482 = vmatpush1.bf16.msra.mxu0 %v421
      %483 = vmatprep.subr.bf16.mxu0 0
      %484 = vmatpush1.bf16.msra.mxu0 %v422
      %485 = vmatprep.subr.bf16.mxu0 0
      %486 = vmatpush1.bf16.msra.mxu0 %v423
      %487 = vmatprep.subr.bf16.mxu0 0
      %488 = vmatpush1.bf16.msra.mxu0 %v424
      %489 = vmatprep.mubr.bf16.mxu0 %v290
      %490 = vmatmul.mubr.bf16.gmra.mrb[0].mxu0 %v289
      %v491 = vpop.f32.mrb[0].mxu0
      %v492 = vadd.f32 %v247, %v491
      %v493 = vpop.f32.mrb[0].mxu0
      %v494 = vpop.f32.mrb[0].mxu0
      %v495 = vadd.f32 %v247, %v494
      %v496 = vpop.f32.mrb[0].mxu0
      %497 = vmatprep.mubr.bf16.mxu0 %v293
      %498 = vmatmul.mubr.bf16.gmra.mrb[0].mxu0 %v292
      %v499 = vpop.f32.mrb[0].mxu0
      %v500 = vadd.f32 %v247, %v499
      %v501 = vpop.f32.mrb[0].mxu0
      %v502 = vpop.f32.mrb[0].mxu0
      %v503 = vadd.f32 %v247, %v502
      %v504 = vpop.f32.mrb[0].mxu0
      %505 = vmatprep.mubr.bf16.mxu0 %v296
      %506 = vmatmul.mubr.bf16.gmra.mrb[0].mxu0 %v295
      %v507 = vpop.f32.mrb[0].mxu0
      %v508 = vadd.f32 %v247, %v507
      %v509 = vpop.f32.mrb[0].mxu0
      %v510 = vpop.f32.mrb[0].mxu0
      %v511 = vadd.f32 %v247, %v510
      %v512 = vpop.f32.mrb[0].mxu0
      %513 = vmatprep.mubr.bf16.mxu0 %v299
      %514 = vmatmul.mubr.bf16.gmra.mrb[0].mxu0 %v298
      %v515 = vpop.f32.mrb[0].mxu0
      %v516 = vadd.f32 %v247, %v515
      %v517 = vpop.f32.mrb[0].mxu0
      %v518 = vpop.f32.mrb[0].mxu0
      %v519 = vadd.f32 %v247, %v518
      %v520 = vpop.f32.mrb[0].mxu0
      %521 = vdwg.mxu0
      %522 = vmatprep.subr.bf16.mxu0 0
      %523 = vmatpush1.bf16.msra.mxu0 %v425
      %524 = vmatprep.subr.bf16.mxu0 0
      %525 = vmatpush1.bf16.msra.mxu0 %v426
      %526 = vmatprep.subr.bf16.mxu0 0
      %527 = vmatpush1.bf16.msra.mxu0 %v427
      %528 = vmatprep.subr.bf16.mxu0 0
      %529 = vmatpush1.bf16.msra.mxu0 %v428
      %530 = vmatprep.subr.bf16.mxu0 0
      %531 = vmatpush1.bf16.msra.mxu0 %v429
      %532 = vmatprep.subr.bf16.mxu0 0
      %533 = vmatpush1.bf16.msra.mxu0 %v430
      %534 = vmatprep.subr.bf16.mxu0 0
      %535 = vmatpush1.bf16.msra.mxu0 %v431
      %536 = vmatprep.subr.bf16.mxu0 0
      %537 = vmatpush1.bf16.msra.mxu0 %v432
      %538 = vmatprep.subr.bf16.mxu0 0
      %539 = vmatpush1.bf16.msra.mxu0 0
      %540 = vmatprep.subr.bf16.mxu0 0
      %541 = vmatpush1.bf16.msra.mxu0 0
      %542 = vmatprep.subr.bf16.mxu0 0
      %543 = vmatpush1.bf16.msra.mxu0 0
      %544 = vmatprep.subr.bf16.mxu0 0
      %545 = vmatpush1.bf16.msra.mxu0 0
      %546 = vmatprep.subr.bf16.mxu0 0
      %547 = vmatpush1.bf16.msra.mxu0 0
      %548 = vmatprep.subr.bf16.mxu0 0
      %549 = vmatpush1.bf16.msra.mxu0 0
      %550 = vmatprep.subr.bf16.mxu0 0
      %551 = vmatpush1.bf16.msra.mxu0 0
      %552 = vmatprep.subr.bf16.mxu0 0
      %553 = vmatpush1.bf16.msra.mxu0 0
      %554 = vmatprep.mubr.bf16.mxu0 0
      %555 = vmatmul.mubr.bf16.gmra.mrb[0].mxu0 %v291
      %v556 = vpop.f32.mrb[0].mxu0
      %v557 = vadd.f32 %v492, %v556
      %v558 = vpop.f32.mrb[0].mxu0
      %v559 = vpop.f32.mrb[0].mxu0
      %v560 = vadd.f32 %v495, %v559
      %v561 = vpop.f32.mrb[0].mxu0
      %562 = vmatprep.mubr.bf16.mxu0 0
      %563 = vmatmul.mubr.bf16.gmra.mrb[0].mxu0 %v294
      %v564 = vpop.f32.mrb[0].mxu0
      %v565 = vadd.f32 %v500, %v564
      %v566 = vpop.f32.mrb[0].mxu0
      %v567 = vpop.f32.mrb[0].mxu0
      %v568 = vadd.f32 %v503, %v567
      %v569 = vpop.f32.mrb[0].mxu0
      %570 = vmatprep.mubr.bf16.mxu0 0
      %571 = vmatmul.mubr.bf16.gmra.mrb[0].mxu0 %v297
      %v572 = vpop.f32.mrb[0].mxu0
      %v573 = vadd.f32 %v508, %v572
      %v574 = vpop.f32.mrb[0].mxu0
      %v575 = vpop.f32.mrb[0].mxu0
      %v576 = vadd.f32 %v511, %v575
      %v577 = vpop.f32.mrb[0].mxu0
      %578 = vmatprep.mubr.bf16.mxu0 0
      %579 = vmatmul.mubr.bf16.gmra.mrb[0].mxu0 %v300
      %v580 = vpop.f32.mrb[0].mxu0
      %v581 = vadd.f32 %v516, %v580
      %v582 = vpop.f32.mrb[0].mxu0
      %v583 = vpop.f32.mrb[0].mxu0
      %v584 = vadd.f32 %v519, %v583
      %v585 = vpop.f32.mrb[0].mxu0
      %586 = vdwg.mxu0
      %v587 = vmax.f32 %v557, 0.0
      %v588 = vmax.f32 %v560, 0.0
      %v589 = vmax.f32 %v565, 0.0
      %v590 = vmax.f32 %v568, 0.0
      %v591 = vmax.f32 %v573, 0.0
      %v592 = vmax.f32 %v576, 0.0
      %v593 = vmax.f32 %v581, 0.0
      %v594 = vmax.f32 %v584, 0.0
      %v595 = vpack.c.bf16 %v588, %v587
      %v596 = vpack.c.bf16 %v590, %v589
      %v597 = vpack.c.bf16 %v592, %v591
      %v598 = vpack.c.bf16 %v594, %v593
      %v603 = vunpack.c.l.b16 %v595
      %v604 = vunpack.c.h.b16 %v595
      %v605 = vunpack.c.l.b16 %v596
      %v606 = vunpack.c.h.b16 %v596
      %v607 = vunpack.c.l.b16 %v597
      %v608 = vunpack.c.h.b16 %v597
      %v609 = vunpack.c.l.b16 %v598
      %v610 = vunpack.c.h.b16 %v598
      %v611 = vpack.c.b16 %v603, %v603
      %v612 = vpack.c.b16 %v604, %v604
      %v613 = vpack.c.b16 %v605, %v605
      %v614 = vpack.c.b16 %v606, %v606
      %v615 = vpack.c.b16 %v607, %v607
      %v616 = vpack.c.b16 %v608, %v608
      %v617 = vpack.c.b16 %v609, %v609
      %v618 = vpack.c.b16 %v610, %v610
      %vm627 = vcmask 125952
      %628 = vst.msk [vmem:[%s175] sm:$0xf] %vm627, %v611
      %629 = vst.msk [vmem:[%s175 + $0x4] sm:$0xf] %vm627, %v612
      %630 = vst.msk [vmem:[%s175 + $0x8] sm:$0xf] %vm627, %v613
      %631 = vst.msk [vmem:[%s175 + $0xc] sm:$0xf] %vm627, %v614
      %632 = vst.msk [vmem:[%s175 + $0x10] sm:$0xf] %vm627, %v615
      %633 = vst.msk [vmem:[%s175 + $0x14] sm:$0xf] %vm627, %v616
      %634 = vst.msk [vmem:[%s175 + $0x18] sm:$0xf] %vm627, %v617
      %635 = vst.msk [vmem:[%s175 + $0x1c] sm:$0xf] %vm627, %v618
      %s636 = smul.u32 8, %s14
      %p637 = scmp.lt.s32.totalorder %s636, 15
      %s638 = scalar_select %p637, %s636, 15
      %s639 = smul.addr %s638, 4
      %s640 = scalar_lea.vmem %s3, %s639
      // Predicated region
      $region33: #{run.16} parent=31 // pred_check
        %p641 = pneg %p100
      $region34: #{run.16} parent=31 // pred_check_branch
        %643 = sbr.rel (%p641) target = $region36
      $region35: #{run.16} parent=31 // pred_region
        %s644 = smul.u32 8, %s14
      $region36: #{run.16} parent=31 // pred_fallthru
        _
    $region32: #{run.16} parent=5 // pred_fallthru
      _
    %p645 = scmp.le.s32.totalorder 2, %s9
    // Predicated region
    $region37: #{run.16} parent=5 // pred_check
      %p646 = pneg %p645
    $region38: #{run.16} parent=5 // pred_check_branch
      %648 = sbr.rel (%p646) target = $region40
    $region39: #{run.16} parent=5 // pred_region
      %s649 = ssub.s32 %s9, 2
      // Predicated region
      $region41: #{run.16} parent=39 // pred_check
        %p650 = pneg %p106
      $region42: #{run.16} parent=39 // pred_check_branch
        %652 = sbr.rel (%p650) target = $region44
      $region43: #{run.16} parent=39 // pred_region
        %s653 = smul.u32 8, %s15
        %p654 = scmp.lt.s32.totalorder %s653, 15
        %s655 = scalar_select %p654, %s653, 15
        %s656 = smul.addr %s655, 4
        %s657 = scalar_lea.vmem %s3, %s656
      $region44: #{run.16} parent=39 // pred_fallthru
        _
    $region40: #{run.16} parent=5 // pred_fallthru
      _
  $region6: #{run.16} parent=0 // loop_footer
    %s13 = sadd.s32 1, %s9
  $region7: #{run.16} parent=0 // loop_footer_branch
    %8 = sbr.rel target = $region3
  $region8: #{run.16} parent=0 // loop_exit
    _

// kernel: squeeze.10
$region0: #{squeeze.10}
  %s0 = inlined_call_operand.vmem [shape: f32[2,128], index: 0, kind: input, shape index: {}]
  %s1 = inlined_call_operand.vmem [shape: f32[2,8,16], index: 1, kind: output, shape index: {}]
  $region1: #{squeeze.10} parent=0
    #allocation0 [shape = 'u8[4096]{0}', space=vmem, size = 0x1000, scoped, tag = 'scoped mem for input reshape']
    %s3 = sshllo.u32 0, 2
    %v4 = vld [vmem:[%s0] sm:%s3]
    %5 = vst [vmem:[#allocation0] sm:%s3] %v4
    %v6 = vld [vmem:[#allocation0] sm:$0x3]
    %vm7 = vcmask 130048
    %8 = vst.msk [vmem:[%s1] ss:$8 sm:$0x3] %vm7, %v6
    %v9 = vld [vmem:[#allocation0] sm:$0x3]
    %10 = vrot.lane.b32.xlu0 %v9, 112
    %v11 = vpop.permute.xlu0 %10
    %vm12 = vcmask 130048
    %s13 = scalar_lea.vmem %s1, 1
    %14 = vst.msk [vmem:[%s13] ss:$8 sm:$0x3] %vm12, %v11
    %v15 = vld [vmem:[#allocation0] sm:$0x3]
    %16 = vrot.lane.b32.xlu0 %v15, 96
    %v17 = vpop.permute.xlu0 %16
    %vm18 = vcmask 130048
    %s19 = scalar_lea.vmem %s1, 2
    %20 = vst.msk [vmem:[%s19] ss:$8 sm:$0x3] %vm18, %v17
    %v21 = vld [vmem:[#allocation0] sm:$0x3]
    %22 = vrot.lane.b32.xlu0 %v21, 80
    %v23 = vpop.permute.xlu0 %22
    %vm24 = vcmask 130048
    %s25 = scalar_lea.vmem %s1, 3
    %26 = vst.msk [vmem:[%s25] ss:$8 sm:$0x3] %vm24, %v23
    %v27 = vld [vmem:[#allocation0] sm:$0x3]
    %28 = vrot.lane.b32.xlu0 %v27, 64
    %v29 = vpop.permute.xlu0 %28
    %vm30 = vcmask 130048
    %s31 = scalar_lea.vmem %s1, 4
    %32 = vst.msk [vmem:[%s31] ss:$8 sm:$0x3] %vm30, %v29
    %v33 = vld [vmem:[#allocation0] sm:$0x3]
    %34 = vrot.lane.b32.xlu0 %v33, 48
    %v35 = vpop.permute.xlu0 %34
    %vm36 = vcmask 130048
    %s37 = scalar_lea.vmem %s1, 5
    %38 = vst.msk [vmem:[%s37] ss:$8 sm:$0x3] %vm36, %v35
    %v39 = vld [vmem:[#allocation0] sm:$0x3]
    %40 = vrot.lane.b32.xlu0 %v39, 32
    %v41 = vpop.permute.xlu0 %40
    %vm42 = vcmask 130048
    %s43 = scalar_lea.vmem %s1, 6
    %44 = vst.msk [vmem:[%s43] ss:$8 sm:$0x3] %vm42, %v41
    %v45 = vld [vmem:[#allocation0] sm:$0x3]
    %46 = vrot.lane.b32.xlu0 %v45, 16
    %v47 = vpop.permute.xlu0 %46
    %vm48 = vcmask 130048
    %s49 = scalar_lea.vmem %s1, 7
    %50 = vst.msk [vmem:[%s49] ss:$8 sm:$0x3] %vm48, %v47

// kernel: run.17
$region0: #{run.17}
  #allocation0 [shape = 'u32[]', space=smem, size = 0x4, offset = 0x4, fixed_abs, tag = 'smem constant byte address 0x4 - core index']
  #allocation1 [shape = 'u32[144,128]{1,0:T(1,128)}', space=vmem, size = 0x12000, scoped, tag = 'internal scratch']
  %s0 = inlined_call_operand.vmem [shape: bf16[2,8,128], index: 0, kind: input, shape index: {}]
  %s1 = inlined_call_operand.vmem [shape: f32[2,1,128], index: 1, kind: input, shape index: {}]
  %s2 = inlined_call_operand.vmem [shape: f32[2,2,128], index: 2, kind: output, shape index: {}]
  %s3 = sld [smem:[#allocation0]]
  $region45: #{run.17} parent=0
    _
  %s5 = ssub.s32 1, %s3
  %s6 = scalar_select 0, %s5, %s3
  loop: start=0, step=1, limit=4
  $region2: #{run.17} parent=0 // loop_pre_header
    _
  $region3: #{run.17} parent=0 // loop_header
    %s8 = sphi 0, %s12
    %p9 = scmp.ge.s32.totalorder %s8, 4
    %s15 = sphi 0, %s27
    %s16 = sphi 0, %s23
    %s17 = sphi 0, %s15
    %s18 = sphi 0, %s16
    %s19 = sphi 0, %s17
    %s20 = sphi 0, %s18
    %s32 = sphi 0, %s34
    %s35 = sphi 0, %s32
    %s36 = sphi 0, %s35
    %s52 = sphi 0, %s36
    %s58 = sphi 0, %s60
    %s61 = sphi 0, %s58
    %s62 = sphi 0, %s61
    %s78 = sphi 0, %s62
    %s84 = sphi 0, %s86
    %s87 = sphi 0, %s84
    %s88 = sphi 0, %s87
    %s104 = sphi 0, %s88
  $region4: #{run.17} parent=0 // loop_header_branch
    %11 = sbr.rel (%p9) target = $region8
  $region5: #{run.17} parent=0 // loop_body
    %s13 = ssub.s32 %s8, 1
    %s14 = ssub.s32 %s8, 2
    %s21 = sadd.s32 1, %s16
    %p22 = scmp.ge.s32.totalorder %s21, 1
    %s23 = scalar_select %p22, 0, %s21
    %s24 = sadd.s32 1, %s15
    %s25 = scalar_select %p22, %s24, %s15
    %p26 = scmp.ge.s32.totalorder %s25, 2
    %s27 = scalar_select %p26, 0, %s25
    %s28 = ssub.s32 %s15, %s27
    %s29 = ssub.s32 %s16, %s23
    %s30 = sor.u32 %s28, %s29
    %p31 = scmp.eq.s32.totalorder %s30, 0
    %s33 = sadd.s32 %s32, 1
    %s34 = scalar_select %p31, %s32, %s33
    %p37 = pneg %p31
    %p38 = scmp.eq.s32.totalorder %s8, 1
    %p39 = por %p37, %p38
    %p40 = scmp.ne.s32.totalorder %s32, %s35
    %p41 = scmp.eq.s32.totalorder %s8, 0
    %p42 = por %p40, %p41
    %p43 = scmp.ne.s32.totalorder %s32, %s35
    %p44 = scmp.eq.s32.totalorder %s13, 1
    %p45 = por %p43, %p44
    %p46 = scmp.ne.s32.totalorder %s35, %s36
    %p47 = scmp.eq.s32.totalorder %s13, 0
    %p48 = por %p46, %p47
    %p49 = scmp.ne.s32.totalorder %s35, %s36
    %p50 = scmp.eq.s32.totalorder %s14, 1
    %p51 = por %p49, %p50
    %p53 = scmp.ne.s32.totalorder %s36, %s52
    %p54 = scmp.eq.s32.totalorder %s14, 0
    %p55 = por %p53, %p54
    %s56 = ssub.s32 %s15, %s27
    %p57 = scmp.eq.s32.totalorder %s56, 0
    %s59 = sadd.s32 %s58, 1
    %s60 = scalar_select %p57, %s58, %s59
    %p63 = pneg %p57
    %p64 = scmp.eq.s32.totalorder %s8, 1
    %p65 = por %p63, %p64
    %p66 = scmp.ne.s32.totalorder %s58, %s61
    %p67 = scmp.eq.s32.totalorder %s8, 0
    %p68 = por %p66, %p67
    %p69 = scmp.ne.s32.totalorder %s58, %s61
    %p70 = scmp.eq.s32.totalorder %s13, 1
    %p71 = por %p69, %p70
    %p72 = scmp.ne.s32.totalorder %s61, %s62
    %p73 = scmp.eq.s32.totalorder %s13, 0
    %p74 = por %p72, %p73
    %p75 = scmp.ne.s32.totalorder %s61, %s62
    %p76 = scmp.eq.s32.totalorder %s14, 1
    %p77 = por %p75, %p76
    %p79 = scmp.ne.s32.totalorder %s62, %s78
    %p80 = scmp.eq.s32.totalorder %s14, 0
    %p81 = por %p79, %p80
    %s82 = ssub.s32 %s15, %s27
    %p83 = scmp.eq.s32.totalorder %s82, 0
    %s85 = sadd.s32 %s84, 1
    %s86 = scalar_select %p83, %s84, %s85
    %p89 = pneg %p83
    %p90 = scmp.eq.s32.totalorder %s8, 1
    %p91 = por %p89, %p90
    %p92 = scmp.ne.s32.totalorder %s84, %s87
    %p93 = scmp.eq.s32.totalorder %s8, 0
    %p94 = por %p92, %p93
    %p95 = scmp.ne.s32.totalorder %s84, %s87
    %p96 = scmp.eq.s32.totalorder %s13, 1
    %p97 = por %p95, %p96
    %p98 = scmp.ne.s32.totalorder %s87, %s88
    %p99 = scmp.eq.s32.totalorder %s13, 0
    %p100 = por %p98, %p99
    %p101 = scmp.ne.s32.totalorder %s87, %s88
    %p102 = scmp.eq.s32.totalorder %s14, 1
    %p103 = por %p101, %p102
    %p105 = scmp.ne.s32.totalorder %s88, %s104
    %p106 = scmp.eq.s32.totalorder %s14, 0
    %p107 = por %p105, %p106
    %p108 = scmp.le.s32.totalorder 1, %s8
    %p109 = scmp.lt.s32.totalorder %s8, 3
    %p110 = pnand %p108, %p109
    %p111 = pneg %p110
    // Predicated region
    $region9: #{run.17} parent=5 // pred_check
      _
    $region10: #{run.17} parent=5 // pred_check_branch
      %113 = sbr.rel (%p110) target = $region12
    $region11: #{run.17} parent=5 // pred_region
      %s114 = ssub.s32 %s8, 1
    $region12: #{run.17} parent=5 // pred_fallthru
      _
    %p115 = scmp.lt.s32.totalorder %s8, 2
    // Predicated region
    $region13: #{run.17} parent=5 // pred_check
      %p116 = pneg %p115
    $region14: #{run.17} parent=5 // pred_check_branch
      %118 = sbr.rel (%p116) target = $region16
    $region15: #{run.17} parent=5 // pred_region
      // Predicated region
      $region17: #{run.17} parent=15 // pred_check
        %p119 = pneg %p42
      $region18: #{run.17} parent=15 // pred_check_branch
        %121 = sbr.rel (%p119) target = $region20
      $region19: #{run.17} parent=15 // pred_region
        %p122 = scmp.lt.s32.totalorder %s15, 1
        %s123 = scalar_select %p122, %s15, 1
        %p124 = scmp.lt.s32.totalorder %s16, 0
        %s125 = scalar_select %p124, %s16, 0
        %s126 = sadd.s32 %s125, %s123
        %s127 = smul.addr %s126, 4
        %s128 = scalar_lea.vmem %s0, %s127
      $region20: #{run.17} parent=15 // pred_fallthru
        _
      // Predicated region
      $region21: #{run.17} parent=15 // pred_check
        %p129 = pneg %p68
      $region22: #{run.17} parent=15 // pred_check_branch
        %131 = sbr.rel (%p129) target = $region24
      $region23: #{run.17} parent=15 // pred_region
        %p132 = scmp.lt.s32.totalorder %s15, 1
        %s133 = scalar_select %p132, %s15, 1
        %s134 = scalar_lea.vmem %s1, %s133
      $region24: #{run.17} parent=15 // pred_fallthru
        _
    $region16: #{run.17} parent=5 // pred_fallthru
      _
    %p135 = scmp.le.s32.totalorder 1, %s8
    %p136 = scmp.lt.s32.totalorder %s8, 3
    %p137 = pnand %p135, %p136
    %p138 = pneg %p137
    // Predicated region
    $region25: #{run.17} parent=5 // pred_check
      _
    $region26: #{run.17} parent=5 // pred_check_branch
      %140 = sbr.rel (%p137) target = $region28
    $region27: #{run.17} parent=5 // pred_region
      %s141 = ssub.s32 %s8, 1
      %p142 = scmp.lt.s32.totalorder %s17, 1
      %s143 = scalar_select %p142, %s17, 1
      %p144 = scmp.lt.s32.totalorder %s18, 0
      %s145 = scalar_select %p144, %s18, 0
      %s146 = sadd.s32 %s145, %s143
      %s147 = smul.addr %s146, 4
      %s148 = scalar_lea.vmem %s0, %s147
      %p149 = pneg %p48
      %p150 = pneg %p45
      %p151 = scmp.lt.s32.totalorder %s17, 1
      %s152 = scalar_select %p151, %s17, 1
      %s153 = scalar_lea.vmem %s1, %s152
      %p154 = pneg %p74
      %p155 = pneg %p71
      %p156 = pneg %p100
      %p157 = pneg %p97
      %p158 = scmp.lt.s32.totalorder %s17, 1
      %s159 = scalar_select %p158, %s17, 1
      %s160 = smul.addr %s159, 2
      %s161 = scalar_lea.vmem %s2, %s160
      %p162 = scmp.lt.s32.totalorder %s17, 1
      %s163 = scalar_select %p162, %s17, 1
      %p164 = scmp.lt.s32.totalorder %s18, 0
      %s165 = scalar_select %p164, %s18, 0
      %s166 = sadd.s32 %s165, %s163
      %s167 = smul.addr %s166, 4
      %s168 = scalar_lea.vmem %s0, %s167
      %p169 = scmp.lt.s32.totalorder %s17, 1
      %s170 = scalar_select %p169, %s17, 1
      %s171 = scalar_lea.vmem %s1, %s170
      %p172 = scmp.lt.s32.totalorder %s17, 1
      %s173 = scalar_select %p172, %s17, 1
      %s174 = smul.addr %s173, 2
      %s175 = scalar_lea.vmem %s2, %s174
      %p176 = scmp.eq.s32.totalorder %s18, 0
      // Predicated region
      $region29: #{run.17} parent=27 // pred_check
        %p177 = pneg %p176
      $region30: #{run.17} parent=27 // pred_check_branch
        %179 = sbr.rel (%p177) target = $region32
      $region31: #{run.17} parent=27 // pred_region
        %180 = vst [vmem:[%s175] sm:$0x3] 0.0
      $region32: #{run.17} parent=27 // pred_fallthru
        _
      %v181 = vld [vmem:[%s168] sm:$0xf]
      %v182 = vunpack.c.l.bf16 %v181
      %v183 = vld [vmem:[%s171] sm:$0x1]
      %v185 = vlaneseq
      %v186 = vshrl.u32 %v185, 7
      %v187 = vsub.s32 0, %v186
      %v188 = vrot.slane %v183, %v187
      %v190 = vsub.f32 %v182, %v188
      %v191 = vrot.slane %v190, 4
      %v192 = vadd.f32 %v190, %v191
      %v193 = vrot.slane %v192, 2
      %v194 = vadd.f32 %v192, %v193
      %v195 = vrot.slane %v194, 1
      %v196 = vadd.f32 %v194, %v195
      %v197 = vmul.f32 %v190, %v190
      %v198 = vrot.slane %v197, 4
      %v199 = vadd.f32 %v197, %v198
      %v200 = vrot.slane %v199, 2
      %v201 = vadd.f32 %v199, %v200
      %v202 = vrot.slane %v201, 1
      %v203 = vadd.f32 %v201, %v202
      %v204 = vld [vmem:[%s175] sm:$0x3]
      %vm205 = vcmask 1040384
      %v206 = vsel %vm205, %v196, %v203
      %v207 = vadd.f32 %v204, %v206
      %208 = vst [vmem:[%s175] sm:$0x3] %v207
      %p209 = scmp.lt.s32.totalorder %s17, 1
      %s210 = scalar_select %p209, %s17, 1
      %s211 = smul.addr %s210, 2
      %s212 = scalar_lea.vmem %s2, %s211
      // Predicated region
      $region33: #{run.17} parent=27 // pred_check
        %p213 = pneg %p97
      $region34: #{run.17} parent=27 // pred_check_branch
        %215 = sbr.rel (%p213) target = $region36
      $region35: #{run.17} parent=27 // pred_region
        _
      $region36: #{run.17} parent=27 // pred_fallthru
        _
    $region28: #{run.17} parent=5 // pred_fallthru
      _
    %p216 = scmp.le.s32.totalorder 2, %s8
    // Predicated region
    $region37: #{run.17} parent=5 // pred_check
      %p217 = pneg %p216
    $region38: #{run.17} parent=5 // pred_check_branch
      %219 = sbr.rel (%p217) target = $region40
    $region39: #{run.17} parent=5 // pred_region
      %s220 = ssub.s32 %s8, 2
      // Predicated region
      $region41: #{run.17} parent=39 // pred_check
        %p221 = pneg %p103
      $region42: #{run.17} parent=39 // pred_check_branch
        %223 = sbr.rel (%p221) target = $region44
      $region43: #{run.17} parent=39 // pred_region
        %p224 = scmp.lt.s32.totalorder %s19, 1
        %s225 = scalar_select %p224, %s19, 1
        %s226 = smul.addr %s225, 2
        %s227 = scalar_lea.vmem %s2, %s226
      $region44: #{run.17} parent=39 // pred_fallthru
        _
    $region40: #{run.17} parent=5 // pred_fallthru
      _
  $region6: #{run.17} parent=0 // loop_footer
    %s12 = sadd.s32 1, %s8
  $region7: #{run.17} parent=0 // loop_footer_branch
    %7 = sbr.rel target = $region3
  $region8: #{run.17} parent=0 // loop_exit
    _

// kernel: run.19
$region0: #{run.19}
  #allocation0 [shape = 'u32[]', space=smem, size = 0x4, offset = 0x4, fixed_abs, tag = 'smem constant byte address 0x4 - core index']
  #allocation1 [shape = 'u32[144,128]{1,0:T(1,128)}', space=vmem, size = 0x12000, scoped, tag = 'internal scratch']
  %s0 = inlined_call_operand.vmem [shape: bf16[512,256], index: 0, kind: input, shape index: {}]
  %s1 = inlined_call_operand.vmem [shape: bf16[256,3], index: 1, kind: input, shape index: {}]
  %s2 = inlined_call_operand.vmem [shape: f32[1,3], index: 2, kind: input, shape index: {}]
  %s3 = inlined_call_operand.vmem [shape: bf16[512,3], index: 3, kind: output, shape index: {}]
  %s4 = sld [smem:[#allocation0]]
  $region45: #{run.19} parent=0
    _
  %s6 = ssub.s32 1, %s4
  %s7 = scalar_select 0, %s6, %s4
  loop: start=0, step=1, limit=4
  $region2: #{run.19} parent=0 // loop_pre_header
    _
  $region3: #{run.19} parent=0 // loop_header
    %s9 = sphi 0, %s13
    %p10 = scmp.ge.s32.totalorder %s9, 4
    %s19 = sphi 0, %s21
    %s22 = sphi 0, %s19
    %s23 = sphi 0, %s22
    %s39 = sphi 0, %s23
    %s43 = sphi 0, %s43
    %s45 = sphi 0, %s43
    %s46 = sphi 0, %s45
    %s60 = sphi 0, %s46
    %s64 = sphi 0, %s64
    %s66 = sphi 0, %s64
    %s67 = sphi 0, %s66
    %s81 = sphi 0, %s67
    %s87 = sphi 0, %s89
    %s90 = sphi 0, %s87
    %s91 = sphi 0, %s90
    %s107 = sphi 0, %s91
  $region4: #{run.19} parent=0 // loop_header_branch
    %12 = sbr.rel (%p10) target = $region8
  $region5: #{run.19} parent=0 // loop_body
    %s14 = ssub.s32 %s9, 1
    %s15 = ssub.s32 %s9, 2
    %s16 = sadd.s32 %s9, 1
    %s17 = ssub.s32 %s9, %s16
    %p18 = scmp.eq.s32.totalorder %s17, 0
    %s20 = sadd.s32 %s19, 1
    %s21 = scalar_select %p18, %s19, %s20
    %p24 = pneg %p18
    %p25 = scmp.eq.s32.totalorder %s9, 1
    %p26 = por %p24, %p25
    %p27 = scmp.ne.s32.totalorder %s19, %s22
    %p28 = scmp.eq.s32.totalorder %s9, 0
    %p29 = por %p27, %p28
    %p30 = scmp.ne.s32.totalorder %s19, %s22
    %p31 = scmp.eq.s32.totalorder %s14, 1
    %p32 = por %p30, %p31
    %p33 = scmp.ne.s32.totalorder %s22, %s23
    %p34 = scmp.eq.s32.totalorder %s14, 0
    %p35 = por %p33, %p34
    %p36 = scmp.ne.s32.totalorder %s22, %s23
    %p37 = scmp.eq.s32.totalorder %s15, 1
    %p38 = por %p36, %p37
    %p40 = scmp.ne.s32.totalorder %s23, %s39
    %p41 = scmp.eq.s32.totalorder %s15, 0
    %p42 = por %p40, %p41
    %s44 = sadd.s32 %s43, 1
    %p47 = scmp.eq.s32.totalorder %s9, 1
    %p48 = scmp.ne.s32.totalorder %s43, %s45
    %p49 = scmp.eq.s32.totalorder %s9, 0
    %p50 = por %p48, %p49
    %p51 = scmp.ne.s32.totalorder %s43, %s45
    %p52 = scmp.eq.s32.totalorder %s14, 1
    %p53 = por %p51, %p52
    %p54 = scmp.ne.s32.totalorder %s45, %s46
    %p55 = scmp.eq.s32.totalorder %s14, 0
    %p56 = por %p54, %p55
    %p57 = scmp.ne.s32.totalorder %s45, %s46
    %p58 = scmp.eq.s32.totalorder %s15, 1
    %p59 = por %p57, %p58
    %p61 = scmp.ne.s32.totalorder %s46, %s60
    %p62 = scmp.eq.s32.totalorder %s15, 0
    %p63 = por %p61, %p62
    %s65 = sadd.s32 %s64, 1
    %p68 = scmp.eq.s32.totalorder %s9, 1
    %p69 = scmp.ne.s32.totalorder %s64, %s66
    %p70 = scmp.eq.s32.totalorder %s9, 0
    %p71 = por %p69, %p70
    %p72 = scmp.ne.s32.totalorder %s64, %s66
    %p73 = scmp.eq.s32.totalorder %s14, 1
    %p74 = por %p72, %p73
    %p75 = scmp.ne.s32.totalorder %s66, %s67
    %p76 = scmp.eq.s32.totalorder %s14, 0
    %p77 = por %p75, %p76
    %p78 = scmp.ne.s32.totalorder %s66, %s67
    %p79 = scmp.eq.s32.totalorder %s15, 1
    %p80 = por %p78, %p79
    %p82 = scmp.ne.s32.totalorder %s67, %s81
    %p83 = scmp.eq.s32.totalorder %s15, 0
    %p84 = por %p82, %p83
    %s85 = ssub.s32 %s9, %s16
    %p86 = scmp.eq.s32.totalorder %s85, 0
    %s88 = sadd.s32 %s87, 1
    %s89 = scalar_select %p86, %s87, %s88
    %p92 = pneg %p86
    %p93 = scmp.eq.s32.totalorder %s9, 1
    %p94 = por %p92, %p93
    %p95 = scmp.ne.s32.totalorder %s87, %s90
    %p96 = scmp.eq.s32.totalorder %s9, 0
    %p97 = por %p95, %p96
    %p98 = scmp.ne.s32.totalorder %s87, %s90
    %p99 = scmp.eq.s32.totalorder %s14, 1
    %p100 = por %p98, %p99
    %p101 = scmp.ne.s32.totalorder %s90, %s91
    %p102 = scmp.eq.s32.totalorder %s14, 0
    %p103 = por %p101, %p102
    %p104 = scmp.ne.s32.totalorder %s90, %s91
    %p105 = scmp.eq.s32.totalorder %s15, 1
    %p106 = por %p104, %p105
    %p108 = scmp.ne.s32.totalorder %s91, %s107
    %p109 = scmp.eq.s32.totalorder %s15, 0
    %p110 = por %p108, %p109
    %p111 = scmp.le.s32.totalorder 1, %s9
    %p112 = scmp.lt.s32.totalorder %s9, 3
    %p113 = pnand %p111, %p112
    %p114 = pneg %p113
    // Predicated region
    $region9: #{run.19} parent=5 // pred_check
      _
    $region10: #{run.19} parent=5 // pred_check_branch
      %116 = sbr.rel (%p113) target = $region12
    $region11: #{run.19} parent=5 // pred_region
      %s117 = ssub.s32 %s9, 1
      // Predicated region
      $region13: #{run.19} parent=11 // pred_check
        %p118 = pneg %p56
      $region14: #{run.19} parent=11 // pred_check_branch
        %120 = sbr.rel (%p118) target = $region16
      $region15: #{run.19} parent=11 // pred_region
        _
      $region16: #{run.19} parent=11 // pred_fallthru
        _
      // Predicated region
      $region17: #{run.19} parent=11 // pred_check
        %p121 = pneg %p77
      $region18: #{run.19} parent=11 // pred_check_branch
        %123 = sbr.rel (%p121) target = $region20
      $region19: #{run.19} parent=11 // pred_region
        _
      $region20: #{run.19} parent=11 // pred_fallthru
        _
    $region12: #{run.19} parent=5 // pred_fallthru
      _
    %p124 = scmp.lt.s32.totalorder %s9, 2
    // Predicated region
    $region21: #{run.19} parent=5 // pred_check
      %p125 = pneg %p124
    $region22: #{run.19} parent=5 // pred_check_branch
      %127 = sbr.rel (%p125) target = $region24
    $region23: #{run.19} parent=5 // pred_region
      // Predicated region
      $region25: #{run.19} parent=23 // pred_check
        %p128 = pneg %p29
      $region26: #{run.19} parent=23 // pred_check_branch
        %130 = sbr.rel (%p128) target = $region28
      $region27: #{run.19} parent=23 // pred_region
        %s131 = smul.u32 32, %s9
        %p132 = scmp.lt.s32.totalorder %s131, 63
        %s133 = scalar_select %p132, %s131, 63
        %s134 = smul.addr %s133, 2
        %s135 = smul.addr %s134, 4
        %s136 = scalar_lea.vmem %s0, %s135
        %s137 = smul.u32 32, %s9
      $region28: #{run.19} parent=23 // pred_fallthru
        _
    $region24: #{run.19} parent=5 // pred_fallthru
      _
    %p138 = scmp.le.s32.totalorder 1, %s9
    %p139 = scmp.lt.s32.totalorder %s9, 3
    %p140 = pnand %p138, %p139
    %p141 = pneg %p140
    // Predicated region
    $region29: #{run.19} parent=5 // pred_check
      _
    $region30: #{run.19} parent=5 // pred_check_branch
      %143 = sbr.rel (%p140) target = $region32
    $region31: #{run.19} parent=5 // pred_region
      %s144 = ssub.s32 %s9, 1
      %s145 = smul.u32 32, %s14
      %p146 = scmp.lt.s32.totalorder %s145, 63
      %s147 = scalar_select %p146, %s145, 63
      %s148 = smul.addr %s147, 2
      %s149 = smul.addr %s148, 4
      %s150 = scalar_lea.vmem %s0, %s149
      %p151 = pneg %p35
      %p152 = pneg %p32
      %p153 = pneg %p56
      %p154 = pneg %p53
      %p155 = pneg %p77
      %p156 = pneg %p74
      %p157 = pneg %p103
      %p158 = pneg %p100
      %s159 = smul.u32 32, %s14
      %p160 = scmp.lt.s32.totalorder %s159, 63
      %s161 = scalar_select %p160, %s159, 63
      %s162 = smul.addr %s161, 4
      %s163 = scalar_lea.vmem %s3, %s162
      %s164 = smul.u32 32, %s14
      %p165 = scmp.lt.s32.totalorder %s164, 63
      %s166 = scalar_select %p165, %s164, 63
      %s167 = smul.addr %s166, 2
      %s168 = smul.addr %s167, 4
      %s169 = scalar_lea.vmem %s0, %s168
      %s170 = smul.u32 32, %s14
      %s171 = smul.u32 32, %s14
      %p172 = scmp.lt.s32.totalorder %s171, 63
      %s173 = scalar_select %p172, %s171, 63
      %s174 = smul.addr %s173, 4
      %s175 = scalar_lea.vmem %s3, %s174
      %s176 = smul.u32 32, %s14
      %v178 = vld [vmem:[%s169] sm:$0xff]
      %v179 = vld [vmem:[%s169 + $0x8] sm:$0xff]
      %v180 = vld [vmem:[%s169 + $0x10] sm:$0xff]
      %v181 = vld [vmem:[%s169 + $0x18] sm:$0xff]
      %v182 = vld [vmem:[%s169 + $0x20] sm:$0xff]
      %v183 = vld [vmem:[%s169 + $0x28] sm:$0xff]
      %v184 = vld [vmem:[%s169 + $0x30] sm:$0xff]
      %v185 = vld [vmem:[%s169 + $0x38] sm:$0xff]
      %v186 = vld [vmem:[%s169 + $0x40] sm:$0xff]
      %v187 = vld [vmem:[%s169 + $0x48] sm:$0xff]
      %v188 = vld [vmem:[%s169 + $0x50] sm:$0xff]
      %v189 = vld [vmem:[%s169 + $0x58] sm:$0xff]
      %v190 = vld [vmem:[%s169 + $0x60] sm:$0xff]
      %v191 = vld [vmem:[%s169 + $0x68] sm:$0xff]
      %v192 = vld [vmem:[%s169 + $0x70] sm:$0xff]
      %v193 = vld [vmem:[%s169 + $0x78] sm:$0xff]
      %v194 = vld [vmem:[%s169 + $0x80] sm:$0xff]
      %v195 = vld [vmem:[%s169 + $0x88] sm:$0xff]
      %v196 = vld [vmem:[%s169 + $0x90] sm:$0xff]
      %v197 = vld [vmem:[%s169 + $0x98] sm:$0xff]
      %v198 = vld [vmem:[%s169 + $0xa0] sm:$0xff]
      %v199 = vld [vmem:[%s169 + $0xa8] sm:$0xff]
      %v200 = vld [vmem:[%s169 + $0xb0] sm:$0xff]
      %v201 = vld [vmem:[%s169 + $0xb8] sm:$0xff]
      %v202 = vld [vmem:[%s169 + $0xc0] sm:$0xff]
      %v203 = vld [vmem:[%s169 + $0xc8] sm:$0xff]
      %v204 = vld [vmem:[%s169 + $0xd0] sm:$0xff]
      %v205 = vld [vmem:[%s169 + $0xd8] sm:$0xff]
      %v206 = vld [vmem:[%s169 + $0xe0] sm:$0xff]
      %v207 = vld [vmem:[%s169 + $0xe8] sm:$0xff]
      %v208 = vld [vmem:[%s169 + $0xf0] sm:$0xff]
      %v209 = vld [vmem:[%s169 + $0xf8] sm:$0xff]
      %v210 = vld [vmem:[%s1] sm:$0xf]
      %v211 = vld [vmem:[%s1 + $0x4] sm:$0xf]
      %v212 = vld [vmem:[%s1 + $0x8] sm:$0xf]
      %v213 = vld [vmem:[%s1 + $0xc] sm:$0xf]
      %v214 = vld [vmem:[%s1 + $0x10] sm:$0xf]
      %v215 = vld [vmem:[%s1 + $0x14] sm:$0xf]
      %v216 = vld [vmem:[%s1 + $0x18] sm:$0xf]
      %v217 = vld [vmem:[%s1 + $0x1c] sm:$0xf]
      %v218 = vld [vmem:[%s1 + $0x20] sm:$0xf]
      %v219 = vld [vmem:[%s1 + $0x24] sm:$0xf]
      %v220 = vld [vmem:[%s1 + $0x28] sm:$0xf]
      %v221 = vld [vmem:[%s1 + $0x2c] sm:$0xf]
      %v222 = vld [vmem:[%s1 + $0x30] sm:$0xf]
      %v223 = vld [vmem:[%s1 + $0x34] sm:$0xf]
      %v224 = vld [vmem:[%s1 + $0x38] sm:$0xf]
      %v225 = vld [vmem:[%s1 + $0x3c] sm:$0xf]
      %v226 = vld [vmem:[%s1 + $0x40] sm:$0xf]
      %v227 = vld [vmem:[%s1 + $0x44] sm:$0xf]
      %v228 = vld [vmem:[%s1 + $0x48] sm:$0xf]
      %v229 = vld [vmem:[%s1 + $0x4c] sm:$0xf]
      %v230 = vld [vmem:[%s1 + $0x50] sm:$0xf]
      %v231 = vld [vmem:[%s1 + $0x54] sm:$0xf]
      %v232 = vld [vmem:[%s1 + $0x58] sm:$0xf]
      %v233 = vld [vmem:[%s1 + $0x5c] sm:$0xf]
      %v234 = vld [vmem:[%s1 + $0x60] sm:$0xf]
      %v235 = vld [vmem:[%s1 + $0x64] sm:$0xf]
      %v236 = vld [vmem:[%s1 + $0x68] sm:$0xf]
      %v237 = vld [vmem:[%s1 + $0x6c] sm:$0xf]
      %v238 = vld [vmem:[%s1 + $0x70] sm:$0xf]
      %v239 = vld [vmem:[%s1 + $0x74] sm:$0xf]
      %v240 = vld [vmem:[%s1 + $0x78] sm:$0xf]
      %v241 = vld [vmem:[%s1 + $0x7c] sm:$0xf]
      %v242 = vld [vmem:[%s2] sm:$0x1]
      %v244 = vlaneseq
      %v245 = vshrl.u32 %v244, 7
      %v246 = vsub.s32 0, %v245
      %v247 = vrot.slane %v242, %v246
      %v281 = vunpack.c.l.b16 %v178
      %v282 = vunpack.c.h.b16 %v178
      %v283 = vunpack.c.l.b16 %v179
      %v284 = vunpack.c.h.b16 %v179
      %v285 = vunpack.c.l.b16 %v180
      %v286 = vunpack.c.h.b16 %v180
      %v287 = vunpack.c.l.b16 %v181
      %v288 = vunpack.c.h.b16 %v181
      %v289 = vunpack.c.l.b16 %v182
      %v290 = vunpack.c.h.b16 %v182
      %v291 = vunpack.c.l.b16 %v183
      %v292 = vunpack.c.h.b16 %v183
      %v293 = vunpack.c.l.b16 %v184
      %v294 = vunpack.c.h.b16 %v184
      %v295 = vunpack.c.l.b16 %v185
      %v296 = vunpack.c.h.b16 %v185
      %v297 = vunpack.c.l.b16 %v186
      %v298 = vunpack.c.h.b16 %v186
      %v299 = vunpack.c.l.b16 %v187
      %v300 = vunpack.c.h.b16 %v187
      %v301 = vunpack.c.l.b16 %v188
      %v302 = vunpack.c.h.b16 %v188
      %v303 = vunpack.c.l.b16 %v189
      %v304 = vunpack.c.h.b16 %v189
      %v305 = vunpack.c.l.b16 %v190
      %v306 = vunpack.c.h.b16 %v190
      %v307 = vunpack.c.l.b16 %v191
      %v308 = vunpack.c.h.b16 %v191
      %v309 = vunpack.c.l.b16 %v192
      %v310 = vunpack.c.h.b16 %v192
      %v311 = vunpack.c.l.b16 %v193
      %v312 = vunpack.c.h.b16 %v193
      %v313 = vunpack.c.l.b16 %v194
      %v314 = vunpack.c.h.b16 %v194
      %v315 = vunpack.c.l.b16 %v195
      %v316 = vunpack.c.h.b16 %v195
      %v317 = vunpack.c.l.b16 %v196
      %v318 = vunpack.c.h.b16 %v196
      %v319 = vunpack.c.l.b16 %v197
      %v320 = vunpack.c.h.b16 %v197
      %v321 = vunpack.c.l.b16 %v198
      %v322 = vunpack.c.h.b16 %v198
      %v323 = vunpack.c.l.b16 %v199
      %v324 = vunpack.c.h.b16 %v199
      %v325 = vunpack.c.l.b16 %v200
      %v326 = vunpack.c.h.b16 %v200
      %v327 = vunpack.c.l.b16 %v201
      %v328 = vunpack.c.h.b16 %v201
      %v329 = vunpack.c.l.b16 %v202
      %v330 = vunpack.c.h.b16 %v202
      %v331 = vunpack.c.l.b16 %v203
      %v332 = vunpack.c.h.b16 %v203
      %v333 = vunpack.c.l.b16 %v204
      %v334 = vunpack.c.h.b16 %v204
      %v335 = vunpack.c.l.b16 %v205
      %v336 = vunpack.c.h.b16 %v205
      %v337 = vunpack.c.l.b16 %v206
      %v338 = vunpack.c.h.b16 %v206
      %v339 = vunpack.c.l.b16 %v207
      %v340 = vunpack.c.h.b16 %v207
      %v341 = vunpack.c.l.b16 %v208
      %v342 = vunpack.c.h.b16 %v208
      %v343 = vunpack.c.l.b16 %v209
      %v344 = vunpack.c.h.b16 %v209
      %v345 = vpack.c.b16 %v283, %v281
      %v346 = vpack.c.b16 %v284, %v282
      %v347 = vpack.c.b16 %v287, %v285
      %v348 = vpack.c.b16 %v288, %v286
      %v349 = vpack.c.b16 %v291, %v289
      %v350 = vpack.c.b16 %v292, %v290
      %v351 = vpack.c.b16 %v295, %v293
      %v352 = vpack.c.b16 %v296, %v294
      %v353 = vpack.c.b16 %v299, %v297
      %v354 = vpack.c.b16 %v300, %v298
      %v355 = vpack.c.b16 %v303, %v301
      %v356 = vpack.c.b16 %v304, %v302
      %v357 = vpack.c.b16 %v307, %v305
      %v358 = vpack.c.b16 %v308, %v306
      %v359 = vpack.c.b16 %v311, %v309
      %v360 = vpack.c.b16 %v312, %v310
      %v361 = vpack.c.b16 %v315, %v313
      %v362 = vpack.c.b16 %v316, %v314
      %v363 = vpack.c.b16 %v319, %v317
      %v364 = vpack.c.b16 %v320, %v318
      %v365 = vpack.c.b16 %v323, %v321
      %v366 = vpack.c.b16 %v324, %v322
      %v367 = vpack.c.b16 %v327, %v325
      %v368 = vpack.c.b16 %v328, %v326
      %v369 = vpack.c.b16 %v331, %v329
      %v370 = vpack.c.b16 %v332, %v330
      %v371 = vpack.c.b16 %v335, %v333
      %v372 = vpack.c.b16 %v336, %v334
      %v373 = vpack.c.b16 %v339, %v337
      %v374 = vpack.c.b16 %v340, %v338
      %v375 = vpack.c.b16 %v343, %v341
      %v376 = vpack.c.b16 %v344, %v342
      %v441 = vunpack.c.l.b16 %v210
      %v442 = vunpack.c.l.b16 %v211
      %v443 = vunpack.c.l.b16 %v212
      %v444 = vunpack.c.l.b16 %v213
      %v445 = vunpack.c.l.b16 %v214
      %v446 = vunpack.c.l.b16 %v215
      %v447 = vunpack.c.l.b16 %v216
      %v448 = vunpack.c.l.b16 %v217
      %v449 = vunpack.c.l.b16 %v218
      %v450 = vunpack.c.l.b16 %v219
      %v451 = vunpack.c.l.b16 %v220
      %v452 = vunpack.c.l.b16 %v221
      %v453 = vunpack.c.l.b16 %v222
      %v454 = vunpack.c.l.b16 %v223
      %v455 = vunpack.c.l.b16 %v224
      %v456 = vunpack.c.l.b16 %v225
      %v457 = vunpack.c.l.b16 %v226
      %v458 = vunpack.c.l.b16 %v227
      %v459 = vunpack.c.l.b16 %v228
      %v460 = vunpack.c.l.b16 %v229
      %v461 = vunpack.c.l.b16 %v230
      %v462 = vunpack.c.l.b16 %v231
      %v463 = vunpack.c.l.b16 %v232
      %v464 = vunpack.c.l.b16 %v233
      %v465 = vunpack.c.l.b16 %v234
      %v466 = vunpack.c.l.b16 %v235
      %v467 = vunpack.c.l.b16 %v236
      %v468 = vunpack.c.l.b16 %v237
      %v469 = vunpack.c.l.b16 %v238
      %v470 = vunpack.c.l.b16 %v239
      %v471 = vunpack.c.l.b16 %v240
      %v472 = vunpack.c.l.b16 %v241
      %v473 = vpack.c.b16 %v442, %v441
      %v474 = vpack.c.b16 %v444, %v443
      %v475 = vpack.c.b16 %v446, %v445
      %v476 = vpack.c.b16 %v448, %v447
      %v477 = vpack.c.b16 %v450, %v449
      %v478 = vpack.c.b16 %v452, %v451
      %v479 = vpack.c.b16 %v454, %v453
      %v480 = vpack.c.b16 %v456, %v455
      %v481 = vpack.c.b16 %v458, %v457
      %v482 = vpack.c.b16 %v460, %v459
      %v483 = vpack.c.b16 %v462, %v461
      %v484 = vpack.c.b16 %v464, %v463
      %v485 = vpack.c.b16 %v466, %v465
      %v486 = vpack.c.b16 %v468, %v467
      %v487 = vpack.c.b16 %v470, %v469
      %v488 = vpack.c.b16 %v472, %v471
      %505 = vmatprep.subr.bf16.mxu0 0
      %506 = vmatpush1.bf16.msra.mxu0 %v473
      %507 = vmatprep.subr.bf16.mxu0 0
      %508 = vmatpush1.bf16.msra.mxu0 %v474
      %509 = vmatprep.subr.bf16.mxu0 0
      %510 = vmatpush1.bf16.msra.mxu0 %v475
      %511 = vmatprep.subr.bf16.mxu0 0
      %512 = vmatpush1.bf16.msra.mxu0 %v476
      %513 = vmatprep.subr.bf16.mxu0 0
      %514 = vmatpush1.bf16.msra.mxu0 %v477
      %515 = vmatprep.subr.bf16.mxu0 0
      %516 = vmatpush1.bf16.msra.mxu0 %v478
      %517 = vmatprep.subr.bf16.mxu0 0
      %518 = vmatpush1.bf16.msra.mxu0 %v479
      %519 = vmatprep.subr.bf16.mxu0 0
      %520 = vmatpush1.bf16.msra.mxu0 %v480
      %521 = vmatprep.subr.bf16.mxu0 0
      %522 = vmatpush1.bf16.msra.mxu0 %v481
      %523 = vmatprep.subr.bf16.mxu0 0
      %524 = vmatpush1.bf16.msra.mxu0 %v482
      %525 = vmatprep.subr.bf16.mxu0 0
      %526 = vmatpush1.bf16.msra.mxu0 %v483
      %527 = vmatprep.subr.bf16.mxu0 0
      %528 = vmatpush1.bf16.msra.mxu0 %v484
      %529 = vmatprep.subr.bf16.mxu0 0
      %530 = vmatpush1.bf16.msra.mxu0 %v485
      %531 = vmatprep.subr.bf16.mxu0 0
      %532 = vmatpush1.bf16.msra.mxu0 %v486
      %533 = vmatprep.subr.bf16.mxu0 0
      %534 = vmatpush1.bf16.msra.mxu0 %v487
      %535 = vmatprep.subr.bf16.mxu0 0
      %536 = vmatpush1.bf16.msra.mxu0 %v488
      %537 = vmatprep.mubr.bf16.mxu0 %v346
      %538 = vmatmul.mubr.bf16.gmra.mrb[0].mxu0 %v345
      %v539 = vpop.f32.mrb[0].mxu0
      %v540 = vadd.f32 %v247, %v539
      %v541 = vpop.f32.mrb[0].mxu0
      %v542 = vpop.f32.mrb[0].mxu0
      %v543 = vadd.f32 %v247, %v542
      %v544 = vpop.f32.mrb[0].mxu0
      %545 = vmatprep.mubr.bf16.mxu0 %v348
      %546 = vmatmul.mubr.bf16.gmra.mrb[0].mxu0 %v347
      %v547 = vpop.f32.mrb[0].mxu0
      %v548 = vadd.f32 %v247, %v547
      %v549 = vpop.f32.mrb[0].mxu0
      %v550 = vpop.f32.mrb[0].mxu0
      %v551 = vadd.f32 %v247, %v550
      %v552 = vpop.f32.mrb[0].mxu0
      %553 = vmatprep.mubr.bf16.mxu0 %v350
      %554 = vmatmul.mubr.bf16.gmra.mrb[0].mxu0 %v349
      %v555 = vpop.f32.mrb[0].mxu0
      %v556 = vadd.f32 %v247, %v555
      %v557 = vpop.f32.mrb[0].mxu0
      %v558 = vpop.f32.mrb[0].mxu0
      %v559 = vadd.f32 %v247, %v558
      %v560 = vpop.f32.mrb[0].mxu0
      %561 = vmatprep.mubr.bf16.mxu0 %v352
      %562 = vmatmul.mubr.bf16.gmra.mrb[0].mxu0 %v351
      %v563 = vpop.f32.mrb[0].mxu0
      %v564 = vadd.f32 %v247, %v563
      %v565 = vpop.f32.mrb[0].mxu0
      %v566 = vpop.f32.mrb[0].mxu0
      %v567 = vadd.f32 %v247, %v566
      %v568 = vpop.f32.mrb[0].mxu0
      %569 = vmatprep.mubr.bf16.mxu0 %v354
      %570 = vmatmul.mubr.bf16.gmra.mrb[0].mxu0 %v353
      %v571 = vpop.f32.mrb[0].mxu0
      %v572 = vadd.f32 %v247, %v571
      %v573 = vpop.f32.mrb[0].mxu0
      %v574 = vpop.f32.mrb[0].mxu0
      %v575 = vadd.f32 %v247, %v574
      %v576 = vpop.f32.mrb[0].mxu0
      %577 = vmatprep.mubr.bf16.mxu0 %v356
      %578 = vmatmul.mubr.bf16.gmra.mrb[0].mxu0 %v355
      %v579 = vpop.f32.mrb[0].mxu0
      %v580 = vadd.f32 %v247, %v579
      %v581 = vpop.f32.mrb[0].mxu0
      %v582 = vpop.f32.mrb[0].mxu0
      %v583 = vadd.f32 %v247, %v582
      %v584 = vpop.f32.mrb[0].mxu0
      %585 = vmatprep.mubr.bf16.mxu0 %v358
      %586 = vmatmul.mubr.bf16.gmra.mrb[0].mxu0 %v357
      %v587 = vpop.f32.mrb[0].mxu0
      %v588 = vadd.f32 %v247, %v587
      %v589 = vpop.f32.mrb[0].mxu0
      %v590 = vpop.f32.mrb[0].mxu0
      %v591 = vadd.f32 %v247, %v590
      %v592 = vpop.f32.mrb[0].mxu0
      %593 = vmatprep.mubr.bf16.mxu0 %v360
      %594 = vmatmul.mubr.bf16.gmra.mrb[0].mxu0 %v359
      %v595 = vpop.f32.mrb[0].mxu0
      %v596 = vadd.f32 %v247, %v595
      %v597 = vpop.f32.mrb[0].mxu0
      %v598 = vpop.f32.mrb[0].mxu0
      %v599 = vadd.f32 %v247, %v598
      %v600 = vpop.f32.mrb[0].mxu0
      %601 = vmatprep.mubr.bf16.mxu0 %v362
      %602 = vmatmul.mubr.bf16.gmra.mrb[0].mxu0 %v361
      %v603 = vpop.f32.mrb[0].mxu0
      %v604 = vadd.f32 %v247, %v603
      %v605 = vpop.f32.mrb[0].mxu0
      %v606 = vpop.f32.mrb[0].mxu0
      %v607 = vadd.f32 %v247, %v606
      %v608 = vpop.f32.mrb[0].mxu0
      %609 = vmatprep.mubr.bf16.mxu0 %v364
      %610 = vmatmul.mubr.bf16.gmra.mrb[0].mxu0 %v363
      %v611 = vpop.f32.mrb[0].mxu0
      %v612 = vadd.f32 %v247, %v611
      %v613 = vpop.f32.mrb[0].mxu0
      %v614 = vpop.f32.mrb[0].mxu0
      %v615 = vadd.f32 %v247, %v614
      %v616 = vpop.f32.mrb[0].mxu0
      %617 = vmatprep.mubr.bf16.mxu0 %v366
      %618 = vmatmul.mubr.bf16.gmra.mrb[0].mxu0 %v365
      %v619 = vpop.f32.mrb[0].mxu0
      %v620 = vadd.f32 %v247, %v619
      %v621 = vpop.f32.mrb[0].mxu0
      %v622 = vpop.f32.mrb[0].mxu0
      %v623 = vadd.f32 %v247, %v622
      %v624 = vpop.f32.mrb[0].mxu0
      %625 = vmatprep.mubr.bf16.mxu0 %v368
      %626 = vmatmul.mubr.bf16.gmra.mrb[0].mxu0 %v367
      %v627 = vpop.f32.mrb[0].mxu0
      %v628 = vadd.f32 %v247, %v627
      %v629 = vpop.f32.mrb[0].mxu0
      %v630 = vpop.f32.mrb[0].mxu0
      %v631 = vadd.f32 %v247, %v630
      %v632 = vpop.f32.mrb[0].mxu0
      %633 = vmatprep.mubr.bf16.mxu0 %v370
      %634 = vmatmul.mubr.bf16.gmra.mrb[0].mxu0 %v369
      %v635 = vpop.f32.mrb[0].mxu0
      %v636 = vadd.f32 %v247, %v635
      %v637 = vpop.f32.mrb[0].mxu0
      %v638 = vpop.f32.mrb[0].mxu0
      %v639 = vadd.f32 %v247, %v638
      %v640 = vpop.f32.mrb[0].mxu0
      %641 = vmatprep.mubr.bf16.mxu0 %v372
      %642 = vmatmul.mubr.bf16.gmra.mrb[0].mxu0 %v371
      %v643 = vpop.f32.mrb[0].mxu0
      %v644 = vadd.f32 %v247, %v643
      %v645 = vpop.f32.mrb[0].mxu0
      %v646 = vpop.f32.mrb[0].mxu0
      %v647 = vadd.f32 %v247, %v646
      %v648 = vpop.f32.mrb[0].mxu0
      %649 = vmatprep.mubr.bf16.mxu0 %v374
      %650 = vmatmul.mubr.bf16.gmra.mrb[0].mxu0 %v373
      %v651 = vpop.f32.mrb[0].mxu0
      %v652 = vadd.f32 %v247, %v651
      %v653 = vpop.f32.mrb[0].mxu0
      %v654 = vpop.f32.mrb[0].mxu0
      %v655 = vadd.f32 %v247, %v654
      %v656 = vpop.f32.mrb[0].mxu0
      %657 = vmatprep.mubr.bf16.mxu0 %v376
      %658 = vmatmul.mubr.bf16.gmra.mrb[0].mxu0 %v375
      %v659 = vpop.f32.mrb[0].mxu0
      %v660 = vadd.f32 %v247, %v659
      %v661 = vpop.f32.mrb[0].mxu0
      %v662 = vpop.f32.mrb[0].mxu0
      %v663 = vadd.f32 %v247, %v662
      %v664 = vpop.f32.mrb[0].mxu0
      %665 = vdwg.mxu0
      %v666 = vtanh.pop %v540
      %v667 = vtanh.pop %v543
      %v668 = vtanh.pop %v548
      %v669 = vtanh.pop %v551
      %v670 = vtanh.pop %v556
      %v671 = vtanh.pop %v559
      %v672 = vtanh.pop %v564
      %v673 = vtanh.pop %v567
      %v674 = vtanh.pop %v572
      %v675 = vtanh.pop %v575
      %v676 = vtanh.pop %v580
      %v677 = vtanh.pop %v583
      %v678 = vtanh.pop %v588
      %v679 = vtanh.pop %v591
      %v680 = vtanh.pop %v596
      %v681 = vtanh.pop %v599
      %v682 = vtanh.pop %v604
      %v683 = vtanh.pop %v607
      %v684 = vtanh.pop %v612
      %v685 = vtanh.pop %v615
      %v686 = vtanh.pop %v620
      %v687 = vtanh.pop %v623
      %v688 = vtanh.pop %v628
      %v689 = vtanh.pop %v631
      %v690 = vtanh.pop %v636
      %v691 = vtanh.pop %v639
      %v692 = vtanh.pop %v644
      %v693 = vtanh.pop %v647
      %v694 = vtanh.pop %v652
      %v695 = vtanh.pop %v655
      %v696 = vtanh.pop %v660
      %v697 = vtanh.pop %v663
      %v698 = vpack.c.bf16 %v667, %v666
      %v699 = vpack.c.bf16 %v669, %v668
      %v700 = vpack.c.bf16 %v671, %v670
      %v701 = vpack.c.bf16 %v673, %v672
      %v702 = vpack.c.bf16 %v675, %v674
      %v703 = vpack.c.bf16 %v677, %v676
      %v704 = vpack.c.bf16 %v679, %v678
      %v705 = vpack.c.bf16 %v681, %v680
      %v706 = vpack.c.bf16 %v683, %v682
      %v707 = vpack.c.bf16 %v685, %v684
      %v708 = vpack.c.bf16 %v687, %v686
      %v709 = vpack.c.bf16 %v689, %v688
      %v710 = vpack.c.bf16 %v691, %v690
      %v711 = vpack.c.bf16 %v693, %v692
      %v712 = vpack.c.bf16 %v695, %v694
      %v713 = vpack.c.bf16 %v697, %v696
      %v730 = vunpack.c.l.b16 %v698
      %v731 = vunpack.c.h.b16 %v698
      %v732 = vunpack.c.l.b16 %v699
      %v733 = vunpack.c.h.b16 %v699
      %v734 = vunpack.c.l.b16 %v700
      %v735 = vunpack.c.h.b16 %v700
      %v736 = vunpack.c.l.b16 %v701
      %v737 = vunpack.c.h.b16 %v701
      %v738 = vunpack.c.l.b16 %v702
      %v739 = vunpack.c.h.b16 %v702
      %v740 = vunpack.c.l.b16 %v703
      %v741 = vunpack.c.h.b16 %v703
      %v742 = vunpack.c.l.b16 %v704
      %v743 = vunpack.c.h.b16 %v704
      %v744 = vunpack.c.l.b16 %v705
      %v745 = vunpack.c.h.b16 %v705
      %v746 = vunpack.c.l.b16 %v706
      %v747 = vunpack.c.h.b16 %v706
      %v748 = vunpack.c.l.b16 %v707
      %v749 = vunpack.c.h.b16 %v707
      %v750 = vunpack.c.l.b16 %v708
      %v751 = vunpack.c.h.b16 %v708
      %v752 = vunpack.c.l.b16 %v709
      %v753 = vunpack.c.h.b16 %v709
      %v754 = vunpack.c.l.b16 %v710
      %v755 = vunpack.c.h.b16 %v710
      %v756 = vunpack.c.l.b16 %v711
      %v757 = vunpack.c.h.b16 %v711
      %v758 = vunpack.c.l.b16 %v712
      %v759 = vunpack.c.h.b16 %v712
      %v760 = vunpack.c.l.b16 %v713
      %v761 = vunpack.c.h.b16 %v713
      %v762 = vpack.c.b16 %v730, %v730
      %v763 = vpack.c.b16 %v731, %v731
      %v764 = vpack.c.b16 %v732, %v732
      %v765 = vpack.c.b16 %v733, %v733
      %v766 = vpack.c.b16 %v734, %v734
      %v767 = vpack.c.b16 %v735, %v735
      %v768 = vpack.c.b16 %v736, %v736
      %v769 = vpack.c.b16 %v737, %v737
      %v770 = vpack.c.b16 %v738, %v738
      %v771 = vpack.c.b16 %v739, %v739
      %v772 = vpack.c.b16 %v740, %v740
      %v773 = vpack.c.b16 %v741, %v741
      %v774 = vpack.c.b16 %v742, %v742
      %v775 = vpack.c.b16 %v743, %v743
      %v776 = vpack.c.b16 %v744, %v744
      %v777 = vpack.c.b16 %v745, %v745
      %v778 = vpack.c.b16 %v746, %v746
      %v779 = vpack.c.b16 %v747, %v747
      %v780 = vpack.c.b16 %v748, %v748
      %v781 = vpack.c.b16 %v749, %v749
      %v782 = vpack.c.b16 %v750, %v750
      %v783 = vpack.c.b16 %v751, %v751
      %v784 = vpack.c.b16 %v752, %v752
      %v785 = vpack.c.b16 %v753, %v753
      %v786 = vpack.c.b16 %v754, %v754
      %v787 = vpack.c.b16 %v755, %v755
      %v788 = vpack.c.b16 %v756, %v756
      %v789 = vpack.c.b16 %v757, %v757
      %v790 = vpack.c.b16 %v758, %v758
      %v791 = vpack.c.b16 %v759, %v759
      %v792 = vpack.c.b16 %v760, %v760
      %v793 = vpack.c.b16 %v761, %v761
      %vm826 = vcmask 19456
      %827 = vst.msk [vmem:[%s175] sm:$0xf] %vm826, %v762
      %828 = vst.msk [vmem:[%s175 + $0x4] sm:$0xf] %vm826, %v763
      %829 = vst.msk [vmem:[%s175 + $0x8] sm:$0xf] %vm826, %v764
      %830 = vst.msk [vmem:[%s175 + $0xc] sm:$0xf] %vm826, %v765
      %831 = vst.msk [vmem:[%s175 + $0x10] sm:$0xf] %vm826, %v766
      %832 = vst.msk [vmem:[%s175 + $0x14] sm:$0xf] %vm826, %v767
      %833 = vst.msk [vmem:[%s175 + $0x18] sm:$0xf] %vm826, %v768
      %834 = vst.msk [vmem:[%s175 + $0x1c] sm:$0xf] %vm826, %v769
      %835 = vst.msk [vmem:[%s175 + $0x20] sm:$0xf] %vm826, %v770
      %836 = vst.msk [vmem:[%s175 + $0x24] sm:$0xf] %vm826, %v771
      %837 = vst.msk [vmem:[%s175 + $0x28] sm:$0xf] %vm826, %v772
      %838 = vst.msk [vmem:[%s175 + $0x2c] sm:$0xf] %vm826, %v773
      %839 = vst.msk [vmem:[%s175 + $0x30] sm:$0xf] %vm826, %v774
      %840 = vst.msk [vmem:[%s175 + $0x34] sm:$0xf] %vm826, %v775
      %841 = vst.msk [vmem:[%s175 + $0x38] sm:$0xf] %vm826, %v776
      %842 = vst.msk [vmem:[%s175 + $0x3c] sm:$0xf] %vm826, %v777
      %843 = vst.msk [vmem:[%s175 + $0x40] sm:$0xf] %vm826, %v778
      %844 = vst.msk [vmem:[%s175 + $0x44] sm:$0xf] %vm826, %v779
      %845 = vst.msk [vmem:[%s175 + $0x48] sm:$0xf] %vm826, %v780
      %846 = vst.msk [vmem:[%s175 + $0x4c] sm:$0xf] %vm826, %v781
      %847 = vst.msk [vmem:[%s175 + $0x50] sm:$0xf] %vm826, %v782
      %848 = vst.msk [vmem:[%s175 + $0x54] sm:$0xf] %vm826, %v783
      %849 = vst.msk [vmem:[%s175 + $0x58] sm:$0xf] %vm826, %v784
      %850 = vst.msk [vmem:[%s175 + $0x5c] sm:$0xf] %vm826, %v785
      %851 = vst.msk [vmem:[%s175 + $0x60] sm:$0xf] %vm826, %v786
      %852 = vst.msk [vmem:[%s175 + $0x64] sm:$0xf] %vm826, %v787
      %853 = vst.msk [vmem:[%s175 + $0x68] sm:$0xf] %vm826, %v788
      %854 = vst.msk [vmem:[%s175 + $0x6c] sm:$0xf] %vm826, %v789
      %855 = vst.msk [vmem:[%s175 + $0x70] sm:$0xf] %vm826, %v790
      %856 = vst.msk [vmem:[%s175 + $0x74] sm:$0xf] %vm826, %v791
      %857 = vst.msk [vmem:[%s175 + $0x78] sm:$0xf] %vm826, %v792
      %858 = vst.msk [vmem:[%s175 + $0x7c] sm:$0xf] %vm826, %v793
      %s859 = smul.u32 32, %s14
      %p860 = scmp.lt.s32.totalorder %s859, 63
      %s861 = scalar_select %p860, %s859, 63
      %s862 = smul.addr %s861, 4
      %s863 = scalar_lea.vmem %s3, %s862
      // Predicated region
      $region33: #{run.19} parent=31 // pred_check
        %p864 = pneg %p100
      $region34: #{run.19} parent=31 // pred_check_branch
        %866 = sbr.rel (%p864) target = $region36
      $region35: #{run.19} parent=31 // pred_region
        %s867 = smul.u32 32, %s14
      $region36: #{run.19} parent=31 // pred_fallthru
        _
    $region32: #{run.19} parent=5 // pred_fallthru
      _
    %p868 = scmp.le.s32.totalorder 2, %s9
    // Predicated region
    $region37: #{run.19} parent=5 // pred_check
      %p869 = pneg %p868
    $region38: #{run.19} parent=5 // pred_check_branch
      %871 = sbr.rel (%p869) target = $region40
    $region39: #{run.19} parent=5 // pred_region
      %s872 = ssub.s32 %s9, 2
      // Predicated region
      $region41: #{run.19} parent=39 // pred_check
        %p873 = pneg %p106
      $region42: #{run.19} parent=39 // pred_check_branch
        %875 = sbr.rel (%p873) target = $region44
      $region43: #{run.19} parent=39 // pred_region
        %s876 = smul.u32 32, %s15
        %p877 = scmp.lt.s32.totalorder %s876, 63
        %s878 = scalar_select %p877, %s876, 63
        %s879 = smul.addr %s878, 4
        %s880 = scalar_lea.vmem %s3, %s879
      $region44: #{run.19} parent=39 // pred_fallthru
        _
    $region40: #{run.19} parent=5 // pred_fallthru
      _
  $region6: #{run.19} parent=0 // loop_footer
    %s13 = sadd.s32 1, %s9
  $region7: #{run.19} parent=0 // loop_footer_branch
    %8 = sbr.rel target = $region3
  $region8: #{run.19} parent=0 // loop_exit
    _

</llo_original>
